<compile_context>
chip_gen: v6e
topology: v6e:2x2x1
jax: 0.10.0
libtpu: 0.0.40
codegen_flags: <defaults>
</compile_context>

<pallas_src>
import functools

import jax
import jax.numpy as jnp
from jax.experimental import pallas as pl
from jax.experimental.pallas import tpu as pltpu

LANE = 128


def _round_up(x, m):
    return (x + m - 1) // m * m


def _pad_axis(x, axis, target):
    pad = target - x.shape[axis]
    if pad <= 0:
        return x
    widths = [(0, 0)] * x.ndim
    widths[axis] = (0, pad)
    return jnp.pad(x, widths)


# ---------------------------------------------------------------------------
# Pallas kernels
# ---------------------------------------------------------------------------
def _conv_relu_pool_kernel(p00_ref, p01_ref, p10_ref, p11_ref, w_ref, b_ref, o_ref):
    """Fused conv (as matmul over im2col patches) + bias + ReLU + 2x2 maxpool.

    p{dh}{dw}_ref: (tm, Kpad) bf16 patches of the 4 pooling-window corners.
    w_ref: (Kpad, 128) bf16, b_ref: (1, 128) f32, o_ref: (tm, 128) f32.
    """
    w = w_ref[...]
    b = b_ref[...]

    def corner(p_ref):
        z = jnp.dot(p_ref[...], w, preferred_element_type=jnp.float32) + b
        return jnp.maximum(z, 0.0)          # f32 epilogue (v5e-friendly)

    z = jnp.maximum(jnp.maximum(corner(p00_ref), corner(p01_ref)),
                    jnp.maximum(corner(p10_ref), corner(p11_ref)))
    o_ref[...] = z.astype(o_ref.dtype)


def _head_kernel(x_ref, w3_ref, b3_ref, w1_ref, b1_ref, w2_ref, b2_ref, o_ref,
                 *, valid_cols):
    """Fused conv3 + fc1 + fc2 + log_softmax.

    x_ref: (tm, Kpad) bf16; weights bf16 (lane-padded to 128); biases f32.
    Padded logit columns are masked to -inf before log_softmax.
    """
    z = jnp.dot(x_ref[...], w3_ref[...], preferred_element_type=jnp.float32)
    z = jnp.maximum(z + b3_ref[...], 0.0)                       # conv3 + relu
    z = jnp.dot(z.astype(jnp.bfloat16), w1_ref[...],
                preferred_element_type=jnp.float32)
    z = jnp.maximum(z + b1_ref[...], 0.0)                       # fc1 + relu
    z = jnp.dot(z.astype(jnp.bfloat16), w2_ref[...],
                preferred_element_type=jnp.float32) + b2_ref[...]  # fc2 logits

    col = jax.lax.broadcasted_iota(jnp.int32, z.shape, 1)
    z = jnp.where(col < valid_cols, z, -jnp.inf)                # mask lane padding
    m = jnp.max(z, axis=-1, keepdims=True)
    s = z - m
    lse = jnp.log(jnp.sum(jnp.exp(s), axis=-1, keepdims=True))
    o_ref[...] = (s - lse).astype(o_ref.dtype)


# ---------------------------------------------------------------------------
# Wrappers (layout glue + pallas_call)
# ---------------------------------------------------------------------------
def conv_relu_pool(x_nhwc, w, b, padding=0, tm_max=512):
    """x: (N,H,W,Cin) f32, w: (Cout,Cin,K,K), b: (Cout,) ->
    maxpool2x2(relu(conv2d(x))) as (N, Ho//2, Wo//2, Cout) f32, NHWC."""
    N, H, W, Cin = x_nhwc.shape
    Cout, Cin2, K, _ = w.shape
    assert Cin == Cin2
    if padding:
        x_nhwc = jnp.pad(x_nhwc,
                         ((0, 0), (padding, padding), (padding, padding), (0, 0)))
    Hp, Wp = H + 2 * padding, W + 2 * padding
    Ho, Wo = Hp - K + 1, Wp - K + 1
    assert Ho % 2 == 0 and Wo % 2 == 0
    PH, PW = Ho // 2, Wo // 2
    Kdim = K * K * Cin
    Kpad = _round_up(Kdim, LANE)

    # im2col in (kh, kw, cin) order (matches w.transpose(2,3,1,0)); single
    # concatenate, bf16, contraction dim zero-padded to a lane multiple.
    xb = x_nhwc.astype(jnp.bfloat16)
    pieces = [xb[:, kh:kh + Ho, kw:kw + Wo, :]
              for kh in range(K) for kw in range(K)]
    if Kpad > Kdim:
        pieces.append(jnp.zeros((N, Ho, Wo, Kpad - Kdim), jnp.bfloat16))
    patches = jnp.concatenate(pieces, axis=-1)            # (N, Ho, Wo, Kpad)

    M = N * PH * PW
    tm = min(tm_max, _round_up(M, 16))
    Mp = _round_up(M, tm)
    # split by 2x2 pooling-window corner; rows ordered (n, ph, pw)
    corners = [_pad_axis(patches[:, dh::2, dw::2, :].reshape(M, Kpad), 0, Mp)
               for dh in (0, 1) for dw in (0, 1)]

    wmat = w.transpose(2, 3, 1, 0).reshape(Kdim, Cout).astype(jnp.bfloat16)
    wmat = _pad_axis(_pad_axis(wmat, 0, Kpad), 1, LANE)    # (Kpad, 128)
    bvec = _pad_axis(b.reshape(1, Cout).astype(jnp.float32), 1, LANE)

    patch_spec = pl.BlockSpec((tm, Kpad), lambda i: (i, 0))
    out = pl.pallas_call(
        _conv_relu_pool_kernel,
        out_shape=jax.ShapeDtypeStruct((Mp, LANE), jnp.float32),
        grid=(Mp // tm,),
        in_specs=[patch_spec] * 4 + [
            pl.BlockSpec((Kpad, LANE), lambda i: (0, 0)),
            pl.BlockSpec((1, LANE), lambda i: (0, 0)),
        ],
        out_specs=pl.BlockSpec((tm, LANE), lambda i: (i, 0)),
        compiler_params=pltpu.CompilerParams(dimension_semantics=("parallel",)),
        cost_estimate=pl.CostEstimate(
            flops=2 * 4 * Mp * Kpad * LANE,
            transcendentals=0,
            bytes_accessed=4 * Mp * Kpad * 2 + Kpad * LANE * 2 + Mp * LANE * 4),
    )(*corners, wmat, bvec)

    return out[:M, :Cout].reshape(N, PH, PW, Cout)


def head_fused(x_nhwc, w3, b3, w1, b1, w2, b2, num_classes=10, tm_max=256):
    """Fused conv3 (5x5 -> 1x1) + fc1 + fc2 + log_softmax.
    x: (N, 5, 5, 16) NHWC f32 -> (N, num_classes) f32 log-probs."""
    N, Hh, Wh, Cin = x_nhwc.shape
    Cout3, Cin3, K, _ = w3.shape
    assert (Hh, Wh, Cin) == (K, K, Cin3)
    Kdim = K * K * Cin3
    Kpad = _round_up(Kdim, LANE)
    assert num_classes == w2.shape[0]

    M = N
    tm = min(tm_max, _round_up(M, 16))
    Mp = _round_up(M, tm)
    # NHWC flatten == (kh, kw, cin) im2col order for the single output position
    xf = _pad_axis(_pad_axis(x_nhwc.reshape(N, Kdim).astype(jnp.bfloat16), 1, Kpad),
                   0, Mp)                                              # (Mp, Kpad)

    w3m = w3.transpose(2, 3, 1, 0).reshape(Kdim, Cout3).astype(jnp.bfloat16)
    w3m = _pad_axis(_pad_axis(w3m, 0, Kpad), 1, LANE)                  # (Kpad, 128)
    b3m = _pad_axis(b3.reshape(1, -1).astype(jnp.float32), 1, LANE)
    w1m = _pad_axis(_pad_axis(w1.T.astype(jnp.bfloat16), 0, LANE), 1, LANE)  # (128,128)
    b1m = _pad_axis(b1.reshape(1, -1).astype(jnp.float32), 1, LANE)
    w2m = _pad_axis(_pad_axis(w2.T.astype(jnp.bfloat16), 0, LANE), 1, LANE)  # (128,128)
    b2m = _pad_axis(b2.reshape(1, -1).astype(jnp.float32), 1, LANE)

    full = lambda shape: pl.BlockSpec(shape, lambda i: (0,) * len(shape))
    out = pl.pallas_call(
        functools.partial(_head_kernel, valid_cols=num_classes),
        out_shape=jax.ShapeDtypeStruct((Mp, LANE), jnp.float32),
        grid=(Mp // tm,),
        in_specs=[
            pl.BlockSpec((tm, Kpad), lambda i: (i, 0)),
            full((Kpad, LANE)), full((1, LANE)),
            full((LANE, LANE)), full((1, LANE)),
            full((LANE, LANE)), full((1, LANE)),
        ],
        out_specs=pl.BlockSpec((tm, LANE), lambda i: (i, 0)),
        compiler_params=pltpu.CompilerParams(dimension_semantics=("parallel",)),
        cost_estimate=pl.CostEstimate(
            flops=2 * Mp * (Kpad * LANE + 2 * LANE * LANE),
            transcendentals=Mp * LANE,
            bytes_accessed=Mp * Kpad * 2 + (Kpad * LANE + 2 * LANE * LANE) * 2
                           + Mp * LANE * 4),
    )(xf, w3m, b3m, w1m, b1m, w2m, b2m)

    return out[:N, :num_classes]


# ---------------------------------------------------------------------------
# Parameters (deterministic, PyTorch-default-style U(-1/sqrt(fan_in), ..))
# ---------------------------------------------------------------------------
def init_params(key):
    def uniform(k, shape, fan_in):
        bound = 1.0 / float(fan_in) ** 0.5
        return jax.random.uniform(k, shape, jnp.float32, -bound, bound)

    ks = jax.random.split(key, 10)
    return {
        "conv1_w": uniform(ks[0], (6, 1, 5, 5), 1 * 25),
        "conv1_b": uniform(ks[1], (6,), 1 * 25),
        "conv2_w": uniform(ks[2], (16, 6, 5, 5), 6 * 25),
        "conv2_b": uniform(ks[3], (16,), 6 * 25),
        "conv3_w": uniform(ks[4], (120, 16, 5, 5), 16 * 25),
        "conv3_b": uniform(ks[5], (120,), 16 * 25),
        "fc1_w": uniform(ks[6], (84, 120), 120),   # PyTorch Linear: (out, in)
        "fc1_b": uniform(ks[7], (84,), 120),
        "fc2_w": uniform(ks[8], (10, 84), 84),
        "fc2_b": uniform(ks[9], (10,), 84),
    }


def net_forward(params, x):
    # x: (N, 1, 28, 28) NCHW f32 -> (N, 10) log-probs (matches PyTorch Net).
    x = jnp.transpose(x, (0, 2, 3, 1))                                  # NHWC once
    x = conv_relu_pool(x, params["conv1_w"], params["conv1_b"], padding=2)  # (N,14,14,6)
    x = conv_relu_pool(x, params["conv2_w"], params["conv2_b"], padding=0)  # (N,5,5,16)
    return head_fused(x, params["conv3_w"], params["conv3_b"],
                      params["fc1_w"], params["fc1_b"],
                      params["fc2_w"], params["fc2_b"])


# pure-JAX reference for numerical validation
def _reference_forward(params, x):
    def conv(x, w, b, pad):
        y = jax.lax.conv_general_dilated(
            x, w, window_strides=(1, 1), padding=[(pad, pad), (pad, pad)],
            dimension_numbers=("NCHW", "OIHW", "NCHW"))
        return y + b.reshape(1, -1, 1, 1)

    def pool(x):
        N, C, H, W = x.shape
        return jnp.max(x.reshape(N, C, H // 2, 2, W // 2, 2), axis=(3, 5))

    x = pool(jax.nn.relu(conv(x, params["conv1_w"], params["conv1_b"], 2)))
    x = pool(jax.nn.relu(conv(x, params["conv2_w"], params["conv2_b"], 0)))
    x = jax.nn.relu(conv(x, params["conv3_w"], params["conv3_b"], 0)).reshape(-1, 120)
    x = jax.nn.relu(x @ params["fc1_w"].T + params["fc1_b"])
    x = x @ params["fc2_w"].T + params["fc2_b"]
    return jax.nn.log_softmax(x, axis=1)


if __name__ == "__main__":
    key = jax.random.PRNGKey(0)
    pkey, xkey = jax.random.split(key)
    params = init_params(pkey)
    # LeNet geometry requires 28x28 single-channel input (conv3 collapses 5x5 -> 1x1)
    x = jax.random.normal(xkey, (2, 1, 28, 28), jnp.float32)

    out = jax.block_until_ready(jax.jit(net_forward)(params, x))
    assert out.shape == (2, 10)
    # rows of log_softmax should exp-sum to ~1
    assert bool(jnp.all(jnp.abs(jnp.sum(jnp.exp(out), axis=1) - 1.0) < 1e-3))
    # compare against pure-JAX reference (bf16-MXU tolerance)
    ref = jax.block_until_ready(jax.jit(_reference_forward)(params, x))
    assert bool(jnp.max(jnp.abs(out - ref)) < 0.15), float(jnp.max(jnp.abs(out - ref)))
    print("KERNEL_OK")
</pallas_src>

<mosaic_0001>
module attributes {stable_mosaic.version = 11 : i64} {
  func.func @_conv_relu_pool_kernel(%arg0: i32, %arg1: memref<400x128xbf16, #tpu.memory_space<vmem>>, %arg2: memref<400x128xbf16, #tpu.memory_space<vmem>>, %arg3: memref<400x128xbf16, #tpu.memory_space<vmem>>, %arg4: memref<400x128xbf16, #tpu.memory_space<vmem>>, %arg5: memref<128x128xbf16, #tpu.memory_space<vmem>>, %arg6: memref<1x128xf32, #tpu.memory_space<vmem>>, %arg7: memref<400x128xf32, #tpu.memory_space<vmem>>) attributes {dimension_semantics = [#tpu.dimension_semantics<parallel>], iteration_bounds = array<i64: 1>, scalar_prefetch = 0 : i64, scratch_operands = 0 : i64, tpu.core_type = #tpu.core_type<tc>, window_params = [{transform_indices = @transform_0, window_bounds = array<i64: 400, 128>}, {transform_indices = @transform_1, window_bounds = array<i64: 400, 128>}, {transform_indices = @transform_2, window_bounds = array<i64: 400, 128>}, {transform_indices = @transform_3, window_bounds = array<i64: 400, 128>}, {pipeline_mode = #tpu.pipeline_mode<synchronous>, transform_indices = @transform_4, window_bounds = array<i64: 128, 128>}, {pipeline_mode = #tpu.pipeline_mode<synchronous>, transform_indices = @transform_5, window_bounds = array<i64: 1, 128>}, {transform_indices = @transform_6, window_bounds = array<i64: 400, 128>}]} {
    %c0 = arith.constant 0 : index
    %c0_0 = arith.constant 0 : index
    %0 = vector.load %arg5[%c0, %c0_0] : memref<128x128xbf16, #tpu.memory_space<vmem>>, vector<128x128xbf16>
    %c0_1 = arith.constant 0 : index
    %c0_2 = arith.constant 0 : index
    %1 = vector.load %arg6[%c0_1, %c0_2] : memref<1x128xf32, #tpu.memory_space<vmem>>, vector<1x128xf32>
    %c0_3 = arith.constant 0 : index
    %c0_4 = arith.constant 0 : index
    %2 = vector.load %arg1[%c0_3, %c0_4] : memref<400x128xbf16, #tpu.memory_space<vmem>>, vector<400x128xbf16>
    %cst = arith.constant dense<0.000000e+00> : vector<400x128xf32>
    %3 = tpu.matmul %2, %0, %cst {dimension_numbers = #tpu.dot_dimension_numbers<[1], [0], [0], [1], [0, 0, 1, 1], [], []>} : vector<400x128xbf16>, vector<128x128xbf16>, vector<400x128xf32> -> vector<400x128xf32>
    %4 = vector.broadcast %1 : vector<1x128xf32> to vector<400x128xf32>
    %5 = arith.addf %3, %4 : vector<400x128xf32>
    %cst_5 = arith.constant 0.000000e+00 : f32
    %6 = vector.broadcast %cst_5 : f32 to vector<400x128xf32>
    %7 = arith.maximumf %5, %6 : vector<400x128xf32>
    %c0_6 = arith.constant 0 : index
    %c0_7 = arith.constant 0 : index
    %8 = vector.load %arg2[%c0_6, %c0_7] : memref<400x128xbf16, #tpu.memory_space<vmem>>, vector<400x128xbf16>
    %cst_8 = arith.constant dense<0.000000e+00> : vector<400x128xf32>
    %9 = tpu.matmul %8, %0, %cst_8 {dimension_numbers = #tpu.dot_dimension_numbers<[1], [0], [0], [1], [0, 0, 1, 1], [], []>} : vector<400x128xbf16>, vector<128x128xbf16>, vector<400x128xf32> -> vector<400x128xf32>
    %10 = vector.broadcast %1 : vector<1x128xf32> to vector<400x128xf32>
    %11 = arith.addf %9, %10 : vector<400x128xf32>
    %cst_9 = arith.constant 0.000000e+00 : f32
    %12 = vector.broadcast %cst_9 : f32 to vector<400x128xf32>
    %13 = arith.maximumf %11, %12 : vector<400x128xf32>
    %14 = arith.maximumf %7, %13 : vector<400x128xf32>
    %c0_10 = arith.constant 0 : index
    %c0_11 = arith.constant 0 : index
    %15 = vector.load %arg3[%c0_10, %c0_11] : memref<400x128xbf16, #tpu.memory_space<vmem>>, vector<400x128xbf16>
    %cst_12 = arith.constant dense<0.000000e+00> : vector<400x128xf32>
    %16 = tpu.matmul %15, %0, %cst_12 {dimension_numbers = #tpu.dot_dimension_numbers<[1], [0], [0], [1], [0, 0, 1, 1], [], []>} : vector<400x128xbf16>, vector<128x128xbf16>, vector<400x128xf32> -> vector<400x128xf32>
    %17 = vector.broadcast %1 : vector<1x128xf32> to vector<400x128xf32>
    %18 = arith.addf %16, %17 : vector<400x128xf32>
    %cst_13 = arith.constant 0.000000e+00 : f32
    %19 = vector.broadcast %cst_13 : f32 to vector<400x128xf32>
    %20 = arith.maximumf %18, %19 : vector<400x128xf32>
    %c0_14 = arith.constant 0 : index
    %c0_15 = arith.constant 0 : index
    %21 = vector.load %arg4[%c0_14, %c0_15] : memref<400x128xbf16, #tpu.memory_space<vmem>>, vector<400x128xbf16>
    %cst_16 = arith.constant dense<0.000000e+00> : vector<400x128xf32>
    %22 = tpu.matmul %21, %0, %cst_16 {dimension_numbers = #tpu.dot_dimension_numbers<[1], [0], [0], [1], [0, 0, 1, 1], [], []>} : vector<400x128xbf16>, vector<128x128xbf16>, vector<400x128xf32> -> vector<400x128xf32>
    %23 = vector.broadcast %1 : vector<1x128xf32> to vector<400x128xf32>
    %24 = arith.addf %22, %23 : vector<400x128xf32>
    %cst_17 = arith.constant 0.000000e+00 : f32
    %25 = vector.broadcast %cst_17 : f32 to vector<400x128xf32>
    %26 = arith.maximumf %24, %25 : vector<400x128xf32>
    %27 = arith.maximumf %20, %26 : vector<400x128xf32>
    %28 = arith.maximumf %14, %27 : vector<400x128xf32>
    %c0_18 = arith.constant 0 : index
    %c0_19 = arith.constant 0 : index
    %29 = vector.load %arg7[%c0_18, %c0_19] : memref<400x128xf32, #tpu.memory_space<vmem>>, vector<400x128xf32>
    tpu.vector_store %arg7[%c0_18, %c0_19], %28 {strides = array<i32>} : memref<400x128xf32, #tpu.memory_space<vmem>>, vector<400x128xf32>,
    return
  }
  func.func @transform_0(%arg0: i32) -> (i32, i32) {
    %c0_i32 = arith.constant 0 : i32
    %c0_i32_0 = arith.constant 0 : i32
    return %arg0, %c0_i32 : i32, i32
  }
  func.func @transform_1(%arg0: i32) -> (i32, i32) {
    %c0_i32 = arith.constant 0 : i32
    %c0_i32_0 = arith.constant 0 : i32
    return %arg0, %c0_i32 : i32, i32
  }
  func.func @transform_2(%arg0: i32) -> (i32, i32) {
    %c0_i32 = arith.constant 0 : i32
    %c0_i32_0 = arith.constant 0 : i32
    return %arg0, %c0_i32 : i32, i32
  }
  func.func @transform_3(%arg0: i32) -> (i32, i32) {
    %c0_i32 = arith.constant 0 : i32
    %c0_i32_0 = arith.constant 0 : i32
    return %arg0, %c0_i32 : i32, i32
  }
  func.func @transform_4(%arg0: i32) -> (i32, i32) {
    %c0_i32 = arith.constant 0 : i32
    %c0_i32_0 = arith.constant 0 : i32
    %c0_i32_1 = arith.constant 0 : i32
    return %c0_i32, %c0_i32_0 : i32, i32
  }
  func.func @transform_5(%arg0: i32) -> (i32, i32) {
    %c0_i32 = arith.constant 0 : i32
    %c0_i32_0 = arith.constant 0 : i32
    %c0_i32_1 = arith.constant 0 : i32
    return %c0_i32, %c0_i32_0 : i32, i32
  }
  func.func @transform_6(%arg0: i32) -> (i32, i32) {
    %c0_i32 = arith.constant 0 : i32
    %c0_i32_0 = arith.constant 0 : i32
    return %arg0, %c0_i32 : i32, i32
  }
}

module attributes {stable_mosaic.version = 11 : i64} {
  func.func @_conv_relu_pool_kernel(%arg0: i32, %arg1: memref<64x256xbf16, #tpu.memory_space<vmem>>, %arg2: memref<64x256xbf16, #tpu.memory_space<vmem>>, %arg3: memref<64x256xbf16, #tpu.memory_space<vmem>>, %arg4: memref<64x256xbf16, #tpu.memory_space<vmem>>, %arg5: memref<256x128xbf16, #tpu.memory_space<vmem>>, %arg6: memref<1x128xf32, #tpu.memory_space<vmem>>, %arg7: memref<64x128xf32, #tpu.memory_space<vmem>>) attributes {dimension_semantics = [#tpu.dimension_semantics<parallel>], iteration_bounds = array<i64: 1>, scalar_prefetch = 0 : i64, scratch_operands = 0 : i64, tpu.core_type = #tpu.core_type<tc>, window_params = [{transform_indices = @transform_0, window_bounds = array<i64: 64, 256>}, {transform_indices = @transform_1, window_bounds = array<i64: 64, 256>}, {transform_indices = @transform_2, window_bounds = array<i64: 64, 256>}, {transform_indices = @transform_3, window_bounds = array<i64: 64, 256>}, {pipeline_mode = #tpu.pipeline_mode<synchronous>, transform_indices = @transform_4, window_bounds = array<i64: 256, 128>}, {pipeline_mode = #tpu.pipeline_mode<synchronous>, transform_indices = @transform_5, window_bounds = array<i64: 1, 128>}, {transform_indices = @transform_6, window_bounds = array<i64: 64, 128>}]} {
    %c0 = arith.constant 0 : index
    %c0_0 = arith.constant 0 : index
    %0 = vector.load %arg5[%c0, %c0_0] : memref<256x128xbf16, #tpu.memory_space<vmem>>, vector<256x128xbf16>
    %c0_1 = arith.constant 0 : index
    %c0_2 = arith.constant 0 : index
    %1 = vector.load %arg6[%c0_1, %c0_2] : memref<1x128xf32, #tpu.memory_space<vmem>>, vector<1x128xf32>
    %c0_3 = arith.constant 0 : index
    %c0_4 = arith.constant 0 : index
    %2 = vector.load %arg1[%c0_3, %c0_4] : memref<64x256xbf16, #tpu.memory_space<vmem>>, vector<64x256xbf16>
    %cst = arith.constant dense<0.000000e+00> : vector<64x128xf32>
    %3 = tpu.matmul %2, %0, %cst {dimension_numbers = #tpu.dot_dimension_numbers<[1], [0], [0], [1], [0, 0, 1, 1], [], []>} : vector<64x256xbf16>, vector<256x128xbf16>, vector<64x128xf32> -> vector<64x128xf32>
    %4 = vector.broadcast %1 : vector<1x128xf32> to vector<64x128xf32>
    %5 = arith.addf %3, %4 : vector<64x128xf32>
    %cst_5 = arith.constant 0.000000e+00 : f32
    %6 = vector.broadcast %cst_5 : f32 to vector<64x128xf32>
    %7 = arith.maximumf %5, %6 : vector<64x128xf32>
    %c0_6 = arith.constant 0 : index
    %c0_7 = arith.constant 0 : index
    %8 = vector.load %arg2[%c0_6, %c0_7] : memref<64x256xbf16, #tpu.memory_space<vmem>>, vector<64x256xbf16>
    %cst_8 = arith.constant dense<0.000000e+00> : vector<64x128xf32>
    %9 = tpu.matmul %8, %0, %cst_8 {dimension_numbers = #tpu.dot_dimension_numbers<[1], [0], [0], [1], [0, 0, 1, 1], [], []>} : vector<64x256xbf16>, vector<256x128xbf16>, vector<64x128xf32> -> vector<64x128xf32>
    %10 = vector.broadcast %1 : vector<1x128xf32> to vector<64x128xf32>
    %11 = arith.addf %9, %10 : vector<64x128xf32>
    %cst_9 = arith.constant 0.000000e+00 : f32
    %12 = vector.broadcast %cst_9 : f32 to vector<64x128xf32>
    %13 = arith.maximumf %11, %12 : vector<64x128xf32>
    %14 = arith.maximumf %7, %13 : vector<64x128xf32>
    %c0_10 = arith.constant 0 : index
    %c0_11 = arith.constant 0 : index
    %15 = vector.load %arg3[%c0_10, %c0_11] : memref<64x256xbf16, #tpu.memory_space<vmem>>, vector<64x256xbf16>
    %cst_12 = arith.constant dense<0.000000e+00> : vector<64x128xf32>
    %16 = tpu.matmul %15, %0, %cst_12 {dimension_numbers = #tpu.dot_dimension_numbers<[1], [0], [0], [1], [0, 0, 1, 1], [], []>} : vector<64x256xbf16>, vector<256x128xbf16>, vector<64x128xf32> -> vector<64x128xf32>
    %17 = vector.broadcast %1 : vector<1x128xf32> to vector<64x128xf32>
    %18 = arith.addf %16, %17 : vector<64x128xf32>
    %cst_13 = arith.constant 0.000000e+00 : f32
    %19 = vector.broadcast %cst_13 : f32 to vector<64x128xf32>
    %20 = arith.maximumf %18, %19 : vector<64x128xf32>
    %c0_14 = arith.constant 0 : index
    %c0_15 = arith.constant 0 : index
    %21 = vector.load %arg4[%c0_14, %c0_15] : memref<64x256xbf16, #tpu.memory_space<vmem>>, vector<64x256xbf16>
    %cst_16 = arith.constant dense<0.000000e+00> : vector<64x128xf32>
    %22 = tpu.matmul %21, %0, %cst_16 {dimension_numbers = #tpu.dot_dimension_numbers<[1], [0], [0], [1], [0, 0, 1, 1], [], []>} : vector<64x256xbf16>, vector<256x128xbf16>, vector<64x128xf32> -> vector<64x128xf32>
    %23 = vector.broadcast %1 : vector<1x128xf32> to vector<64x128xf32>
    %24 = arith.addf %22, %23 : vector<64x128xf32>
    %cst_17 = arith.constant 0.000000e+00 : f32
    %25 = vector.broadcast %cst_17 : f32 to vector<64x128xf32>
    %26 = arith.maximumf %24, %25 : vector<64x128xf32>
    %27 = arith.maximumf %20, %26 : vector<64x128xf32>
    %28 = arith.maximumf %14, %27 : vector<64x128xf32>
    %c0_18 = arith.constant 0 : index
    %c0_19 = arith.constant 0 : index
    %29 = vector.load %arg7[%c0_18, %c0_19] : memref<64x128xf32, #tpu.memory_space<vmem>>, vector<64x128xf32>
    tpu.vector_store %arg7[%c0_18, %c0_19], %28 {strides = array<i32>} : memref<64x128xf32, #tpu.memory_space<vmem>>, vector<64x128xf32>,
    return
  }
  func.func @transform_0(%arg0: i32) -> (i32, i32) {
    %c0_i32 = arith.constant 0 : i32
    %c0_i32_0 = arith.constant 0 : i32
    return %arg0, %c0_i32 : i32, i32
  }
  func.func @transform_1(%arg0: i32) -> (i32, i32) {
    %c0_i32 = arith.constant 0 : i32
    %c0_i32_0 = arith.constant 0 : i32
    return %arg0, %c0_i32 : i32, i32
  }
  func.func @transform_2(%arg0: i32) -> (i32, i32) {
    %c0_i32 = arith.constant 0 : i32
    %c0_i32_0 = arith.constant 0 : i32
    return %arg0, %c0_i32 : i32, i32
  }
  func.func @transform_3(%arg0: i32) -> (i32, i32) {
    %c0_i32 = arith.constant 0 : i32
    %c0_i32_0 = arith.constant 0 : i32
    return %arg0, %c0_i32 : i32, i32
  }
  func.func @transform_4(%arg0: i32) -> (i32, i32) {
    %c0_i32 = arith.constant 0 : i32
    %c0_i32_0 = arith.constant 0 : i32
    %c0_i32_1 = arith.constant 0 : i32
    return %c0_i32, %c0_i32_0 : i32, i32
  }
  func.func @transform_5(%arg0: i32) -> (i32, i32) {
    %c0_i32 = arith.constant 0 : i32
    %c0_i32_0 = arith.constant 0 : i32
    %c0_i32_1 = arith.constant 0 : i32
    return %c0_i32, %c0_i32_0 : i32, i32
  }
  func.func @transform_6(%arg0: i32) -> (i32, i32) {
    %c0_i32 = arith.constant 0 : i32
    %c0_i32_0 = arith.constant 0 : i32
    return %arg0, %c0_i32 : i32, i32
  }
}

module attributes {stable_mosaic.version = 11 : i64} {
  func.func @_head_kernel(%arg0: i32, %arg1: memref<16x512xbf16, #tpu.memory_space<vmem>>, %arg2: memref<512x128xbf16, #tpu.memory_space<vmem>>, %arg3: memref<1x128xf32, #tpu.memory_space<vmem>>, %arg4: memref<128x128xbf16, #tpu.memory_space<vmem>>, %arg5: memref<1x128xf32, #tpu.memory_space<vmem>>, %arg6: memref<128x128xbf16, #tpu.memory_space<vmem>>, %arg7: memref<1x128xf32, #tpu.memory_space<vmem>>, %arg8: memref<16x128xf32, #tpu.memory_space<vmem>>) attributes {dimension_semantics = [#tpu.dimension_semantics<parallel>], iteration_bounds = array<i64: 1>, scalar_prefetch = 0 : i64, scratch_operands = 0 : i64, tpu.core_type = #tpu.core_type<tc>, window_params = [{transform_indices = @transform_0, window_bounds = array<i64: 16, 512>}, {pipeline_mode = #tpu.pipeline_mode<synchronous>, transform_indices = @transform_1, window_bounds = array<i64: 512, 128>}, {pipeline_mode = #tpu.pipeline_mode<synchronous>, transform_indices = @transform_2, window_bounds = array<i64: 1, 128>}, {pipeline_mode = #tpu.pipeline_mode<synchronous>, transform_indices = @transform_3, window_bounds = array<i64: 128, 128>}, {pipeline_mode = #tpu.pipeline_mode<synchronous>, transform_indices = @transform_4, window_bounds = array<i64: 1, 128>}, {pipeline_mode = #tpu.pipeline_mode<synchronous>, transform_indices = @transform_5, window_bounds = array<i64: 128, 128>}, {pipeline_mode = #tpu.pipeline_mode<synchronous>, transform_indices = @transform_6, window_bounds = array<i64: 1, 128>}, {transform_indices = @transform_7, window_bounds = array<i64: 16, 128>}]} {
    %c0 = arith.constant 0 : index
    %c0_0 = arith.constant 0 : index
    %0 = vector.load %arg1[%c0, %c0_0] : memref<16x512xbf16, #tpu.memory_space<vmem>>, vector<16x512xbf16>
    %c0_1 = arith.constant 0 : index
    %c0_2 = arith.constant 0 : index
    %1 = vector.load %arg2[%c0_1, %c0_2] : memref<512x128xbf16, #tpu.memory_space<vmem>>, vector<512x128xbf16>
    %cst = arith.constant dense<0.000000e+00> : vector<16x128xf32>
    %2 = tpu.matmul %0, %1, %cst {dimension_numbers = #tpu.dot_dimension_numbers<[1], [0], [0], [1], [0, 0, 1, 1], [], []>} : vector<16x512xbf16>, vector<512x128xbf16>, vector<16x128xf32> -> vector<16x128xf32>
    %c0_3 = arith.constant 0 : index
    %c0_4 = arith.constant 0 : index
    %3 = vector.load %arg3[%c0_3, %c0_4] : memref<1x128xf32, #tpu.memory_space<vmem>>, vector<1x128xf32>
    %4 = vector.broadcast %3 : vector<1x128xf32> to vector<16x128xf32>
    %5 = arith.addf %2, %4 : vector<16x128xf32>
    %cst_5 = arith.constant 0.000000e+00 : f32
    %6 = vector.broadcast %cst_5 : f32 to vector<16x128xf32>
    %7 = arith.maximumf %5, %6 : vector<16x128xf32>
    %8 = arith.truncf %7 : vector<16x128xf32> to vector<16x128xbf16>
    %c0_6 = arith.constant 0 : index
    %c0_7 = arith.constant 0 : index
    %9 = vector.load %arg4[%c0_6, %c0_7] : memref<128x128xbf16, #tpu.memory_space<vmem>>, vector<128x128xbf16>
    %cst_8 = arith.constant dense<0.000000e+00> : vector<16x128xf32>
    %10 = tpu.matmul %8, %9, %cst_8 {dimension_numbers = #tpu.dot_dimension_numbers<[1], [0], [0], [1], [0, 0, 1, 1], [], []>} : vector<16x128xbf16>, vector<128x128xbf16>, vector<16x128xf32> -> vector<16x128xf32>
    %c0_9 = arith.constant 0 : index
    %c0_10 = arith.constant 0 : index
    %11 = vector.load %arg5[%c0_9, %c0_10] : memref<1x128xf32, #tpu.memory_space<vmem>>, vector<1x128xf32>
    %12 = vector.broadcast %11 : vector<1x128xf32> to vector<16x128xf32>
    %13 = arith.addf %10, %12 : vector<16x128xf32>
    %cst_11 = arith.constant 0.000000e+00 : f32
    %14 = vector.broadcast %cst_11 : f32 to vector<16x128xf32>
    %15 = arith.maximumf %13, %14 : vector<16x128xf32>
    %16 = arith.truncf %15 : vector<16x128xf32> to vector<16x128xbf16>
    %c0_12 = arith.constant 0 : index
    %c0_13 = arith.constant 0 : index
    %17 = vector.load %arg6[%c0_12, %c0_13] : memref<128x128xbf16, #tpu.memory_space<vmem>>, vector<128x128xbf16>
    %cst_14 = arith.constant dense<0.000000e+00> : vector<16x128xf32>
    %18 = tpu.matmul %16, %17, %cst_14 {dimension_numbers = #tpu.dot_dimension_numbers<[1], [0], [0], [1], [0, 0, 1, 1], [], []>} : vector<16x128xbf16>, vector<128x128xbf16>, vector<16x128xf32> -> vector<16x128xf32>
    %c0_15 = arith.constant 0 : index
    %c0_16 = arith.constant 0 : index
    %19 = vector.load %arg7[%c0_15, %c0_16] : memref<1x128xf32, #tpu.memory_space<vmem>>, vector<1x128xf32>
    %20 = vector.broadcast %19 : vector<1x128xf32> to vector<16x128xf32>
    %21 = arith.addf %18, %20 : vector<16x128xf32>
    %22 = tpu.iota {dimensions = array<i32: 1>} : vector<16x128xi32>
    %c10_i32 = arith.constant 10 : i32
    %23 = vector.broadcast %c10_i32 : i32 to vector<16x128xi32>
    %24 = arith.cmpi slt, %22, %23 : vector<16x128xi32>
    %cst_17 = arith.constant 0xFF800000 : f32
    %25 = vector.broadcast %cst_17 : f32 to vector<16x128xf32>
    %26 = arith.select %24, %21, %25 : vector<16x128xi1>, vector<16x128xf32>
    %cst_18 = arith.constant dense<0xFF800000> : vector<16xf32>
    %27 = vector.multi_reduction <maximumf>, %26, %cst_18 [1] : vector<16x128xf32> to vector<16xf32>
    %28 = vector.shape_cast %27 : vector<16xf32> to vector<16x1xf32>
    %29 = vector.broadcast %28 : vector<16x1xf32> to vector<16x128xf32>
    %30 = arith.subf %26, %29 : vector<16x128xf32>
    %31 = math.exp %30 : vector<16x128xf32>
    %cst_19 = arith.constant dense<0.000000e+00> : vector<16xf32>
    %32 = vector.multi_reduction <add>, %31, %cst_19 [1] : vector<16x128xf32> to vector<16xf32>
    %33 = vector.shape_cast %32 : vector<16xf32> to vector<16x1xf32>
    %34 = math.log %33 : vector<16x1xf32>
    %35 = vector.broadcast %34 : vector<16x1xf32> to vector<16x128xf32>
    %36 = arith.subf %30, %35 : vector<16x128xf32>
    %c0_20 = arith.constant 0 : index
    %c0_21 = arith.constant 0 : index
    %37 = vector.load %arg8[%c0_20, %c0_21] : memref<16x128xf32, #tpu.memory_space<vmem>>, vector<16x128xf32>
    tpu.vector_store %arg8[%c0_20, %c0_21], %36 {strides = array<i32>} : memref<16x128xf32, #tpu.memory_space<vmem>>, vector<16x128xf32>,
    return
  }
  func.func @transform_0(%arg0: i32) -> (i32, i32) {
    %c0_i32 = arith.constant 0 : i32
    %c0_i32_0 = arith.constant 0 : i32
    return %arg0, %c0_i32 : i32, i32
  }
  func.func @transform_1(%arg0: i32) -> (i32, i32) {
    %c0_i32 = arith.constant 0 : i32
    %c0_i32_0 = arith.constant 0 : i32
    %c0_i32_1 = arith.constant 0 : i32
    return %c0_i32, %c0_i32_0 : i32, i32
  }
  func.func @transform_2(%arg0: i32) -> (i32, i32) {
    %c0_i32 = arith.constant 0 : i32
    %c0_i32_0 = arith.constant 0 : i32
    %c0_i32_1 = arith.constant 0 : i32
    return %c0_i32, %c0_i32_0 : i32, i32
  }
  func.func @transform_3(%arg0: i32) -> (i32, i32) {
    %c0_i32 = arith.constant 0 : i32
    %c0_i32_0 = arith.constant 0 : i32
    %c0_i32_1 = arith.constant 0 : i32
    return %c0_i32, %c0_i32_0 : i32, i32
  }
  func.func @transform_4(%arg0: i32) -> (i32, i32) {
    %c0_i32 = arith.constant 0 : i32
    %c0_i32_0 = arith.constant 0 : i32
    %c0_i32_1 = arith.constant 0 : i32
    return %c0_i32, %c0_i32_0 : i32, i32
  }
  func.func @transform_5(%arg0: i32) -> (i32, i32) {
    %c0_i32 = arith.constant 0 : i32
    %c0_i32_0 = arith.constant 0 : i32
    %c0_i32_1 = arith.constant 0 : i32
    return %c0_i32, %c0_i32_0 : i32, i32
  }
  func.func @transform_6(%arg0: i32) -> (i32, i32) {
    %c0_i32 = arith.constant 0 : i32
    %c0_i32_0 = arith.constant 0 : i32
    %c0_i32_1 = arith.constant 0 : i32
    return %c0_i32, %c0_i32_0 : i32, i32
  }
  func.func @transform_7(%arg0: i32) -> (i32, i32) {
    %c0_i32 = arith.constant 0 : i32
    %c0_i32_0 = arith.constant 0 : i32
    return %arg0, %c0_i32 : i32, i32
  }
}

</mosaic_0001>

<llo_original>
// kernel: net_forward.3
$region0: #{net_forward.3}
  #allocation0 [shape = 'u32[]', space=smem, size = 0x4, offset = 0x4, fixed_abs, tag = 'smem constant byte address 0x4 - core index']
  #allocation1 [shape = 'u32[144,128]{1,0:T(1,128)}', space=vmem, size = 0x12000, scoped, tag = 'internal scratch']
  %s0 = inlined_call_operand.vmem [shape: bf16[400,128], index: 0, kind: input, shape index: {}]
  %s1 = inlined_call_operand.vmem [shape: bf16[400,128], index: 1, kind: input, shape index: {}]
  %s2 = inlined_call_operand.vmem [shape: bf16[400,128], index: 2, kind: input, shape index: {}]
  %s3 = inlined_call_operand.vmem [shape: bf16[400,128], index: 3, kind: input, shape index: {}]
  %s4 = inlined_call_operand.vmem [shape: bf16[128,128], index: 4, kind: input, shape index: {}]
  %s5 = inlined_call_operand.vmem [shape: f32[1,128], index: 5, kind: input, shape index: {}]
  %s6 = inlined_call_operand.vmem [shape: f32[400,128], index: 6, kind: output, shape index: {}]
  %s7 = sld [smem:[#allocation0]]
  $region34: #{net_forward.3} parent=0
    _
  %s9 = ssub.s32 1, %s7
  %s10 = scalar_select 0, %s9, %s7
  // Predicated region
  $region2: #{net_forward.3} parent=0 // pred_check
    _
  $region3: #{net_forward.3} parent=0 // pred_check_branch
    %12 = sbr.rel (0) target = $region5
  $region4: #{net_forward.3} parent=0 // pred_region
    _
  $region5: #{net_forward.3} parent=0 // pred_fallthru
    _
  // Predicated region
  $region6: #{net_forward.3} parent=0 // pred_check
    _
  $region7: #{net_forward.3} parent=0 // pred_check_branch
    %14 = sbr.rel (0) target = $region9
  $region8: #{net_forward.3} parent=0 // pred_region
    _
  $region9: #{net_forward.3} parent=0 // pred_fallthru
    _
  // Predicated region
  $region10: #{net_forward.3} parent=0 // pred_check
    _
  $region11: #{net_forward.3} parent=0 // pred_check_branch
    %16 = sbr.rel (0) target = $region13
  $region12: #{net_forward.3} parent=0 // pred_region
    _
  $region13: #{net_forward.3} parent=0 // pred_fallthru
    _
  // Predicated region
  $region14: #{net_forward.3} parent=0 // pred_check
    _
  $region15: #{net_forward.3} parent=0 // pred_check_branch
    %18 = sbr.rel (0) target = $region17
  $region16: #{net_forward.3} parent=0 // pred_region
    _
  $region17: #{net_forward.3} parent=0 // pred_fallthru
    _
  // Predicated region
  $region18: #{net_forward.3} parent=0 // pred_check
    _
  $region19: #{net_forward.3} parent=0 // pred_check_branch
    %20 = sbr.rel (0) target = $region21
  $region20: #{net_forward.3} parent=0 // pred_region
    _
  $region21: #{net_forward.3} parent=0 // pred_fallthru
    _
  // Predicated region
  $region22: #{net_forward.3} parent=0 // pred_check
    _
  $region23: #{net_forward.3} parent=0 // pred_check_branch
    %22 = sbr.rel (0) target = $region25
  $region24: #{net_forward.3} parent=0 // pred_region
    _
  $region25: #{net_forward.3} parent=0 // pred_fallthru
    _
  %v24 = vld [vmem:[%s4] sm:$0xf]
  %v25 = vld [vmem:[%s4 + $0x4] sm:$0xf]
  %v26 = vld [vmem:[%s4 + $0x8] sm:$0xf]
  %v27 = vld [vmem:[%s4 + $0xc] sm:$0xf]
  %v28 = vld [vmem:[%s4 + $0x10] sm:$0xf]
  %v29 = vld [vmem:[%s4 + $0x14] sm:$0xf]
  %v30 = vld [vmem:[%s4 + $0x18] sm:$0xf]
  %v31 = vld [vmem:[%s4 + $0x1c] sm:$0xf]
  %v32 = vld [vmem:[%s4 + $0x20] sm:$0xf]
  %v33 = vld [vmem:[%s4 + $0x24] sm:$0xf]
  %v34 = vld [vmem:[%s4 + $0x28] sm:$0xf]
  %v35 = vld [vmem:[%s4 + $0x2c] sm:$0xf]
  %v36 = vld [vmem:[%s4 + $0x30] sm:$0xf]
  %v37 = vld [vmem:[%s4 + $0x34] sm:$0xf]
  %v38 = vld [vmem:[%s4 + $0x38] sm:$0xf]
  %v39 = vld [vmem:[%s4 + $0x3c] sm:$0xf]
  %v40 = vld [vmem:[%s5] sm:$0x1]
  %v41 = vld [vmem:[%s0] sm:$0xf]
  %v42 = vld [vmem:[%s0 + $0x4] sm:$0xf]
  %v43 = vld [vmem:[%s0 + $0x8] sm:$0xf]
  %v44 = vld [vmem:[%s0 + $0xc] sm:$0xf]
  %v45 = vld [vmem:[%s0 + $0x10] sm:$0xf]
  %v46 = vld [vmem:[%s0 + $0x14] sm:$0xf]
  %v47 = vld [vmem:[%s0 + $0x18] sm:$0xf]
  %v48 = vld [vmem:[%s0 + $0x1c] sm:$0xf]
  %v49 = vld [vmem:[%s0 + $0x20] sm:$0xf]
  %v50 = vld [vmem:[%s0 + $0x24] sm:$0xf]
  %v51 = vld [vmem:[%s0 + $0x28] sm:$0xf]
  %v52 = vld [vmem:[%s0 + $0x2c] sm:$0xf]
  %v53 = vld [vmem:[%s0 + $0x30] sm:$0xf]
  %v54 = vld [vmem:[%s0 + $0x34] sm:$0xf]
  %v55 = vld [vmem:[%s0 + $0x38] sm:$0xf]
  %v56 = vld [vmem:[%s0 + $0x3c] sm:$0xf]
  %v57 = vld [vmem:[%s0 + $0x40] sm:$0xf]
  %v58 = vld [vmem:[%s0 + $0x44] sm:$0xf]
  %v59 = vld [vmem:[%s0 + $0x48] sm:$0xf]
  %v60 = vld [vmem:[%s0 + $0x4c] sm:$0xf]
  %v61 = vld [vmem:[%s0 + $0x50] sm:$0xf]
  %v62 = vld [vmem:[%s0 + $0x54] sm:$0xf]
  %v63 = vld [vmem:[%s0 + $0x58] sm:$0xf]
  %v64 = vld [vmem:[%s0 + $0x5c] sm:$0xf]
  %v65 = vld [vmem:[%s0 + $0x60] sm:$0xf]
  %v66 = vld [vmem:[%s0 + $0x64] sm:$0xf]
  %v67 = vld [vmem:[%s0 + $0x68] sm:$0xf]
  %v68 = vld [vmem:[%s0 + $0x6c] sm:$0xf]
  %v69 = vld [vmem:[%s0 + $0x70] sm:$0xf]
  %v70 = vld [vmem:[%s0 + $0x74] sm:$0xf]
  %v71 = vld [vmem:[%s0 + $0x78] sm:$0xf]
  %v72 = vld [vmem:[%s0 + $0x7c] sm:$0xf]
  %v73 = vld [vmem:[%s0 + $0x80] sm:$0xf]
  %v74 = vld [vmem:[%s0 + $0x84] sm:$0xf]
  %v75 = vld [vmem:[%s0 + $0x88] sm:$0xf]
  %v76 = vld [vmem:[%s0 + $0x8c] sm:$0xf]
  %v77 = vld [vmem:[%s0 + $0x90] sm:$0xf]
  %v78 = vld [vmem:[%s0 + $0x94] sm:$0xf]
  %v79 = vld [vmem:[%s0 + $0x98] sm:$0xf]
  %v80 = vld [vmem:[%s0 + $0x9c] sm:$0xf]
  %v81 = vld [vmem:[%s0 + $0xa0] sm:$0xf]
  %v82 = vld [vmem:[%s0 + $0xa4] sm:$0xf]
  %v83 = vld [vmem:[%s0 + $0xa8] sm:$0xf]
  %v84 = vld [vmem:[%s0 + $0xac] sm:$0xf]
  %v85 = vld [vmem:[%s0 + $0xb0] sm:$0xf]
  %v86 = vld [vmem:[%s0 + $0xb4] sm:$0xf]
  %v87 = vld [vmem:[%s0 + $0xb8] sm:$0xf]
  %v88 = vld [vmem:[%s0 + $0xbc] sm:$0xf]
  %v89 = vld [vmem:[%s0 + $0xc0] sm:$0xf]
  %v90 = vld [vmem:[%s0 + $0xc4] sm:$0xf]
  %v92 = vlaneseq
  %v93 = vshrl.u32 %v92, 7
  %v94 = vsub.s32 0, %v93
  %v95 = vrot.slane %v40, %v94
  %v147 = vunpack.c.l.b16 %v41
  %v148 = vunpack.c.l.b16 %v42
  %v149 = vunpack.c.l.b16 %v43
  %v150 = vunpack.c.l.b16 %v44
  %v151 = vunpack.c.l.b16 %v45
  %v152 = vunpack.c.l.b16 %v46
  %v153 = vunpack.c.l.b16 %v47
  %v154 = vunpack.c.l.b16 %v48
  %v155 = vunpack.c.l.b16 %v49
  %v156 = vunpack.c.l.b16 %v50
  %v157 = vunpack.c.l.b16 %v51
  %v158 = vunpack.c.l.b16 %v52
  %v159 = vunpack.c.l.b16 %v53
  %v160 = vunpack.c.l.b16 %v54
  %v161 = vunpack.c.l.b16 %v55
  %v162 = vunpack.c.l.b16 %v56
  %v163 = vunpack.c.l.b16 %v57
  %v164 = vunpack.c.l.b16 %v58
  %v165 = vunpack.c.l.b16 %v59
  %v166 = vunpack.c.l.b16 %v60
  %v167 = vunpack.c.l.b16 %v61
  %v168 = vunpack.c.l.b16 %v62
  %v169 = vunpack.c.l.b16 %v63
  %v170 = vunpack.c.l.b16 %v64
  %v171 = vunpack.c.l.b16 %v65
  %v172 = vunpack.c.l.b16 %v66
  %v173 = vunpack.c.l.b16 %v67
  %v174 = vunpack.c.l.b16 %v68
  %v175 = vunpack.c.l.b16 %v69
  %v176 = vunpack.c.l.b16 %v70
  %v177 = vunpack.c.l.b16 %v71
  %v178 = vunpack.c.l.b16 %v72
  %v179 = vunpack.c.l.b16 %v73
  %v180 = vunpack.c.l.b16 %v74
  %v181 = vunpack.c.l.b16 %v75
  %v182 = vunpack.c.l.b16 %v76
  %v183 = vunpack.c.l.b16 %v77
  %v184 = vunpack.c.l.b16 %v78
  %v185 = vunpack.c.l.b16 %v79
  %v186 = vunpack.c.l.b16 %v80
  %v187 = vunpack.c.l.b16 %v81
  %v188 = vunpack.c.l.b16 %v82
  %v189 = vunpack.c.l.b16 %v83
  %v190 = vunpack.c.l.b16 %v84
  %v191 = vunpack.c.l.b16 %v85
  %v192 = vunpack.c.l.b16 %v86
  %v193 = vunpack.c.l.b16 %v87
  %v194 = vunpack.c.l.b16 %v88
  %v195 = vunpack.c.l.b16 %v89
  %v196 = vunpack.c.l.b16 %v90
  %v197 = vpack.c.b16 %v148, %v147
  %v198 = vpack.c.b16 %v150, %v149
  %v199 = vpack.c.b16 %v152, %v151
  %v200 = vpack.c.b16 %v154, %v153
  %v201 = vpack.c.b16 %v156, %v155
  %v202 = vpack.c.b16 %v158, %v157
  %v203 = vpack.c.b16 %v160, %v159
  %v204 = vpack.c.b16 %v162, %v161
  %v205 = vpack.c.b16 %v164, %v163
  %v206 = vpack.c.b16 %v166, %v165
  %v207 = vpack.c.b16 %v168, %v167
  %v208 = vpack.c.b16 %v170, %v169
  %v209 = vpack.c.b16 %v172, %v171
  %v210 = vpack.c.b16 %v174, %v173
  %v211 = vpack.c.b16 %v176, %v175
  %v212 = vpack.c.b16 %v178, %v177
  %v213 = vpack.c.b16 %v180, %v179
  %v214 = vpack.c.b16 %v182, %v181
  %v215 = vpack.c.b16 %v184, %v183
  %v216 = vpack.c.b16 %v186, %v185
  %v217 = vpack.c.b16 %v188, %v187
  %v218 = vpack.c.b16 %v190, %v189
  %v219 = vpack.c.b16 %v192, %v191
  %v220 = vpack.c.b16 %v194, %v193
  %v221 = vpack.c.b16 %v196, %v195
  %v263 = vunpack.c.l.b16 %v24
  %v264 = vunpack.c.l.b16 %v25
  %v265 = vunpack.c.l.b16 %v26
  %v266 = vunpack.c.l.b16 %v27
  %v267 = vunpack.c.l.b16 %v28
  %v268 = vunpack.c.l.b16 %v29
  %v269 = vunpack.c.l.b16 %v30
  %v270 = vunpack.c.l.b16 %v31
  %v271 = vunpack.c.l.b16 %v32
  %v272 = vunpack.c.l.b16 %v33
  %v273 = vunpack.c.l.b16 %v34
  %v274 = vunpack.c.l.b16 %v35
  %v275 = vunpack.c.l.b16 %v36
  %v276 = vunpack.c.l.b16 %v37
  %v277 = vunpack.c.l.b16 %v38
  %v278 = vunpack.c.l.b16 %v39
  %v279 = vpack.c.b16 %v264, %v263
  %v280 = vpack.c.b16 %v266, %v265
  %v281 = vpack.c.b16 %v268, %v267
  %v282 = vpack.c.b16 %v270, %v269
  %v283 = vpack.c.b16 %v272, %v271
  %v284 = vpack.c.b16 %v274, %v273
  %v285 = vpack.c.b16 %v276, %v275
  %v286 = vpack.c.b16 %v278, %v277
  %295 = vmatprep.subr.bf16.mxu0 0
  %296 = vmatpush1.bf16.msra.mxu0 %v286
  %297 = vmatprep.subr.bf16.mxu0 0
  %298 = vmatpush1.bf16.msra.mxu0 %v285
  %299 = vmatprep.subr.bf16.mxu0 0
  %300 = vmatpush1.bf16.msra.mxu0 %v284
  %301 = vmatprep.subr.bf16.mxu0 0
  %302 = vmatpush1.bf16.msra.mxu0 %v283
  %303 = vmatprep.subr.bf16.mxu0 0
  %304 = vmatpush1.bf16.msra.mxu0 %v282
  %305 = vmatprep.subr.bf16.mxu0 0
  %306 = vmatpush1.bf16.msra.mxu0 %v281
  %307 = vmatprep.subr.bf16.mxu0 0
  %308 = vmatpush1.bf16.msra.mxu0 %v280
  %309 = vmatprep.subr.bf16.mxu0 0
  %310 = vmatpush1.bf16.msra.mxu0 %v279
  %311 = vmatprep.subr.bf16.mxu0 0
  %312 = vmatpush2.bf16.msra.mxu0 0
  %313 = vmatprep.subr.bf16.mxu0 0
  %314 = vmatpush2.bf16.msra.mxu0 0
  %315 = vmatprep.subr.bf16.mxu0 0
  %316 = vmatpush2.bf16.msra.mxu0 0
  %317 = vmatprep.subr.bf16.mxu0 0
  %318 = vmatpush2.bf16.msra.mxu0 0
  %319 = vmatprep.subr.bf16.mxu0 0
  %320 = vmatpush2.bf16.msra.mxu0 0
  %321 = vmatprep.subr.bf16.mxu0 0
  %322 = vmatpush2.bf16.msra.mxu0 0
  %323 = vmatprep.subr.bf16.mxu0 0
  %324 = vmatpush2.bf16.msra.mxu0 0
  %325 = vmatprep.subr.bf16.mxu0 0
  %326 = vmatpush2.bf16.msra.mxu0 0
  %327 = vmatprep.mubr.bf16.mxu0 0
  %328 = vmatmul.mubr.bf16.gmra.mxu0 %v197
  %v329 = vpop.f32.mrf.mxu0
  %v330 = vadd.f32 %v95, %v329
  %v331 = vpop.f32.mrf.mxu0
  %v332 = vpop.f32.mrf.mxu0
  %v333 = vadd.f32 %v95, %v332
  %v334 = vpop.f32.mrf.mxu0
  %335 = vmatprep.mubr.bf16.mxu0 0
  %336 = vmatmul.mubr.bf16.gmra.mxu0 %v198
  %v337 = vpop.f32.mrf.mxu0
  %v338 = vadd.f32 %v95, %v337
  %v339 = vpop.f32.mrf.mxu0
  %v340 = vpop.f32.mrf.mxu0
  %v341 = vadd.f32 %v95, %v340
  %v342 = vpop.f32.mrf.mxu0
  %343 = vmatprep.mubr.bf16.mxu0 0
  %344 = vmatmul.mubr.bf16.gmra.mxu0 %v199
  %v345 = vpop.f32.mrf.mxu0
  %v346 = vadd.f32 %v95, %v345
  %v347 = vpop.f32.mrf.mxu0
  %v348 = vpop.f32.mrf.mxu0
  %v349 = vadd.f32 %v95, %v348
  %v350 = vpop.f32.mrf.mxu0
  %351 = vmatprep.mubr.bf16.mxu0 0
  %352 = vmatmul.mubr.bf16.gmra.mxu0 %v200
  %v353 = vpop.f32.mrf.mxu0
  %v354 = vadd.f32 %v95, %v353
  %v355 = vpop.f32.mrf.mxu0
  %v356 = vpop.f32.mrf.mxu0
  %v357 = vadd.f32 %v95, %v356
  %v358 = vpop.f32.mrf.mxu0
  %359 = vmatprep.mubr.bf16.mxu0 0
  %360 = vmatmul.mubr.bf16.gmra.mxu0 %v201
  %v361 = vpop.f32.mrf.mxu0
  %v362 = vadd.f32 %v95, %v361
  %v363 = vpop.f32.mrf.mxu0
  %v364 = vpop.f32.mrf.mxu0
  %v365 = vadd.f32 %v95, %v364
  %v366 = vpop.f32.mrf.mxu0
  %367 = vmatprep.mubr.bf16.mxu0 0
  %368 = vmatmul.mubr.bf16.gmra.mxu0 %v202
  %v369 = vpop.f32.mrf.mxu0
  %v370 = vadd.f32 %v95, %v369
  %v371 = vpop.f32.mrf.mxu0
  %v372 = vpop.f32.mrf.mxu0
  %v373 = vadd.f32 %v95, %v372
  %v374 = vpop.f32.mrf.mxu0
  %375 = vmatprep.mubr.bf16.mxu0 0
  %376 = vmatmul.mubr.bf16.gmra.mxu0 %v203
  %v377 = vpop.f32.mrf.mxu0
  %v378 = vadd.f32 %v95, %v377
  %v379 = vpop.f32.mrf.mxu0
  %v380 = vpop.f32.mrf.mxu0
  %v381 = vadd.f32 %v95, %v380
  %v382 = vpop.f32.mrf.mxu0
  %383 = vmatprep.mubr.bf16.mxu0 0
  %384 = vmatmul.mubr.bf16.gmra.mxu0 %v204
  %v385 = vpop.f32.mrf.mxu0
  %v386 = vadd.f32 %v95, %v385
  %v387 = vpop.f32.mrf.mxu0
  %v388 = vpop.f32.mrf.mxu0
  %v389 = vadd.f32 %v95, %v388
  %v390 = vpop.f32.mrf.mxu0
  %391 = vmatprep.mubr.bf16.mxu0 0
  %392 = vmatmul.mubr.bf16.gmra.mxu0 %v205
  %v393 = vpop.f32.mrf.mxu0
  %v394 = vadd.f32 %v95, %v393
  %v395 = vpop.f32.mrf.mxu0
  %v396 = vpop.f32.mrf.mxu0
  %v397 = vadd.f32 %v95, %v396
  %v398 = vpop.f32.mrf.mxu0
  %399 = vmatprep.mubr.bf16.mxu0 0
  %400 = vmatmul.mubr.bf16.gmra.mxu0 %v206
  %v401 = vpop.f32.mrf.mxu0
  %v402 = vadd.f32 %v95, %v401
  %v403 = vpop.f32.mrf.mxu0
  %v404 = vpop.f32.mrf.mxu0
  %v405 = vadd.f32 %v95, %v404
  %v406 = vpop.f32.mrf.mxu0
  %407 = vmatprep.mubr.bf16.mxu0 0
  %408 = vmatmul.mubr.bf16.gmra.mxu0 %v207
  %v409 = vpop.f32.mrf.mxu0
  %v410 = vadd.f32 %v95, %v409
  %v411 = vpop.f32.mrf.mxu0
  %v412 = vpop.f32.mrf.mxu0
  %v413 = vadd.f32 %v95, %v412
  %v414 = vpop.f32.mrf.mxu0
  %415 = vmatprep.mubr.bf16.mxu0 0
  %416 = vmatmul.mubr.bf16.gmra.mxu0 %v208
  %v417 = vpop.f32.mrf.mxu0
  %v418 = vadd.f32 %v95, %v417
  %v419 = vpop.f32.mrf.mxu0
  %v420 = vpop.f32.mrf.mxu0
  %v421 = vadd.f32 %v95, %v420
  %v422 = vpop.f32.mrf.mxu0
  %423 = vmatprep.mubr.bf16.mxu0 0
  %424 = vmatmul.mubr.bf16.gmra.mxu0 %v209
  %v425 = vpop.f32.mrf.mxu0
  %v426 = vadd.f32 %v95, %v425
  %v427 = vpop.f32.mrf.mxu0
  %v428 = vpop.f32.mrf.mxu0
  %v429 = vadd.f32 %v95, %v428
  %v430 = vpop.f32.mrf.mxu0
  %431 = vmatprep.mubr.bf16.mxu0 0
  %432 = vmatmul.mubr.bf16.gmra.mxu0 %v210
  %v433 = vpop.f32.mrf.mxu0
  %v434 = vadd.f32 %v95, %v433
  %v435 = vpop.f32.mrf.mxu0
  %v436 = vpop.f32.mrf.mxu0
  %v437 = vadd.f32 %v95, %v436
  %v438 = vpop.f32.mrf.mxu0
  %439 = vmatprep.mubr.bf16.mxu0 0
  %440 = vmatmul.mubr.bf16.gmra.mxu0 %v211
  %v441 = vpop.f32.mrf.mxu0
  %v442 = vadd.f32 %v95, %v441
  %v443 = vpop.f32.mrf.mxu0
  %v444 = vpop.f32.mrf.mxu0
  %v445 = vadd.f32 %v95, %v444
  %v446 = vpop.f32.mrf.mxu0
  %447 = vmatprep.mubr.bf16.mxu0 0
  %448 = vmatmul.mubr.bf16.gmra.mxu0 %v212
  %v449 = vpop.f32.mrf.mxu0
  %v450 = vadd.f32 %v95, %v449
  %v451 = vpop.f32.mrf.mxu0
  %v452 = vpop.f32.mrf.mxu0
  %v453 = vadd.f32 %v95, %v452
  %v454 = vpop.f32.mrf.mxu0
  %455 = vmatprep.mubr.bf16.mxu0 0
  %456 = vmatmul.mubr.bf16.gmra.mxu0 %v213
  %v457 = vpop.f32.mrf.mxu0
  %v458 = vadd.f32 %v95, %v457
  %v459 = vpop.f32.mrf.mxu0
  %v460 = vpop.f32.mrf.mxu0
  %v461 = vadd.f32 %v95, %v460
  %v462 = vpop.f32.mrf.mxu0
  %463 = vmatprep.mubr.bf16.mxu0 0
  %464 = vmatmul.mubr.bf16.gmra.mxu0 %v214
  %v465 = vpop.f32.mrf.mxu0
  %v466 = vadd.f32 %v95, %v465
  %v467 = vpop.f32.mrf.mxu0
  %v468 = vpop.f32.mrf.mxu0
  %v469 = vadd.f32 %v95, %v468
  %v470 = vpop.f32.mrf.mxu0
  %471 = vmatprep.mubr.bf16.mxu0 0
  %472 = vmatmul.mubr.bf16.gmra.mxu0 %v215
  %v473 = vpop.f32.mrf.mxu0
  %v474 = vadd.f32 %v95, %v473
  %v475 = vpop.f32.mrf.mxu0
  %v476 = vpop.f32.mrf.mxu0
  %v477 = vadd.f32 %v95, %v476
  %v478 = vpop.f32.mrf.mxu0
  %479 = vmatprep.mubr.bf16.mxu0 0
  %480 = vmatmul.mubr.bf16.gmra.mxu0 %v216
  %v481 = vpop.f32.mrf.mxu0
  %v482 = vadd.f32 %v95, %v481
  %v483 = vpop.f32.mrf.mxu0
  %v484 = vpop.f32.mrf.mxu0
  %v485 = vadd.f32 %v95, %v484
  %v486 = vpop.f32.mrf.mxu0
  %487 = vmatprep.mubr.bf16.mxu0 0
  %488 = vmatmul.mubr.bf16.gmra.mxu0 %v217
  %v489 = vpop.f32.mrf.mxu0
  %v490 = vadd.f32 %v95, %v489
  %v491 = vpop.f32.mrf.mxu0
  %v492 = vpop.f32.mrf.mxu0
  %v493 = vadd.f32 %v95, %v492
  %v494 = vpop.f32.mrf.mxu0
  %495 = vmatprep.mubr.bf16.mxu0 0
  %496 = vmatmul.mubr.bf16.gmra.mxu0 %v218
  %v497 = vpop.f32.mrf.mxu0
  %v498 = vadd.f32 %v95, %v497
  %v499 = vpop.f32.mrf.mxu0
  %v500 = vpop.f32.mrf.mxu0
  %v501 = vadd.f32 %v95, %v500
  %v502 = vpop.f32.mrf.mxu0
  %503 = vmatprep.mubr.bf16.mxu0 0
  %504 = vmatmul.mubr.bf16.gmra.mxu0 %v219
  %v505 = vpop.f32.mrf.mxu0
  %v506 = vadd.f32 %v95, %v505
  %v507 = vpop.f32.mrf.mxu0
  %v508 = vpop.f32.mrf.mxu0
  %v509 = vadd.f32 %v95, %v508
  %v510 = vpop.f32.mrf.mxu0
  %511 = vmatprep.mubr.bf16.mxu0 0
  %512 = vmatmul.mubr.bf16.gmra.mxu0 %v220
  %v513 = vpop.f32.mrf.mxu0
  %v514 = vadd.f32 %v95, %v513
  %v515 = vpop.f32.mrf.mxu0
  %v516 = vpop.f32.mrf.mxu0
  %v517 = vadd.f32 %v95, %v516
  %v518 = vpop.f32.mrf.mxu0
  %519 = vmatprep.mubr.bf16.mxu0 0
  %520 = vmatmul.mubr.bf16.gmra.mxu0 %v221
  %v521 = vpop.f32.mrf.mxu0
  %v522 = vadd.f32 %v95, %v521
  %v523 = vpop.f32.mrf.mxu0
  %v524 = vpop.f32.mrf.mxu0
  %v525 = vadd.f32 %v95, %v524
  %v526 = vpop.f32.mrf.mxu0
  %527 = vdwg.mxu0
  %v528 = vmax.f32 %v330, 0.0
  %v529 = vmax.f32 %v333, 0.0
  %v530 = vmax.f32 %v338, 0.0
  %v531 = vmax.f32 %v341, 0.0
  %v532 = vmax.f32 %v346, 0.0
  %v533 = vmax.f32 %v349, 0.0
  %v534 = vmax.f32 %v354, 0.0
  %v535 = vmax.f32 %v357, 0.0
  %v536 = vmax.f32 %v362, 0.0
  %v537 = vmax.f32 %v365, 0.0
  %v538 = vmax.f32 %v370, 0.0
  %v539 = vmax.f32 %v373, 0.0
  %v540 = vmax.f32 %v378, 0.0
  %v541 = vmax.f32 %v381, 0.0
  %v542 = vmax.f32 %v386, 0.0
  %v543 = vmax.f32 %v389, 0.0
  %v544 = vmax.f32 %v394, 0.0
  %v545 = vmax.f32 %v397, 0.0
  %v546 = vmax.f32 %v402, 0.0
  %v547 = vmax.f32 %v405, 0.0
  %v548 = vmax.f32 %v410, 0.0
  %v549 = vmax.f32 %v413, 0.0
  %v550 = vmax.f32 %v418, 0.0
  %v551 = vmax.f32 %v421, 0.0
  %v552 = vmax.f32 %v426, 0.0
  %v553 = vmax.f32 %v429, 0.0
  %v554 = vmax.f32 %v434, 0.0
  %v555 = vmax.f32 %v437, 0.0
  %v556 = vmax.f32 %v442, 0.0
  %v557 = vmax.f32 %v445, 0.0
  %v558 = vmax.f32 %v450, 0.0
  %v559 = vmax.f32 %v453, 0.0
  %v560 = vmax.f32 %v458, 0.0
  %v561 = vmax.f32 %v461, 0.0
  %v562 = vmax.f32 %v466, 0.0
  %v563 = vmax.f32 %v469, 0.0
  %v564 = vmax.f32 %v474, 0.0
  %v565 = vmax.f32 %v477, 0.0
  %v566 = vmax.f32 %v482, 0.0
  %v567 = vmax.f32 %v485, 0.0
  %v568 = vmax.f32 %v490, 0.0
  %v569 = vmax.f32 %v493, 0.0
  %v570 = vmax.f32 %v498, 0.0
  %v571 = vmax.f32 %v501, 0.0
  %v572 = vmax.f32 %v506, 0.0
  %v573 = vmax.f32 %v509, 0.0
  %v574 = vmax.f32 %v514, 0.0
  %v575 = vmax.f32 %v517, 0.0
  %v576 = vmax.f32 %v522, 0.0
  %v577 = vmax.f32 %v525, 0.0
  %v578 = vld [vmem:[%s1] sm:$0xf]
  %v579 = vld [vmem:[%s1 + $0x4] sm:$0xf]
  %v580 = vld [vmem:[%s1 + $0x8] sm:$0xf]
  %v581 = vld [vmem:[%s1 + $0xc] sm:$0xf]
  %v582 = vld [vmem:[%s1 + $0x10] sm:$0xf]
  %v583 = vld [vmem:[%s1 + $0x14] sm:$0xf]
  %v584 = vld [vmem:[%s1 + $0x18] sm:$0xf]
  %v585 = vld [vmem:[%s1 + $0x1c] sm:$0xf]
  %v586 = vld [vmem:[%s1 + $0x20] sm:$0xf]
  %v587 = vld [vmem:[%s1 + $0x24] sm:$0xf]
  %v588 = vld [vmem:[%s1 + $0x28] sm:$0xf]
  %v589 = vld [vmem:[%s1 + $0x2c] sm:$0xf]
  %v590 = vld [vmem:[%s1 + $0x30] sm:$0xf]
  %v591 = vld [vmem:[%s1 + $0x34] sm:$0xf]
  %v592 = vld [vmem:[%s1 + $0x38] sm:$0xf]
  %v593 = vld [vmem:[%s1 + $0x3c] sm:$0xf]
  %v594 = vld [vmem:[%s1 + $0x40] sm:$0xf]
  %v595 = vld [vmem:[%s1 + $0x44] sm:$0xf]
  %v596 = vld [vmem:[%s1 + $0x48] sm:$0xf]
  %v597 = vld [vmem:[%s1 + $0x4c] sm:$0xf]
  %v598 = vld [vmem:[%s1 + $0x50] sm:$0xf]
  %v599 = vld [vmem:[%s1 + $0x54] sm:$0xf]
  %v600 = vld [vmem:[%s1 + $0x58] sm:$0xf]
  %v601 = vld [vmem:[%s1 + $0x5c] sm:$0xf]
  %v602 = vld [vmem:[%s1 + $0x60] sm:$0xf]
  %v603 = vld [vmem:[%s1 + $0x64] sm:$0xf]
  %v604 = vld [vmem:[%s1 + $0x68] sm:$0xf]
  %v605 = vld [vmem:[%s1 + $0x6c] sm:$0xf]
  %v606 = vld [vmem:[%s1 + $0x70] sm:$0xf]
  %v607 = vld [vmem:[%s1 + $0x74] sm:$0xf]
  %v608 = vld [vmem:[%s1 + $0x78] sm:$0xf]
  %v609 = vld [vmem:[%s1 + $0x7c] sm:$0xf]
  %v610 = vld [vmem:[%s1 + $0x80] sm:$0xf]
  %v611 = vld [vmem:[%s1 + $0x84] sm:$0xf]
  %v612 = vld [vmem:[%s1 + $0x88] sm:$0xf]
  %v613 = vld [vmem:[%s1 + $0x8c] sm:$0xf]
  %v614 = vld [vmem:[%s1 + $0x90] sm:$0xf]
  %v615 = vld [vmem:[%s1 + $0x94] sm:$0xf]
  %v616 = vld [vmem:[%s1 + $0x98] sm:$0xf]
  %v617 = vld [vmem:[%s1 + $0x9c] sm:$0xf]
  %v618 = vld [vmem:[%s1 + $0xa0] sm:$0xf]
  %v619 = vld [vmem:[%s1 + $0xa4] sm:$0xf]
  %v620 = vld [vmem:[%s1 + $0xa8] sm:$0xf]
  %v621 = vld [vmem:[%s1 + $0xac] sm:$0xf]
  %v622 = vld [vmem:[%s1 + $0xb0] sm:$0xf]
  %v623 = vld [vmem:[%s1 + $0xb4] sm:$0xf]
  %v624 = vld [vmem:[%s1 + $0xb8] sm:$0xf]
  %v625 = vld [vmem:[%s1 + $0xbc] sm:$0xf]
  %v626 = vld [vmem:[%s1 + $0xc0] sm:$0xf]
  %v627 = vld [vmem:[%s1 + $0xc4] sm:$0xf]
  %v678 = vunpack.c.l.b16 %v578
  %v679 = vunpack.c.l.b16 %v579
  %v680 = vunpack.c.l.b16 %v580
  %v681 = vunpack.c.l.b16 %v581
  %v682 = vunpack.c.l.b16 %v582
  %v683 = vunpack.c.l.b16 %v583
  %v684 = vunpack.c.l.b16 %v584
  %v685 = vunpack.c.l.b16 %v585
  %v686 = vunpack.c.l.b16 %v586
  %v687 = vunpack.c.l.b16 %v587
  %v688 = vunpack.c.l.b16 %v588
  %v689 = vunpack.c.l.b16 %v589
  %v690 = vunpack.c.l.b16 %v590
  %v691 = vunpack.c.l.b16 %v591
  %v692 = vunpack.c.l.b16 %v592
  %v693 = vunpack.c.l.b16 %v593
  %v694 = vunpack.c.l.b16 %v594
  %v695 = vunpack.c.l.b16 %v595
  %v696 = vunpack.c.l.b16 %v596
  %v697 = vunpack.c.l.b16 %v597
  %v698 = vunpack.c.l.b16 %v598
  %v699 = vunpack.c.l.b16 %v599
  %v700 = vunpack.c.l.b16 %v600
  %v701 = vunpack.c.l.b16 %v601
  %v702 = vunpack.c.l.b16 %v602
  %v703 = vunpack.c.l.b16 %v603
  %v704 = vunpack.c.l.b16 %v604
  %v705 = vunpack.c.l.b16 %v605
  %v706 = vunpack.c.l.b16 %v606
  %v707 = vunpack.c.l.b16 %v607
  %v708 = vunpack.c.l.b16 %v608
  %v709 = vunpack.c.l.b16 %v609
  %v710 = vunpack.c.l.b16 %v610
  %v711 = vunpack.c.l.b16 %v611
  %v712 = vunpack.c.l.b16 %v612
  %v713 = vunpack.c.l.b16 %v613
  %v714 = vunpack.c.l.b16 %v614
  %v715 = vunpack.c.l.b16 %v615
  %v716 = vunpack.c.l.b16 %v616
  %v717 = vunpack.c.l.b16 %v617
  %v718 = vunpack.c.l.b16 %v618
  %v719 = vunpack.c.l.b16 %v619
  %v720 = vunpack.c.l.b16 %v620
  %v721 = vunpack.c.l.b16 %v621
  %v722 = vunpack.c.l.b16 %v622
  %v723 = vunpack.c.l.b16 %v623
  %v724 = vunpack.c.l.b16 %v624
  %v725 = vunpack.c.l.b16 %v625
  %v726 = vunpack.c.l.b16 %v626
  %v727 = vunpack.c.l.b16 %v627
  %v728 = vpack.c.b16 %v679, %v678
  %v729 = vpack.c.b16 %v681, %v680
  %v730 = vpack.c.b16 %v683, %v682
  %v731 = vpack.c.b16 %v685, %v684
  %v732 = vpack.c.b16 %v687, %v686
  %v733 = vpack.c.b16 %v689, %v688
  %v734 = vpack.c.b16 %v691, %v690
  %v735 = vpack.c.b16 %v693, %v692
  %v736 = vpack.c.b16 %v695, %v694
  %v737 = vpack.c.b16 %v697, %v696
  %v738 = vpack.c.b16 %v699, %v698
  %v739 = vpack.c.b16 %v701, %v700
  %v740 = vpack.c.b16 %v703, %v702
  %v741 = vpack.c.b16 %v705, %v704
  %v742 = vpack.c.b16 %v707, %v706
  %v743 = vpack.c.b16 %v709, %v708
  %v744 = vpack.c.b16 %v711, %v710
  %v745 = vpack.c.b16 %v713, %v712
  %v746 = vpack.c.b16 %v715, %v714
  %v747 = vpack.c.b16 %v717, %v716
  %v748 = vpack.c.b16 %v719, %v718
  %v749 = vpack.c.b16 %v721, %v720
  %v750 = vpack.c.b16 %v723, %v722
  %v751 = vpack.c.b16 %v725, %v724
  %v752 = vpack.c.b16 %v727, %v726
  %778 = vmatprep.subr.bf16.mxu0 0
  %779 = vmatpush1.bf16.msra.mxu0 %v286
  %780 = vmatprep.subr.bf16.mxu0 0
  %781 = vmatpush1.bf16.msra.mxu0 %v285
  %782 = vmatprep.subr.bf16.mxu0 0
  %783 = vmatpush1.bf16.msra.mxu0 %v284
  %784 = vmatprep.subr.bf16.mxu0 0
  %785 = vmatpush1.bf16.msra.mxu0 %v283
  %786 = vmatprep.subr.bf16.mxu0 0
  %787 = vmatpush1.bf16.msra.mxu0 %v282
  %788 = vmatprep.subr.bf16.mxu0 0
  %789 = vmatpush1.bf16.msra.mxu0 %v281
  %790 = vmatprep.subr.bf16.mxu0 0
  %791 = vmatpush1.bf16.msra.mxu0 %v280
  %792 = vmatprep.subr.bf16.mxu0 0
  %793 = vmatpush1.bf16.msra.mxu0 %v279
  %794 = vmatprep.subr.bf16.mxu0 0
  %795 = vmatpush2.bf16.msra.mxu0 0
  %796 = vmatprep.subr.bf16.mxu0 0
  %797 = vmatpush2.bf16.msra.mxu0 0
  %798 = vmatprep.subr.bf16.mxu0 0
  %799 = vmatpush2.bf16.msra.mxu0 0
  %800 = vmatprep.subr.bf16.mxu0 0
  %801 = vmatpush2.bf16.msra.mxu0 0
  %802 = vmatprep.subr.bf16.mxu0 0
  %803 = vmatpush2.bf16.msra.mxu0 0
  %804 = vmatprep.subr.bf16.mxu0 0
  %805 = vmatpush2.bf16.msra.mxu0 0
  %806 = vmatprep.subr.bf16.mxu0 0
  %807 = vmatpush2.bf16.msra.mxu0 0
  %808 = vmatprep.subr.bf16.mxu0 0
  %809 = vmatpush2.bf16.msra.mxu0 0
  %810 = vmatprep.mubr.bf16.mxu0 0
  %811 = vmatmul.mubr.bf16.gmra.mxu0 %v728
  %v812 = vpop.f32.mrf.mxu0
  %v813 = vadd.f32 %v95, %v812
  %v814 = vpop.f32.mrf.mxu0
  %v815 = vpop.f32.mrf.mxu0
  %v816 = vadd.f32 %v95, %v815
  %v817 = vpop.f32.mrf.mxu0
  %818 = vmatprep.mubr.bf16.mxu0 0
  %819 = vmatmul.mubr.bf16.gmra.mxu0 %v729
  %v820 = vpop.f32.mrf.mxu0
  %v821 = vadd.f32 %v95, %v820
  %v822 = vpop.f32.mrf.mxu0
  %v823 = vpop.f32.mrf.mxu0
  %v824 = vadd.f32 %v95, %v823
  %v825 = vpop.f32.mrf.mxu0
  %826 = vmatprep.mubr.bf16.mxu0 0
  %827 = vmatmul.mubr.bf16.gmra.mxu0 %v730
  %v828 = vpop.f32.mrf.mxu0
  %v829 = vadd.f32 %v95, %v828
  %v830 = vpop.f32.mrf.mxu0
  %v831 = vpop.f32.mrf.mxu0
  %v832 = vadd.f32 %v95, %v831
  %v833 = vpop.f32.mrf.mxu0
  %834 = vmatprep.mubr.bf16.mxu0 0
  %835 = vmatmul.mubr.bf16.gmra.mxu0 %v731
  %v836 = vpop.f32.mrf.mxu0
  %v837 = vadd.f32 %v95, %v836
  %v838 = vpop.f32.mrf.mxu0
  %v839 = vpop.f32.mrf.mxu0
  %v840 = vadd.f32 %v95, %v839
  %v841 = vpop.f32.mrf.mxu0
  %842 = vmatprep.mubr.bf16.mxu0 0
  %843 = vmatmul.mubr.bf16.gmra.mxu0 %v732
  %v844 = vpop.f32.mrf.mxu0
  %v845 = vadd.f32 %v95, %v844
  %v846 = vpop.f32.mrf.mxu0
  %v847 = vpop.f32.mrf.mxu0
  %v848 = vadd.f32 %v95, %v847
  %v849 = vpop.f32.mrf.mxu0
  %850 = vmatprep.mubr.bf16.mxu0 0
  %851 = vmatmul.mubr.bf16.gmra.mxu0 %v733
  %v852 = vpop.f32.mrf.mxu0
  %v853 = vadd.f32 %v95, %v852
  %v854 = vpop.f32.mrf.mxu0
  %v855 = vpop.f32.mrf.mxu0
  %v856 = vadd.f32 %v95, %v855
  %v857 = vpop.f32.mrf.mxu0
  %858 = vmatprep.mubr.bf16.mxu0 0
  %859 = vmatmul.mubr.bf16.gmra.mxu0 %v734
  %v860 = vpop.f32.mrf.mxu0
  %v861 = vadd.f32 %v95, %v860
  %v862 = vpop.f32.mrf.mxu0
  %v863 = vpop.f32.mrf.mxu0
  %v864 = vadd.f32 %v95, %v863
  %v865 = vpop.f32.mrf.mxu0
  %866 = vmatprep.mubr.bf16.mxu0 0
  %867 = vmatmul.mubr.bf16.gmra.mxu0 %v735
  %v868 = vpop.f32.mrf.mxu0
  %v869 = vadd.f32 %v95, %v868
  %v870 = vpop.f32.mrf.mxu0
  %v871 = vpop.f32.mrf.mxu0
  %v872 = vadd.f32 %v95, %v871
  %v873 = vpop.f32.mrf.mxu0
  %874 = vmatprep.mubr.bf16.mxu0 0
  %875 = vmatmul.mubr.bf16.gmra.mxu0 %v736
  %v876 = vpop.f32.mrf.mxu0
  %v877 = vadd.f32 %v95, %v876
  %v878 = vpop.f32.mrf.mxu0
  %v879 = vpop.f32.mrf.mxu0
  %v880 = vadd.f32 %v95, %v879
  %v881 = vpop.f32.mrf.mxu0
  %882 = vmatprep.mubr.bf16.mxu0 0
  %883 = vmatmul.mubr.bf16.gmra.mxu0 %v737
  %v884 = vpop.f32.mrf.mxu0
  %v885 = vadd.f32 %v95, %v884
  %v886 = vpop.f32.mrf.mxu0
  %v887 = vpop.f32.mrf.mxu0
  %v888 = vadd.f32 %v95, %v887
  %v889 = vpop.f32.mrf.mxu0
  %890 = vmatprep.mubr.bf16.mxu0 0
  %891 = vmatmul.mubr.bf16.gmra.mxu0 %v738
  %v892 = vpop.f32.mrf.mxu0
  %v893 = vadd.f32 %v95, %v892
  %v894 = vpop.f32.mrf.mxu0
  %v895 = vpop.f32.mrf.mxu0
  %v896 = vadd.f32 %v95, %v895
  %v897 = vpop.f32.mrf.mxu0
  %898 = vmatprep.mubr.bf16.mxu0 0
  %899 = vmatmul.mubr.bf16.gmra.mxu0 %v739
  %v900 = vpop.f32.mrf.mxu0
  %v901 = vadd.f32 %v95, %v900
  %v902 = vpop.f32.mrf.mxu0
  %v903 = vpop.f32.mrf.mxu0
  %v904 = vadd.f32 %v95, %v903
  %v905 = vpop.f32.mrf.mxu0
  %906 = vmatprep.mubr.bf16.mxu0 0
  %907 = vmatmul.mubr.bf16.gmra.mxu0 %v740
  %v908 = vpop.f32.mrf.mxu0
  %v909 = vadd.f32 %v95, %v908
  %v910 = vpop.f32.mrf.mxu0
  %v911 = vpop.f32.mrf.mxu0
  %v912 = vadd.f32 %v95, %v911
  %v913 = vpop.f32.mrf.mxu0
  %914 = vmatprep.mubr.bf16.mxu0 0
  %915 = vmatmul.mubr.bf16.gmra.mxu0 %v741
  %v916 = vpop.f32.mrf.mxu0
  %v917 = vadd.f32 %v95, %v916
  %v918 = vpop.f32.mrf.mxu0
  %v919 = vpop.f32.mrf.mxu0
  %v920 = vadd.f32 %v95, %v919
  %v921 = vpop.f32.mrf.mxu0
  %922 = vmatprep.mubr.bf16.mxu0 0
  %923 = vmatmul.mubr.bf16.gmra.mxu0 %v742
  %v924 = vpop.f32.mrf.mxu0
  %v925 = vadd.f32 %v95, %v924
  %v926 = vpop.f32.mrf.mxu0
  %v927 = vpop.f32.mrf.mxu0
  %v928 = vadd.f32 %v95, %v927
  %v929 = vpop.f32.mrf.mxu0
  %930 = vmatprep.mubr.bf16.mxu0 0
  %931 = vmatmul.mubr.bf16.gmra.mxu0 %v743
  %v932 = vpop.f32.mrf.mxu0
  %v933 = vadd.f32 %v95, %v932
  %v934 = vpop.f32.mrf.mxu0
  %v935 = vpop.f32.mrf.mxu0
  %v936 = vadd.f32 %v95, %v935
  %v937 = vpop.f32.mrf.mxu0
  %938 = vmatprep.mubr.bf16.mxu0 0
  %939 = vmatmul.mubr.bf16.gmra.mxu0 %v744
  %v940 = vpop.f32.mrf.mxu0
  %v941 = vadd.f32 %v95, %v940
  %v942 = vpop.f32.mrf.mxu0
  %v943 = vpop.f32.mrf.mxu0
  %v944 = vadd.f32 %v95, %v943
  %v945 = vpop.f32.mrf.mxu0
  %946 = vmatprep.mubr.bf16.mxu0 0
  %947 = vmatmul.mubr.bf16.gmra.mxu0 %v745
  %v948 = vpop.f32.mrf.mxu0
  %v949 = vadd.f32 %v95, %v948
  %v950 = vpop.f32.mrf.mxu0
  %v951 = vpop.f32.mrf.mxu0
  %v952 = vadd.f32 %v95, %v951
  %v953 = vpop.f32.mrf.mxu0
  %954 = vmatprep.mubr.bf16.mxu0 0
  %955 = vmatmul.mubr.bf16.gmra.mxu0 %v746
  %v956 = vpop.f32.mrf.mxu0
  %v957 = vadd.f32 %v95, %v956
  %v958 = vpop.f32.mrf.mxu0
  %v959 = vpop.f32.mrf.mxu0
  %v960 = vadd.f32 %v95, %v959
  %v961 = vpop.f32.mrf.mxu0
  %962 = vmatprep.mubr.bf16.mxu0 0
  %963 = vmatmul.mubr.bf16.gmra.mxu0 %v747
  %v964 = vpop.f32.mrf.mxu0
  %v965 = vadd.f32 %v95, %v964
  %v966 = vpop.f32.mrf.mxu0
  %v967 = vpop.f32.mrf.mxu0
  %v968 = vadd.f32 %v95, %v967
  %v969 = vpop.f32.mrf.mxu0
  %970 = vmatprep.mubr.bf16.mxu0 0
  %971 = vmatmul.mubr.bf16.gmra.mxu0 %v748
  %v972 = vpop.f32.mrf.mxu0
  %v973 = vadd.f32 %v95, %v972
  %v974 = vpop.f32.mrf.mxu0
  %v975 = vpop.f32.mrf.mxu0
  %v976 = vadd.f32 %v95, %v975
  %v977 = vpop.f32.mrf.mxu0
  %978 = vmatprep.mubr.bf16.mxu0 0
  %979 = vmatmul.mubr.bf16.gmra.mxu0 %v749
  %v980 = vpop.f32.mrf.mxu0
  %v981 = vadd.f32 %v95, %v980
  %v982 = vpop.f32.mrf.mxu0
  %v983 = vpop.f32.mrf.mxu0
  %v984 = vadd.f32 %v95, %v983
  %v985 = vpop.f32.mrf.mxu0
  %986 = vmatprep.mubr.bf16.mxu0 0
  %987 = vmatmul.mubr.bf16.gmra.mxu0 %v750
  %v988 = vpop.f32.mrf.mxu0
  %v989 = vadd.f32 %v95, %v988
  %v990 = vpop.f32.mrf.mxu0
  %v991 = vpop.f32.mrf.mxu0
  %v992 = vadd.f32 %v95, %v991
  %v993 = vpop.f32.mrf.mxu0
  %994 = vmatprep.mubr.bf16.mxu0 0
  %995 = vmatmul.mubr.bf16.gmra.mxu0 %v751
  %v996 = vpop.f32.mrf.mxu0
  %v997 = vadd.f32 %v95, %v996
  %v998 = vpop.f32.mrf.mxu0
  %v999 = vpop.f32.mrf.mxu0
  %v1000 = vadd.f32 %v95, %v999
  %v1001 = vpop.f32.mrf.mxu0
  %1002 = vmatprep.mubr.bf16.mxu0 0
  %1003 = vmatmul.mubr.bf16.gmra.mxu0 %v752
  %v1004 = vpop.f32.mrf.mxu0
  %v1005 = vadd.f32 %v95, %v1004
  %v1006 = vpop.f32.mrf.mxu0
  %v1007 = vpop.f32.mrf.mxu0
  %v1008 = vadd.f32 %v95, %v1007
  %v1009 = vpop.f32.mrf.mxu0
  %1010 = vdwg.mxu0
  %v1011 = vmax.f32 %v813, 0.0
  %v1012 = vmax.f32 %v816, 0.0
  %v1013 = vmax.f32 %v821, 0.0
  %v1014 = vmax.f32 %v824, 0.0
  %v1015 = vmax.f32 %v829, 0.0
  %v1016 = vmax.f32 %v832, 0.0
  %v1017 = vmax.f32 %v837, 0.0
  %v1018 = vmax.f32 %v840, 0.0
  %v1019 = vmax.f32 %v845, 0.0
  %v1020 = vmax.f32 %v848, 0.0
  %v1021 = vmax.f32 %v853, 0.0
  %v1022 = vmax.f32 %v856, 0.0
  %v1023 = vmax.f32 %v861, 0.0
  %v1024 = vmax.f32 %v864, 0.0
  %v1025 = vmax.f32 %v869, 0.0
  %v1026 = vmax.f32 %v872, 0.0
  %v1027 = vmax.f32 %v877, 0.0
  %v1028 = vmax.f32 %v880, 0.0
  %v1029 = vmax.f32 %v885, 0.0
  %v1030 = vmax.f32 %v888, 0.0
  %v1031 = vmax.f32 %v893, 0.0
  %v1032 = vmax.f32 %v896, 0.0
  %v1033 = vmax.f32 %v901, 0.0
  %v1034 = vmax.f32 %v904, 0.0
  %v1035 = vmax.f32 %v909, 0.0
  %v1036 = vmax.f32 %v912, 0.0
  %v1037 = vmax.f32 %v917, 0.0
  %v1038 = vmax.f32 %v920, 0.0
  %v1039 = vmax.f32 %v925, 0.0
  %v1040 = vmax.f32 %v928, 0.0
  %v1041 = vmax.f32 %v933, 0.0
  %v1042 = vmax.f32 %v936, 0.0
  %v1043 = vmax.f32 %v941, 0.0
  %v1044 = vmax.f32 %v944, 0.0
  %v1045 = vmax.f32 %v949, 0.0
  %v1046 = vmax.f32 %v952, 0.0
  %v1047 = vmax.f32 %v957, 0.0
  %v1048 = vmax.f32 %v960, 0.0
  %v1049 = vmax.f32 %v965, 0.0
  %v1050 = vmax.f32 %v968, 0.0
  %v1051 = vmax.f32 %v973, 0.0
  %v1052 = vmax.f32 %v976, 0.0
  %v1053 = vmax.f32 %v981, 0.0
  %v1054 = vmax.f32 %v984, 0.0
  %v1055 = vmax.f32 %v989, 0.0
  %v1056 = vmax.f32 %v992, 0.0
  %v1057 = vmax.f32 %v997, 0.0
  %v1058 = vmax.f32 %v1000, 0.0
  %v1059 = vmax.f32 %v1005, 0.0
  %v1060 = vmax.f32 %v1008, 0.0
  %v1061 = vmax.f32 %v528, %v1011
  %v1062 = vmax.f32 %v529, %v1012
  %v1063 = vmax.f32 %v530, %v1013
  %v1064 = vmax.f32 %v531, %v1014
  %v1065 = vmax.f32 %v532, %v1015
  %v1066 = vmax.f32 %v533, %v1016
  %v1067 = vmax.f32 %v534, %v1017
  %v1068 = vmax.f32 %v535, %v1018
  %v1069 = vmax.f32 %v536, %v1019
  %v1070 = vmax.f32 %v537, %v1020
  %v1071 = vmax.f32 %v538, %v1021
  %v1072 = vmax.f32 %v539, %v1022
  %v1073 = vmax.f32 %v540, %v1023
  %v1074 = vmax.f32 %v541, %v1024
  %v1075 = vmax.f32 %v542, %v1025
  %v1076 = vmax.f32 %v543, %v1026
  %v1077 = vmax.f32 %v544, %v1027
  %v1078 = vmax.f32 %v545, %v1028
  %v1079 = vmax.f32 %v546, %v1029
  %v1080 = vmax.f32 %v547, %v1030
  %v1081 = vmax.f32 %v548, %v1031
  %v1082 = vmax.f32 %v549, %v1032
  %v1083 = vmax.f32 %v550, %v1033
  %v1084 = vmax.f32 %v551, %v1034
  %v1085 = vmax.f32 %v552, %v1035
  %v1086 = vmax.f32 %v553, %v1036
  %v1087 = vmax.f32 %v554, %v1037
  %v1088 = vmax.f32 %v555, %v1038
  %v1089 = vmax.f32 %v556, %v1039
  %v1090 = vmax.f32 %v557, %v1040
  %v1091 = vmax.f32 %v558, %v1041
  %v1092 = vmax.f32 %v559, %v1042
  %v1093 = vmax.f32 %v560, %v1043
  %v1094 = vmax.f32 %v561, %v1044
  %v1095 = vmax.f32 %v562, %v1045
  %v1096 = vmax.f32 %v563, %v1046
  %v1097 = vmax.f32 %v564, %v1047
  %v1098 = vmax.f32 %v565, %v1048
  %v1099 = vmax.f32 %v566, %v1049
  %v1100 = vmax.f32 %v567, %v1050
  %v1101 = vmax.f32 %v568, %v1051
  %v1102 = vmax.f32 %v569, %v1052
  %v1103 = vmax.f32 %v570, %v1053
  %v1104 = vmax.f32 %v571, %v1054
  %v1105 = vmax.f32 %v572, %v1055
  %v1106 = vmax.f32 %v573, %v1056
  %v1107 = vmax.f32 %v574, %v1057
  %v1108 = vmax.f32 %v575, %v1058
  %v1109 = vmax.f32 %v576, %v1059
  %v1110 = vmax.f32 %v577, %v1060
  %v1111 = vld [vmem:[%s2] sm:$0xf]
  %v1112 = vld [vmem:[%s2 + $0x4] sm:$0xf]
  %v1113 = vld [vmem:[%s2 + $0x8] sm:$0xf]
  %v1114 = vld [vmem:[%s2 + $0xc] sm:$0xf]
  %v1115 = vld [vmem:[%s2 + $0x10] sm:$0xf]
  %v1116 = vld [vmem:[%s2 + $0x14] sm:$0xf]
  %v1117 = vld [vmem:[%s2 + $0x18] sm:$0xf]
  %v1118 = vld [vmem:[%s2 + $0x1c] sm:$0xf]
  %v1119 = vld [vmem:[%s2 + $0x20] sm:$0xf]
  %v1120 = vld [vmem:[%s2 + $0x24] sm:$0xf]
  %v1121 = vld [vmem:[%s2 + $0x28] sm:$0xf]
  %v1122 = vld [vmem:[%s2 + $0x2c] sm:$0xf]
  %v1123 = vld [vmem:[%s2 + $0x30] sm:$0xf]
  %v1124 = vld [vmem:[%s2 + $0x34] sm:$0xf]
  %v1125 = vld [vmem:[%s2 + $0x38] sm:$0xf]
  %v1126 = vld [vmem:[%s2 + $0x3c] sm:$0xf]
  %v1127 = vld [vmem:[%s2 + $0x40] sm:$0xf]
  %v1128 = vld [vmem:[%s2 + $0x44] sm:$0xf]
  %v1129 = vld [vmem:[%s2 + $0x48] sm:$0xf]
  %v1130 = vld [vmem:[%s2 + $0x4c] sm:$0xf]
  %v1131 = vld [vmem:[%s2 + $0x50] sm:$0xf]
  %v1132 = vld [vmem:[%s2 + $0x54] sm:$0xf]
  %v1133 = vld [vmem:[%s2 + $0x58] sm:$0xf]
  %v1134 = vld [vmem:[%s2 + $0x5c] sm:$0xf]
  %v1135 = vld [vmem:[%s2 + $0x60] sm:$0xf]
  %v1136 = vld [vmem:[%s2 + $0x64] sm:$0xf]
  %v1137 = vld [vmem:[%s2 + $0x68] sm:$0xf]
  %v1138 = vld [vmem:[%s2 + $0x6c] sm:$0xf]
  %v1139 = vld [vmem:[%s2 + $0x70] sm:$0xf]
  %v1140 = vld [vmem:[%s2 + $0x74] sm:$0xf]
  %v1141 = vld [vmem:[%s2 + $0x78] sm:$0xf]
  %v1142 = vld [vmem:[%s2 + $0x7c] sm:$0xf]
  %v1143 = vld [vmem:[%s2 + $0x80] sm:$0xf]
  %v1144 = vld [vmem:[%s2 + $0x84] sm:$0xf]
  %v1145 = vld [vmem:[%s2 + $0x88] sm:$0xf]
  %v1146 = vld [vmem:[%s2 + $0x8c] sm:$0xf]
  %v1147 = vld [vmem:[%s2 + $0x90] sm:$0xf]
  %v1148 = vld [vmem:[%s2 + $0x94] sm:$0xf]
  %v1149 = vld [vmem:[%s2 + $0x98] sm:$0xf]
  %v1150 = vld [vmem:[%s2 + $0x9c] sm:$0xf]
  %v1151 = vld [vmem:[%s2 + $0xa0] sm:$0xf]
  %v1152 = vld [vmem:[%s2 + $0xa4] sm:$0xf]
  %v1153 = vld [vmem:[%s2 + $0xa8] sm:$0xf]
  %v1154 = vld [vmem:[%s2 + $0xac] sm:$0xf]
  %v1155 = vld [vmem:[%s2 + $0xb0] sm:$0xf]
  %v1156 = vld [vmem:[%s2 + $0xb4] sm:$0xf]
  %v1157 = vld [vmem:[%s2 + $0xb8] sm:$0xf]
  %v1158 = vld [vmem:[%s2 + $0xbc] sm:$0xf]
  %v1159 = vld [vmem:[%s2 + $0xc0] sm:$0xf]
  %v1160 = vld [vmem:[%s2 + $0xc4] sm:$0xf]
  %v1211 = vunpack.c.l.b16 %v1111
  %v1212 = vunpack.c.l.b16 %v1112
  %v1213 = vunpack.c.l.b16 %v1113
  %v1214 = vunpack.c.l.b16 %v1114
  %v1215 = vunpack.c.l.b16 %v1115
  %v1216 = vunpack.c.l.b16 %v1116
  %v1217 = vunpack.c.l.b16 %v1117
  %v1218 = vunpack.c.l.b16 %v1118
  %v1219 = vunpack.c.l.b16 %v1119
  %v1220 = vunpack.c.l.b16 %v1120
  %v1221 = vunpack.c.l.b16 %v1121
  %v1222 = vunpack.c.l.b16 %v1122
  %v1223 = vunpack.c.l.b16 %v1123
  %v1224 = vunpack.c.l.b16 %v1124
  %v1225 = vunpack.c.l.b16 %v1125
  %v1226 = vunpack.c.l.b16 %v1126
  %v1227 = vunpack.c.l.b16 %v1127
  %v1228 = vunpack.c.l.b16 %v1128
  %v1229 = vunpack.c.l.b16 %v1129
  %v1230 = vunpack.c.l.b16 %v1130
  %v1231 = vunpack.c.l.b16 %v1131
  %v1232 = vunpack.c.l.b16 %v1132
  %v1233 = vunpack.c.l.b16 %v1133
  %v1234 = vunpack.c.l.b16 %v1134
  %v1235 = vunpack.c.l.b16 %v1135
  %v1236 = vunpack.c.l.b16 %v1136
  %v1237 = vunpack.c.l.b16 %v1137
  %v1238 = vunpack.c.l.b16 %v1138
  %v1239 = vunpack.c.l.b16 %v1139
  %v1240 = vunpack.c.l.b16 %v1140
  %v1241 = vunpack.c.l.b16 %v1141
  %v1242 = vunpack.c.l.b16 %v1142
  %v1243 = vunpack.c.l.b16 %v1143
  %v1244 = vunpack.c.l.b16 %v1144
  %v1245 = vunpack.c.l.b16 %v1145
  %v1246 = vunpack.c.l.b16 %v1146
  %v1247 = vunpack.c.l.b16 %v1147
  %v1248 = vunpack.c.l.b16 %v1148
  %v1249 = vunpack.c.l.b16 %v1149
  %v1250 = vunpack.c.l.b16 %v1150
  %v1251 = vunpack.c.l.b16 %v1151
  %v1252 = vunpack.c.l.b16 %v1152
  %v1253 = vunpack.c.l.b16 %v1153
  %v1254 = vunpack.c.l.b16 %v1154
  %v1255 = vunpack.c.l.b16 %v1155
  %v1256 = vunpack.c.l.b16 %v1156
  %v1257 = vunpack.c.l.b16 %v1157
  %v1258 = vunpack.c.l.b16 %v1158
  %v1259 = vunpack.c.l.b16 %v1159
  %v1260 = vunpack.c.l.b16 %v1160
  %v1261 = vpack.c.b16 %v1212, %v1211
  %v1262 = vpack.c.b16 %v1214, %v1213
  %v1263 = vpack.c.b16 %v1216, %v1215
  %v1264 = vpack.c.b16 %v1218, %v1217
  %v1265 = vpack.c.b16 %v1220, %v1219
  %v1266 = vpack.c.b16 %v1222, %v1221
  %v1267 = vpack.c.b16 %v1224, %v1223
  %v1268 = vpack.c.b16 %v1226, %v1225
  %v1269 = vpack.c.b16 %v1228, %v1227
  %v1270 = vpack.c.b16 %v1230, %v1229
  %v1271 = vpack.c.b16 %v1232, %v1231
  %v1272 = vpack.c.b16 %v1234, %v1233
  %v1273 = vpack.c.b16 %v1236, %v1235
  %v1274 = vpack.c.b16 %v1238, %v1237
  %v1275 = vpack.c.b16 %v1240, %v1239
  %v1276 = vpack.c.b16 %v1242, %v1241
  %v1277 = vpack.c.b16 %v1244, %v1243
  %v1278 = vpack.c.b16 %v1246, %v1245
  %v1279 = vpack.c.b16 %v1248, %v1247
  %v1280 = vpack.c.b16 %v1250, %v1249
  %v1281 = vpack.c.b16 %v1252, %v1251
  %v1282 = vpack.c.b16 %v1254, %v1253
  %v1283 = vpack.c.b16 %v1256, %v1255
  %v1284 = vpack.c.b16 %v1258, %v1257
  %v1285 = vpack.c.b16 %v1260, %v1259
  %1311 = vmatprep.subr.bf16.mxu0 0
  %1312 = vmatpush1.bf16.msra.mxu0 %v286
  %1313 = vmatprep.subr.bf16.mxu0 0
  %1314 = vmatpush1.bf16.msra.mxu0 %v285
  %1315 = vmatprep.subr.bf16.mxu0 0
  %1316 = vmatpush1.bf16.msra.mxu0 %v284
  %1317 = vmatprep.subr.bf16.mxu0 0
  %1318 = vmatpush1.bf16.msra.mxu0 %v283
  %1319 = vmatprep.subr.bf16.mxu0 0
  %1320 = vmatpush1.bf16.msra.mxu0 %v282
  %1321 = vmatprep.subr.bf16.mxu0 0
  %1322 = vmatpush1.bf16.msra.mxu0 %v281
  %1323 = vmatprep.subr.bf16.mxu0 0
  %1324 = vmatpush1.bf16.msra.mxu0 %v280
  %1325 = vmatprep.subr.bf16.mxu0 0
  %1326 = vmatpush1.bf16.msra.mxu0 %v279
  %1327 = vmatprep.subr.bf16.mxu0 0
  %1328 = vmatpush2.bf16.msra.mxu0 0
  %1329 = vmatprep.subr.bf16.mxu0 0
  %1330 = vmatpush2.bf16.msra.mxu0 0
  %1331 = vmatprep.subr.bf16.mxu0 0
  %1332 = vmatpush2.bf16.msra.mxu0 0
  %1333 = vmatprep.subr.bf16.mxu0 0
  %1334 = vmatpush2.bf16.msra.mxu0 0
  %1335 = vmatprep.subr.bf16.mxu0 0
  %1336 = vmatpush2.bf16.msra.mxu0 0
  %1337 = vmatprep.subr.bf16.mxu0 0
  %1338 = vmatpush2.bf16.msra.mxu0 0
  %1339 = vmatprep.subr.bf16.mxu0 0
  %1340 = vmatpush2.bf16.msra.mxu0 0
  %1341 = vmatprep.subr.bf16.mxu0 0
  %1342 = vmatpush2.bf16.msra.mxu0 0
  %1343 = vmatprep.mubr.bf16.mxu0 0
  %1344 = vmatmul.mubr.bf16.gmra.mxu0 %v1261
  %v1345 = vpop.f32.mrf.mxu0
  %v1346 = vadd.f32 %v95, %v1345
  %v1347 = vpop.f32.mrf.mxu0
  %v1348 = vpop.f32.mrf.mxu0
  %v1349 = vadd.f32 %v95, %v1348
  %v1350 = vpop.f32.mrf.mxu0
  %1351 = vmatprep.mubr.bf16.mxu0 0
  %1352 = vmatmul.mubr.bf16.gmra.mxu0 %v1262
  %v1353 = vpop.f32.mrf.mxu0
  %v1354 = vadd.f32 %v95, %v1353
  %v1355 = vpop.f32.mrf.mxu0
  %v1356 = vpop.f32.mrf.mxu0
  %v1357 = vadd.f32 %v95, %v1356
  %v1358 = vpop.f32.mrf.mxu0
  %1359 = vmatprep.mubr.bf16.mxu0 0
  %1360 = vmatmul.mubr.bf16.gmra.mxu0 %v1263
  %v1361 = vpop.f32.mrf.mxu0
  %v1362 = vadd.f32 %v95, %v1361
  %v1363 = vpop.f32.mrf.mxu0
  %v1364 = vpop.f32.mrf.mxu0
  %v1365 = vadd.f32 %v95, %v1364
  %v1366 = vpop.f32.mrf.mxu0
  %1367 = vmatprep.mubr.bf16.mxu0 0
  %1368 = vmatmul.mubr.bf16.gmra.mxu0 %v1264
  %v1369 = vpop.f32.mrf.mxu0
  %v1370 = vadd.f32 %v95, %v1369
  %v1371 = vpop.f32.mrf.mxu0
  %v1372 = vpop.f32.mrf.mxu0
  %v1373 = vadd.f32 %v95, %v1372
  %v1374 = vpop.f32.mrf.mxu0
  %1375 = vmatprep.mubr.bf16.mxu0 0
  %1376 = vmatmul.mubr.bf16.gmra.mxu0 %v1265
  %v1377 = vpop.f32.mrf.mxu0
  %v1378 = vadd.f32 %v95, %v1377
  %v1379 = vpop.f32.mrf.mxu0
  %v1380 = vpop.f32.mrf.mxu0
  %v1381 = vadd.f32 %v95, %v1380
  %v1382 = vpop.f32.mrf.mxu0
  %1383 = vmatprep.mubr.bf16.mxu0 0
  %1384 = vmatmul.mubr.bf16.gmra.mxu0 %v1266
  %v1385 = vpop.f32.mrf.mxu0
  %v1386 = vadd.f32 %v95, %v1385
  %v1387 = vpop.f32.mrf.mxu0
  %v1388 = vpop.f32.mrf.mxu0
  %v1389 = vadd.f32 %v95, %v1388
  %v1390 = vpop.f32.mrf.mxu0
  %1391 = vmatprep.mubr.bf16.mxu0 0
  %1392 = vmatmul.mubr.bf16.gmra.mxu0 %v1267
  %v1393 = vpop.f32.mrf.mxu0
  %v1394 = vadd.f32 %v95, %v1393
  %v1395 = vpop.f32.mrf.mxu0
  %v1396 = vpop.f32.mrf.mxu0
  %v1397 = vadd.f32 %v95, %v1396
  %v1398 = vpop.f32.mrf.mxu0
  %1399 = vmatprep.mubr.bf16.mxu0 0
  %1400 = vmatmul.mubr.bf16.gmra.mxu0 %v1268
  %v1401 = vpop.f32.mrf.mxu0
  %v1402 = vadd.f32 %v95, %v1401
  %v1403 = vpop.f32.mrf.mxu0
  %v1404 = vpop.f32.mrf.mxu0
  %v1405 = vadd.f32 %v95, %v1404
  %v1406 = vpop.f32.mrf.mxu0
  %1407 = vmatprep.mubr.bf16.mxu0 0
  %1408 = vmatmul.mubr.bf16.gmra.mxu0 %v1269
  %v1409 = vpop.f32.mrf.mxu0
  %v1410 = vadd.f32 %v95, %v1409
  %v1411 = vpop.f32.mrf.mxu0
  %v1412 = vpop.f32.mrf.mxu0
  %v1413 = vadd.f32 %v95, %v1412
  %v1414 = vpop.f32.mrf.mxu0
  %1415 = vmatprep.mubr.bf16.mxu0 0
  %1416 = vmatmul.mubr.bf16.gmra.mxu0 %v1270
  %v1417 = vpop.f32.mrf.mxu0
  %v1418 = vadd.f32 %v95, %v1417
  %v1419 = vpop.f32.mrf.mxu0
  %v1420 = vpop.f32.mrf.mxu0
  %v1421 = vadd.f32 %v95, %v1420
  %v1422 = vpop.f32.mrf.mxu0
  %1423 = vmatprep.mubr.bf16.mxu0 0
  %1424 = vmatmul.mubr.bf16.gmra.mxu0 %v1271
  %v1425 = vpop.f32.mrf.mxu0
  %v1426 = vadd.f32 %v95, %v1425
  %v1427 = vpop.f32.mrf.mxu0
  %v1428 = vpop.f32.mrf.mxu0
  %v1429 = vadd.f32 %v95, %v1428
  %v1430 = vpop.f32.mrf.mxu0
  %1431 = vmatprep.mubr.bf16.mxu0 0
  %1432 = vmatmul.mubr.bf16.gmra.mxu0 %v1272
  %v1433 = vpop.f32.mrf.mxu0
  %v1434 = vadd.f32 %v95, %v1433
  %v1435 = vpop.f32.mrf.mxu0
  %v1436 = vpop.f32.mrf.mxu0
  %v1437 = vadd.f32 %v95, %v1436
  %v1438 = vpop.f32.mrf.mxu0
  %1439 = vmatprep.mubr.bf16.mxu0 0
  %1440 = vmatmul.mubr.bf16.gmra.mxu0 %v1273
  %v1441 = vpop.f32.mrf.mxu0
  %v1442 = vadd.f32 %v95, %v1441
  %v1443 = vpop.f32.mrf.mxu0
  %v1444 = vpop.f32.mrf.mxu0
  %v1445 = vadd.f32 %v95, %v1444
  %v1446 = vpop.f32.mrf.mxu0
  %1447 = vmatprep.mubr.bf16.mxu0 0
  %1448 = vmatmul.mubr.bf16.gmra.mxu0 %v1274
  %v1449 = vpop.f32.mrf.mxu0
  %v1450 = vadd.f32 %v95, %v1449
  %v1451 = vpop.f32.mrf.mxu0
  %v1452 = vpop.f32.mrf.mxu0
  %v1453 = vadd.f32 %v95, %v1452
  %v1454 = vpop.f32.mrf.mxu0
  %1455 = vmatprep.mubr.bf16.mxu0 0
  %1456 = vmatmul.mubr.bf16.gmra.mxu0 %v1275
  %v1457 = vpop.f32.mrf.mxu0
  %v1458 = vadd.f32 %v95, %v1457
  %v1459 = vpop.f32.mrf.mxu0
  %v1460 = vpop.f32.mrf.mxu0
  %v1461 = vadd.f32 %v95, %v1460
  %v1462 = vpop.f32.mrf.mxu0
  %1463 = vmatprep.mubr.bf16.mxu0 0
  %1464 = vmatmul.mubr.bf16.gmra.mxu0 %v1276
  %v1465 = vpop.f32.mrf.mxu0
  %v1466 = vadd.f32 %v95, %v1465
  %v1467 = vpop.f32.mrf.mxu0
  %v1468 = vpop.f32.mrf.mxu0
  %v1469 = vadd.f32 %v95, %v1468
  %v1470 = vpop.f32.mrf.mxu0
  %1471 = vmatprep.mubr.bf16.mxu0 0
  %1472 = vmatmul.mubr.bf16.gmra.mxu0 %v1277
  %v1473 = vpop.f32.mrf.mxu0
  %v1474 = vadd.f32 %v95, %v1473
  %v1475 = vpop.f32.mrf.mxu0
  %v1476 = vpop.f32.mrf.mxu0
  %v1477 = vadd.f32 %v95, %v1476
  %v1478 = vpop.f32.mrf.mxu0
  %1479 = vmatprep.mubr.bf16.mxu0 0
  %1480 = vmatmul.mubr.bf16.gmra.mxu0 %v1278
  %v1481 = vpop.f32.mrf.mxu0
  %v1482 = vadd.f32 %v95, %v1481
  %v1483 = vpop.f32.mrf.mxu0
  %v1484 = vpop.f32.mrf.mxu0
  %v1485 = vadd.f32 %v95, %v1484
  %v1486 = vpop.f32.mrf.mxu0
  %1487 = vmatprep.mubr.bf16.mxu0 0
  %1488 = vmatmul.mubr.bf16.gmra.mxu0 %v1279
  %v1489 = vpop.f32.mrf.mxu0
  %v1490 = vadd.f32 %v95, %v1489
  %v1491 = vpop.f32.mrf.mxu0
  %v1492 = vpop.f32.mrf.mxu0
  %v1493 = vadd.f32 %v95, %v1492
  %v1494 = vpop.f32.mrf.mxu0
  %1495 = vmatprep.mubr.bf16.mxu0 0
  %1496 = vmatmul.mubr.bf16.gmra.mxu0 %v1280
  %v1497 = vpop.f32.mrf.mxu0
  %v1498 = vadd.f32 %v95, %v1497
  %v1499 = vpop.f32.mrf.mxu0
  %v1500 = vpop.f32.mrf.mxu0
  %v1501 = vadd.f32 %v95, %v1500
  %v1502 = vpop.f32.mrf.mxu0
  %1503 = vmatprep.mubr.bf16.mxu0 0
  %1504 = vmatmul.mubr.bf16.gmra.mxu0 %v1281
  %v1505 = vpop.f32.mrf.mxu0
  %v1506 = vadd.f32 %v95, %v1505
  %v1507 = vpop.f32.mrf.mxu0
  %v1508 = vpop.f32.mrf.mxu0
  %v1509 = vadd.f32 %v95, %v1508
  %v1510 = vpop.f32.mrf.mxu0
  %1511 = vmatprep.mubr.bf16.mxu0 0
  %1512 = vmatmul.mubr.bf16.gmra.mxu0 %v1282
  %v1513 = vpop.f32.mrf.mxu0
  %v1514 = vadd.f32 %v95, %v1513
  %v1515 = vpop.f32.mrf.mxu0
  %v1516 = vpop.f32.mrf.mxu0
  %v1517 = vadd.f32 %v95, %v1516
  %v1518 = vpop.f32.mrf.mxu0
  %1519 = vmatprep.mubr.bf16.mxu0 0
  %1520 = vmatmul.mubr.bf16.gmra.mxu0 %v1283
  %v1521 = vpop.f32.mrf.mxu0
  %v1522 = vadd.f32 %v95, %v1521
  %v1523 = vpop.f32.mrf.mxu0
  %v1524 = vpop.f32.mrf.mxu0
  %v1525 = vadd.f32 %v95, %v1524
  %v1526 = vpop.f32.mrf.mxu0
  %1527 = vmatprep.mubr.bf16.mxu0 0
  %1528 = vmatmul.mubr.bf16.gmra.mxu0 %v1284
  %v1529 = vpop.f32.mrf.mxu0
  %v1530 = vadd.f32 %v95, %v1529
  %v1531 = vpop.f32.mrf.mxu0
  %v1532 = vpop.f32.mrf.mxu0
  %v1533 = vadd.f32 %v95, %v1532
  %v1534 = vpop.f32.mrf.mxu0
  %1535 = vmatprep.mubr.bf16.mxu0 0
  %1536 = vmatmul.mubr.bf16.gmra.mxu0 %v1285
  %v1537 = vpop.f32.mrf.mxu0
  %v1538 = vadd.f32 %v95, %v1537
  %v1539 = vpop.f32.mrf.mxu0
  %v1540 = vpop.f32.mrf.mxu0
  %v1541 = vadd.f32 %v95, %v1540
  %v1542 = vpop.f32.mrf.mxu0
  %1543 = vdwg.mxu0
  %v1544 = vmax.f32 %v1346, 0.0
  %v1545 = vmax.f32 %v1349, 0.0
  %v1546 = vmax.f32 %v1354, 0.0
  %v1547 = vmax.f32 %v1357, 0.0
  %v1548 = vmax.f32 %v1362, 0.0
  %v1549 = vmax.f32 %v1365, 0.0
  %v1550 = vmax.f32 %v1370, 0.0
  %v1551 = vmax.f32 %v1373, 0.0
  %v1552 = vmax.f32 %v1378, 0.0
  %v1553 = vmax.f32 %v1381, 0.0
  %v1554 = vmax.f32 %v1386, 0.0
  %v1555 = vmax.f32 %v1389, 0.0
  %v1556 = vmax.f32 %v1394, 0.0
  %v1557 = vmax.f32 %v1397, 0.0
  %v1558 = vmax.f32 %v1402, 0.0
  %v1559 = vmax.f32 %v1405, 0.0
  %v1560 = vmax.f32 %v1410, 0.0
  %v1561 = vmax.f32 %v1413, 0.0
  %v1562 = vmax.f32 %v1418, 0.0
  %v1563 = vmax.f32 %v1421, 0.0
  %v1564 = vmax.f32 %v1426, 0.0
  %v1565 = vmax.f32 %v1429, 0.0
  %v1566 = vmax.f32 %v1434, 0.0
  %v1567 = vmax.f32 %v1437, 0.0
  %v1568 = vmax.f32 %v1442, 0.0
  %v1569 = vmax.f32 %v1445, 0.0
  %v1570 = vmax.f32 %v1450, 0.0
  %v1571 = vmax.f32 %v1453, 0.0
  %v1572 = vmax.f32 %v1458, 0.0
  %v1573 = vmax.f32 %v1461, 0.0
  %v1574 = vmax.f32 %v1466, 0.0
  %v1575 = vmax.f32 %v1469, 0.0
  %v1576 = vmax.f32 %v1474, 0.0
  %v1577 = vmax.f32 %v1477, 0.0
  %v1578 = vmax.f32 %v1482, 0.0
  %v1579 = vmax.f32 %v1485, 0.0
  %v1580 = vmax.f32 %v1490, 0.0
  %v1581 = vmax.f32 %v1493, 0.0
  %v1582 = vmax.f32 %v1498, 0.0
  %v1583 = vmax.f32 %v1501, 0.0
  %v1584 = vmax.f32 %v1506, 0.0
  %v1585 = vmax.f32 %v1509, 0.0
  %v1586 = vmax.f32 %v1514, 0.0
  %v1587 = vmax.f32 %v1517, 0.0
  %v1588 = vmax.f32 %v1522, 0.0
  %v1589 = vmax.f32 %v1525, 0.0
  %v1590 = vmax.f32 %v1530, 0.0
  %v1591 = vmax.f32 %v1533, 0.0
  %v1592 = vmax.f32 %v1538, 0.0
  %v1593 = vmax.f32 %v1541, 0.0
  %v1594 = vld [vmem:[%s3] sm:$0xf]
  %v1595 = vld [vmem:[%s3 + $0x4] sm:$0xf]
  %v1596 = vld [vmem:[%s3 + $0x8] sm:$0xf]
  %v1597 = vld [vmem:[%s3 + $0xc] sm:$0xf]
  %v1598 = vld [vmem:[%s3 + $0x10] sm:$0xf]
  %v1599 = vld [vmem:[%s3 + $0x14] sm:$0xf]
  %v1600 = vld [vmem:[%s3 + $0x18] sm:$0xf]
  %v1601 = vld [vmem:[%s3 + $0x1c] sm:$0xf]
  %v1602 = vld [vmem:[%s3 + $0x20] sm:$0xf]
  %v1603 = vld [vmem:[%s3 + $0x24] sm:$0xf]
  %v1604 = vld [vmem:[%s3 + $0x28] sm:$0xf]
  %v1605 = vld [vmem:[%s3 + $0x2c] sm:$0xf]
  %v1606 = vld [vmem:[%s3 + $0x30] sm:$0xf]
  %v1607 = vld [vmem:[%s3 + $0x34] sm:$0xf]
  %v1608 = vld [vmem:[%s3 + $0x38] sm:$0xf]
  %v1609 = vld [vmem:[%s3 + $0x3c] sm:$0xf]
  %v1610 = vld [vmem:[%s3 + $0x40] sm:$0xf]
  %v1611 = vld [vmem:[%s3 + $0x44] sm:$0xf]
  %v1612 = vld [vmem:[%s3 + $0x48] sm:$0xf]
  %v1613 = vld [vmem:[%s3 + $0x4c] sm:$0xf]
  %v1614 = vld [vmem:[%s3 + $0x50] sm:$0xf]
  %v1615 = vld [vmem:[%s3 + $0x54] sm:$0xf]
  %v1616 = vld [vmem:[%s3 + $0x58] sm:$0xf]
  %v1617 = vld [vmem:[%s3 + $0x5c] sm:$0xf]
  %v1618 = vld [vmem:[%s3 + $0x60] sm:$0xf]
  %v1619 = vld [vmem:[%s3 + $0x64] sm:$0xf]
  %v1620 = vld [vmem:[%s3 + $0x68] sm:$0xf]
  %v1621 = vld [vmem:[%s3 + $0x6c] sm:$0xf]
  %v1622 = vld [vmem:[%s3 + $0x70] sm:$0xf]
  %v1623 = vld [vmem:[%s3 + $0x74] sm:$0xf]
  %v1624 = vld [vmem:[%s3 + $0x78] sm:$0xf]
  %v1625 = vld [vmem:[%s3 + $0x7c] sm:$0xf]
  %v1626 = vld [vmem:[%s3 + $0x80] sm:$0xf]
  %v1627 = vld [vmem:[%s3 + $0x84] sm:$0xf]
  %v1628 = vld [vmem:[%s3 + $0x88] sm:$0xf]
  %v1629 = vld [vmem:[%s3 + $0x8c] sm:$0xf]
  %v1630 = vld [vmem:[%s3 + $0x90] sm:$0xf]
  %v1631 = vld [vmem:[%s3 + $0x94] sm:$0xf]
  %v1632 = vld [vmem:[%s3 + $0x98] sm:$0xf]
  %v1633 = vld [vmem:[%s3 + $0x9c] sm:$0xf]
  %v1634 = vld [vmem:[%s3 + $0xa0] sm:$0xf]
  %v1635 = vld [vmem:[%s3 + $0xa4] sm:$0xf]
  %v1636 = vld [vmem:[%s3 + $0xa8] sm:$0xf]
  %v1637 = vld [vmem:[%s3 + $0xac] sm:$0xf]
  %v1638 = vld [vmem:[%s3 + $0xb0] sm:$0xf]
  %v1639 = vld [vmem:[%s3 + $0xb4] sm:$0xf]
  %v1640 = vld [vmem:[%s3 + $0xb8] sm:$0xf]
  %v1641 = vld [vmem:[%s3 + $0xbc] sm:$0xf]
  %v1642 = vld [vmem:[%s3 + $0xc0] sm:$0xf]
  %v1643 = vld [vmem:[%s3 + $0xc4] sm:$0xf]
  %v1694 = vunpack.c.l.b16 %v1594
  %v1695 = vunpack.c.l.b16 %v1595
  %v1696 = vunpack.c.l.b16 %v1596
  %v1697 = vunpack.c.l.b16 %v1597
  %v1698 = vunpack.c.l.b16 %v1598
  %v1699 = vunpack.c.l.b16 %v1599
  %v1700 = vunpack.c.l.b16 %v1600
  %v1701 = vunpack.c.l.b16 %v1601
  %v1702 = vunpack.c.l.b16 %v1602
  %v1703 = vunpack.c.l.b16 %v1603
  %v1704 = vunpack.c.l.b16 %v1604
  %v1705 = vunpack.c.l.b16 %v1605
  %v1706 = vunpack.c.l.b16 %v1606
  %v1707 = vunpack.c.l.b16 %v1607
  %v1708 = vunpack.c.l.b16 %v1608
  %v1709 = vunpack.c.l.b16 %v1609
  %v1710 = vunpack.c.l.b16 %v1610
  %v1711 = vunpack.c.l.b16 %v1611
  %v1712 = vunpack.c.l.b16 %v1612
  %v1713 = vunpack.c.l.b16 %v1613
  %v1714 = vunpack.c.l.b16 %v1614
  %v1715 = vunpack.c.l.b16 %v1615
  %v1716 = vunpack.c.l.b16 %v1616
  %v1717 = vunpack.c.l.b16 %v1617
  %v1718 = vunpack.c.l.b16 %v1618
  %v1719 = vunpack.c.l.b16 %v1619
  %v1720 = vunpack.c.l.b16 %v1620
  %v1721 = vunpack.c.l.b16 %v1621
  %v1722 = vunpack.c.l.b16 %v1622
  %v1723 = vunpack.c.l.b16 %v1623
  %v1724 = vunpack.c.l.b16 %v1624
  %v1725 = vunpack.c.l.b16 %v1625
  %v1726 = vunpack.c.l.b16 %v1626
  %v1727 = vunpack.c.l.b16 %v1627
  %v1728 = vunpack.c.l.b16 %v1628
  %v1729 = vunpack.c.l.b16 %v1629
  %v1730 = vunpack.c.l.b16 %v1630
  %v1731 = vunpack.c.l.b16 %v1631
  %v1732 = vunpack.c.l.b16 %v1632
  %v1733 = vunpack.c.l.b16 %v1633
  %v1734 = vunpack.c.l.b16 %v1634
  %v1735 = vunpack.c.l.b16 %v1635
  %v1736 = vunpack.c.l.b16 %v1636
  %v1737 = vunpack.c.l.b16 %v1637
  %v1738 = vunpack.c.l.b16 %v1638
  %v1739 = vunpack.c.l.b16 %v1639
  %v1740 = vunpack.c.l.b16 %v1640
  %v1741 = vunpack.c.l.b16 %v1641
  %v1742 = vunpack.c.l.b16 %v1642
  %v1743 = vunpack.c.l.b16 %v1643
  %v1744 = vpack.c.b16 %v1695, %v1694
  %v1745 = vpack.c.b16 %v1697, %v1696
  %v1746 = vpack.c.b16 %v1699, %v1698
  %v1747 = vpack.c.b16 %v1701, %v1700
  %v1748 = vpack.c.b16 %v1703, %v1702
  %v1749 = vpack.c.b16 %v1705, %v1704
  %v1750 = vpack.c.b16 %v1707, %v1706
  %v1751 = vpack.c.b16 %v1709, %v1708
  %v1752 = vpack.c.b16 %v1711, %v1710
  %v1753 = vpack.c.b16 %v1713, %v1712
  %v1754 = vpack.c.b16 %v1715, %v1714
  %v1755 = vpack.c.b16 %v1717, %v1716
  %v1756 = vpack.c.b16 %v1719, %v1718
  %v1757 = vpack.c.b16 %v1721, %v1720
  %v1758 = vpack.c.b16 %v1723, %v1722
  %v1759 = vpack.c.b16 %v1725, %v1724
  %v1760 = vpack.c.b16 %v1727, %v1726
  %v1761 = vpack.c.b16 %v1729, %v1728
  %v1762 = vpack.c.b16 %v1731, %v1730
  %v1763 = vpack.c.b16 %v1733, %v1732
  %v1764 = vpack.c.b16 %v1735, %v1734
  %v1765 = vpack.c.b16 %v1737, %v1736
  %v1766 = vpack.c.b16 %v1739, %v1738
  %v1767 = vpack.c.b16 %v1741, %v1740
  %v1768 = vpack.c.b16 %v1743, %v1742
  %1794 = vmatprep.subr.bf16.mxu0 0
  %1795 = vmatpush1.bf16.msra.mxu0 %v286
  %1796 = vmatprep.subr.bf16.mxu0 0
  %1797 = vmatpush1.bf16.msra.mxu0 %v285
  %1798 = vmatprep.subr.bf16.mxu0 0
  %1799 = vmatpush1.bf16.msra.mxu0 %v284
  %1800 = vmatprep.subr.bf16.mxu0 0
  %1801 = vmatpush1.bf16.msra.mxu0 %v283
  %1802 = vmatprep.subr.bf16.mxu0 0
  %1803 = vmatpush1.bf16.msra.mxu0 %v282
  %1804 = vmatprep.subr.bf16.mxu0 0
  %1805 = vmatpush1.bf16.msra.mxu0 %v281
  %1806 = vmatprep.subr.bf16.mxu0 0
  %1807 = vmatpush1.bf16.msra.mxu0 %v280
  %1808 = vmatprep.subr.bf16.mxu0 0
  %1809 = vmatpush1.bf16.msra.mxu0 %v279
  %1810 = vmatprep.subr.bf16.mxu0 0
  %1811 = vmatpush2.bf16.msra.mxu0 0
  %1812 = vmatprep.subr.bf16.mxu0 0
  %1813 = vmatpush2.bf16.msra.mxu0 0
  %1814 = vmatprep.subr.bf16.mxu0 0
  %1815 = vmatpush2.bf16.msra.mxu0 0
  %1816 = vmatprep.subr.bf16.mxu0 0
  %1817 = vmatpush2.bf16.msra.mxu0 0
  %1818 = vmatprep.subr.bf16.mxu0 0
  %1819 = vmatpush2.bf16.msra.mxu0 0
  %1820 = vmatprep.subr.bf16.mxu0 0
  %1821 = vmatpush2.bf16.msra.mxu0 0
  %1822 = vmatprep.subr.bf16.mxu0 0
  %1823 = vmatpush2.bf16.msra.mxu0 0
  %1824 = vmatprep.subr.bf16.mxu0 0
  %1825 = vmatpush2.bf16.msra.mxu0 0
  %1826 = vmatprep.mubr.bf16.mxu0 0
  %1827 = vmatmul.mubr.bf16.gmra.mxu0 %v1744
  %v1828 = vpop.f32.mrf.mxu0
  %v1829 = vadd.f32 %v95, %v1828
  %v1830 = vpop.f32.mrf.mxu0
  %v1831 = vpop.f32.mrf.mxu0
  %v1832 = vadd.f32 %v95, %v1831
  %v1833 = vpop.f32.mrf.mxu0
  %1834 = vmatprep.mubr.bf16.mxu0 0
  %1835 = vmatmul.mubr.bf16.gmra.mxu0 %v1745
  %v1836 = vpop.f32.mrf.mxu0
  %v1837 = vadd.f32 %v95, %v1836
  %v1838 = vpop.f32.mrf.mxu0
  %v1839 = vpop.f32.mrf.mxu0
  %v1840 = vadd.f32 %v95, %v1839
  %v1841 = vpop.f32.mrf.mxu0
  %1842 = vmatprep.mubr.bf16.mxu0 0
  %1843 = vmatmul.mubr.bf16.gmra.mxu0 %v1746
  %v1844 = vpop.f32.mrf.mxu0
  %v1845 = vadd.f32 %v95, %v1844
  %v1846 = vpop.f32.mrf.mxu0
  %v1847 = vpop.f32.mrf.mxu0
  %v1848 = vadd.f32 %v95, %v1847
  %v1849 = vpop.f32.mrf.mxu0
  %1850 = vmatprep.mubr.bf16.mxu0 0
  %1851 = vmatmul.mubr.bf16.gmra.mxu0 %v1747
  %v1852 = vpop.f32.mrf.mxu0
  %v1853 = vadd.f32 %v95, %v1852
  %v1854 = vpop.f32.mrf.mxu0
  %v1855 = vpop.f32.mrf.mxu0
  %v1856 = vadd.f32 %v95, %v1855
  %v1857 = vpop.f32.mrf.mxu0
  %1858 = vmatprep.mubr.bf16.mxu0 0
  %1859 = vmatmul.mubr.bf16.gmra.mxu0 %v1748
  %v1860 = vpop.f32.mrf.mxu0
  %v1861 = vadd.f32 %v95, %v1860
  %v1862 = vpop.f32.mrf.mxu0
  %v1863 = vpop.f32.mrf.mxu0
  %v1864 = vadd.f32 %v95, %v1863
  %v1865 = vpop.f32.mrf.mxu0
  %1866 = vmatprep.mubr.bf16.mxu0 0
  %1867 = vmatmul.mubr.bf16.gmra.mxu0 %v1749
  %v1868 = vpop.f32.mrf.mxu0
  %v1869 = vadd.f32 %v95, %v1868
  %v1870 = vpop.f32.mrf.mxu0
  %v1871 = vpop.f32.mrf.mxu0
  %v1872 = vadd.f32 %v95, %v1871
  %v1873 = vpop.f32.mrf.mxu0
  %1874 = vmatprep.mubr.bf16.mxu0 0
  %1875 = vmatmul.mubr.bf16.gmra.mxu0 %v1750
  %v1876 = vpop.f32.mrf.mxu0
  %v1877 = vadd.f32 %v95, %v1876
  %v1878 = vpop.f32.mrf.mxu0
  %v1879 = vpop.f32.mrf.mxu0
  %v1880 = vadd.f32 %v95, %v1879
  %v1881 = vpop.f32.mrf.mxu0
  %1882 = vmatprep.mubr.bf16.mxu0 0
  %1883 = vmatmul.mubr.bf16.gmra.mxu0 %v1751
  %v1884 = vpop.f32.mrf.mxu0
  %v1885 = vadd.f32 %v95, %v1884
  %v1886 = vpop.f32.mrf.mxu0
  %v1887 = vpop.f32.mrf.mxu0
  %v1888 = vadd.f32 %v95, %v1887
  %v1889 = vpop.f32.mrf.mxu0
  %1890 = vmatprep.mubr.bf16.mxu0 0
  %1891 = vmatmul.mubr.bf16.gmra.mxu0 %v1752
  %v1892 = vpop.f32.mrf.mxu0
  %v1893 = vadd.f32 %v95, %v1892
  %v1894 = vpop.f32.mrf.mxu0
  %v1895 = vpop.f32.mrf.mxu0
  %v1896 = vadd.f32 %v95, %v1895
  %v1897 = vpop.f32.mrf.mxu0
  %1898 = vmatprep.mubr.bf16.mxu0 0
  %1899 = vmatmul.mubr.bf16.gmra.mxu0 %v1753
  %v1900 = vpop.f32.mrf.mxu0
  %v1901 = vadd.f32 %v95, %v1900
  %v1902 = vpop.f32.mrf.mxu0
  %v1903 = vpop.f32.mrf.mxu0
  %v1904 = vadd.f32 %v95, %v1903
  %v1905 = vpop.f32.mrf.mxu0
  %1906 = vmatprep.mubr.bf16.mxu0 0
  %1907 = vmatmul.mubr.bf16.gmra.mxu0 %v1754
  %v1908 = vpop.f32.mrf.mxu0
  %v1909 = vadd.f32 %v95, %v1908
  %v1910 = vpop.f32.mrf.mxu0
  %v1911 = vpop.f32.mrf.mxu0
  %v1912 = vadd.f32 %v95, %v1911
  %v1913 = vpop.f32.mrf.mxu0
  %1914 = vmatprep.mubr.bf16.mxu0 0
  %1915 = vmatmul.mubr.bf16.gmra.mxu0 %v1755
  %v1916 = vpop.f32.mrf.mxu0
  %v1917 = vadd.f32 %v95, %v1916
  %v1918 = vpop.f32.mrf.mxu0
  %v1919 = vpop.f32.mrf.mxu0
  %v1920 = vadd.f32 %v95, %v1919
  %v1921 = vpop.f32.mrf.mxu0
  %1922 = vmatprep.mubr.bf16.mxu0 0
  %1923 = vmatmul.mubr.bf16.gmra.mxu0 %v1756
  %v1924 = vpop.f32.mrf.mxu0
  %v1925 = vadd.f32 %v95, %v1924
  %v1926 = vpop.f32.mrf.mxu0
  %v1927 = vpop.f32.mrf.mxu0
  %v1928 = vadd.f32 %v95, %v1927
  %v1929 = vpop.f32.mrf.mxu0
  %1930 = vmatprep.mubr.bf16.mxu0 0
  %1931 = vmatmul.mubr.bf16.gmra.mxu0 %v1757
  %v1932 = vpop.f32.mrf.mxu0
  %v1933 = vadd.f32 %v95, %v1932
  %v1934 = vpop.f32.mrf.mxu0
  %v1935 = vpop.f32.mrf.mxu0
  %v1936 = vadd.f32 %v95, %v1935
  %v1937 = vpop.f32.mrf.mxu0
  %1938 = vmatprep.mubr.bf16.mxu0 0
  %1939 = vmatmul.mubr.bf16.gmra.mxu0 %v1758
  %v1940 = vpop.f32.mrf.mxu0
  %v1941 = vadd.f32 %v95, %v1940
  %v1942 = vpop.f32.mrf.mxu0
  %v1943 = vpop.f32.mrf.mxu0
  %v1944 = vadd.f32 %v95, %v1943
  %v1945 = vpop.f32.mrf.mxu0
  %1946 = vmatprep.mubr.bf16.mxu0 0
  %1947 = vmatmul.mubr.bf16.gmra.mxu0 %v1759
  %v1948 = vpop.f32.mrf.mxu0
  %v1949 = vadd.f32 %v95, %v1948
  %v1950 = vpop.f32.mrf.mxu0
  %v1951 = vpop.f32.mrf.mxu0
  %v1952 = vadd.f32 %v95, %v1951
  %v1953 = vpop.f32.mrf.mxu0
  %1954 = vmatprep.mubr.bf16.mxu0 0
  %1955 = vmatmul.mubr.bf16.gmra.mxu0 %v1760
  %v1956 = vpop.f32.mrf.mxu0
  %v1957 = vadd.f32 %v95, %v1956
  %v1958 = vpop.f32.mrf.mxu0
  %v1959 = vpop.f32.mrf.mxu0
  %v1960 = vadd.f32 %v95, %v1959
  %v1961 = vpop.f32.mrf.mxu0
  %1962 = vmatprep.mubr.bf16.mxu0 0
  %1963 = vmatmul.mubr.bf16.gmra.mxu0 %v1761
  %v1964 = vpop.f32.mrf.mxu0
  %v1965 = vadd.f32 %v95, %v1964
  %v1966 = vpop.f32.mrf.mxu0
  %v1967 = vpop.f32.mrf.mxu0
  %v1968 = vadd.f32 %v95, %v1967
  %v1969 = vpop.f32.mrf.mxu0
  %1970 = vmatprep.mubr.bf16.mxu0 0
  %1971 = vmatmul.mubr.bf16.gmra.mxu0 %v1762
  %v1972 = vpop.f32.mrf.mxu0
  %v1973 = vadd.f32 %v95, %v1972
  %v1974 = vpop.f32.mrf.mxu0
  %v1975 = vpop.f32.mrf.mxu0
  %v1976 = vadd.f32 %v95, %v1975
  %v1977 = vpop.f32.mrf.mxu0
  %1978 = vmatprep.mubr.bf16.mxu0 0
  %1979 = vmatmul.mubr.bf16.gmra.mxu0 %v1763
  %v1980 = vpop.f32.mrf.mxu0
  %v1981 = vadd.f32 %v95, %v1980
  %v1982 = vpop.f32.mrf.mxu0
  %v1983 = vpop.f32.mrf.mxu0
  %v1984 = vadd.f32 %v95, %v1983
  %v1985 = vpop.f32.mrf.mxu0
  %1986 = vmatprep.mubr.bf16.mxu0 0
  %1987 = vmatmul.mubr.bf16.gmra.mxu0 %v1764
  %v1988 = vpop.f32.mrf.mxu0
  %v1989 = vadd.f32 %v95, %v1988
  %v1990 = vpop.f32.mrf.mxu0
  %v1991 = vpop.f32.mrf.mxu0
  %v1992 = vadd.f32 %v95, %v1991
  %v1993 = vpop.f32.mrf.mxu0
  %1994 = vmatprep.mubr.bf16.mxu0 0
  %1995 = vmatmul.mubr.bf16.gmra.mxu0 %v1765
  %v1996 = vpop.f32.mrf.mxu0
  %v1997 = vadd.f32 %v95, %v1996
  %v1998 = vpop.f32.mrf.mxu0
  %v1999 = vpop.f32.mrf.mxu0
  %v2000 = vadd.f32 %v95, %v1999
  %v2001 = vpop.f32.mrf.mxu0
  %2002 = vmatprep.mubr.bf16.mxu0 0
  %2003 = vmatmul.mubr.bf16.gmra.mxu0 %v1766
  %v2004 = vpop.f32.mrf.mxu0
  %v2005 = vadd.f32 %v95, %v2004
  %v2006 = vpop.f32.mrf.mxu0
  %v2007 = vpop.f32.mrf.mxu0
  %v2008 = vadd.f32 %v95, %v2007
  %v2009 = vpop.f32.mrf.mxu0
  %2010 = vmatprep.mubr.bf16.mxu0 0
  %2011 = vmatmul.mubr.bf16.gmra.mxu0 %v1767
  %v2012 = vpop.f32.mrf.mxu0
  %v2013 = vadd.f32 %v95, %v2012
  %v2014 = vpop.f32.mrf.mxu0
  %v2015 = vpop.f32.mrf.mxu0
  %v2016 = vadd.f32 %v95, %v2015
  %v2017 = vpop.f32.mrf.mxu0
  %2018 = vmatprep.mubr.bf16.mxu0 0
  %2019 = vmatmul.mubr.bf16.gmra.mxu0 %v1768
  %v2020 = vpop.f32.mrf.mxu0
  %v2021 = vadd.f32 %v95, %v2020
  %v2022 = vpop.f32.mrf.mxu0
  %v2023 = vpop.f32.mrf.mxu0
  %v2024 = vadd.f32 %v95, %v2023
  %v2025 = vpop.f32.mrf.mxu0
  %2026 = vdwg.mxu0
  %v2027 = vmax.f32 %v1829, 0.0
  %v2028 = vmax.f32 %v1832, 0.0
  %v2029 = vmax.f32 %v1837, 0.0
  %v2030 = vmax.f32 %v1840, 0.0
  %v2031 = vmax.f32 %v1845, 0.0
  %v2032 = vmax.f32 %v1848, 0.0
  %v2033 = vmax.f32 %v1853, 0.0
  %v2034 = vmax.f32 %v1856, 0.0
  %v2035 = vmax.f32 %v1861, 0.0
  %v2036 = vmax.f32 %v1864, 0.0
  %v2037 = vmax.f32 %v1869, 0.0
  %v2038 = vmax.f32 %v1872, 0.0
  %v2039 = vmax.f32 %v1877, 0.0
  %v2040 = vmax.f32 %v1880, 0.0
  %v2041 = vmax.f32 %v1885, 0.0
  %v2042 = vmax.f32 %v1888, 0.0
  %v2043 = vmax.f32 %v1893, 0.0
  %v2044 = vmax.f32 %v1896, 0.0
  %v2045 = vmax.f32 %v1901, 0.0
  %v2046 = vmax.f32 %v1904, 0.0
  %v2047 = vmax.f32 %v1909, 0.0
  %v2048 = vmax.f32 %v1912, 0.0
  %v2049 = vmax.f32 %v1917, 0.0
  %v2050 = vmax.f32 %v1920, 0.0
  %v2051 = vmax.f32 %v1925, 0.0
  %v2052 = vmax.f32 %v1928, 0.0
  %v2053 = vmax.f32 %v1933, 0.0
  %v2054 = vmax.f32 %v1936, 0.0
  %v2055 = vmax.f32 %v1941, 0.0
  %v2056 = vmax.f32 %v1944, 0.0
  %v2057 = vmax.f32 %v1949, 0.0
  %v2058 = vmax.f32 %v1952, 0.0
  %v2059 = vmax.f32 %v1957, 0.0
  %v2060 = vmax.f32 %v1960, 0.0
  %v2061 = vmax.f32 %v1965, 0.0
  %v2062 = vmax.f32 %v1968, 0.0
  %v2063 = vmax.f32 %v1973, 0.0
  %v2064 = vmax.f32 %v1976, 0.0
  %v2065 = vmax.f32 %v1981, 0.0
  %v2066 = vmax.f32 %v1984, 0.0
  %v2067 = vmax.f32 %v1989, 0.0
  %v2068 = vmax.f32 %v1992, 0.0
  %v2069 = vmax.f32 %v1997, 0.0
  %v2070 = vmax.f32 %v2000, 0.0
  %v2071 = vmax.f32 %v2005, 0.0
  %v2072 = vmax.f32 %v2008, 0.0
  %v2073 = vmax.f32 %v2013, 0.0
  %v2074 = vmax.f32 %v2016, 0.0
  %v2075 = vmax.f32 %v2021, 0.0
  %v2076 = vmax.f32 %v2024, 0.0
  %v2077 = vmax.f32 %v1544, %v2027
  %v2078 = vmax.f32 %v1545, %v2028
  %v2079 = vmax.f32 %v1546, %v2029
  %v2080 = vmax.f32 %v1547, %v2030
  %v2081 = vmax.f32 %v1548, %v2031
  %v2082 = vmax.f32 %v1549, %v2032
  %v2083 = vmax.f32 %v1550, %v2033
  %v2084 = vmax.f32 %v1551, %v2034
  %v2085 = vmax.f32 %v1552, %v2035
  %v2086 = vmax.f32 %v1553, %v2036
  %v2087 = vmax.f32 %v1554, %v2037
  %v2088 = vmax.f32 %v1555, %v2038
  %v2089 = vmax.f32 %v1556, %v2039
  %v2090 = vmax.f32 %v1557, %v2040
  %v2091 = vmax.f32 %v1558, %v2041
  %v2092 = vmax.f32 %v1559, %v2042
  %v2093 = vmax.f32 %v1560, %v2043
  %v2094 = vmax.f32 %v1561, %v2044
  %v2095 = vmax.f32 %v1562, %v2045
  %v2096 = vmax.f32 %v1563, %v2046
  %v2097 = vmax.f32 %v1564, %v2047
  %v2098 = vmax.f32 %v1565, %v2048
  %v2099 = vmax.f32 %v1566, %v2049
  %v2100 = vmax.f32 %v1567, %v2050
  %v2101 = vmax.f32 %v1568, %v2051
  %v2102 = vmax.f32 %v1569, %v2052
  %v2103 = vmax.f32 %v1570, %v2053
  %v2104 = vmax.f32 %v1571, %v2054
  %v2105 = vmax.f32 %v1572, %v2055
  %v2106 = vmax.f32 %v1573, %v2056
  %v2107 = vmax.f32 %v1574, %v2057
  %v2108 = vmax.f32 %v1575, %v2058
  %v2109 = vmax.f32 %v1576, %v2059
  %v2110 = vmax.f32 %v1577, %v2060
  %v2111 = vmax.f32 %v1578, %v2061
  %v2112 = vmax.f32 %v1579, %v2062
  %v2113 = vmax.f32 %v1580, %v2063
  %v2114 = vmax.f32 %v1581, %v2064
  %v2115 = vmax.f32 %v1582, %v2065
  %v2116 = vmax.f32 %v1583, %v2066
  %v2117 = vmax.f32 %v1584, %v2067
  %v2118 = vmax.f32 %v1585, %v2068
  %v2119 = vmax.f32 %v1586, %v2069
  %v2120 = vmax.f32 %v1587, %v2070
  %v2121 = vmax.f32 %v1588, %v2071
  %v2122 = vmax.f32 %v1589, %v2072
  %v2123 = vmax.f32 %v1590, %v2073
  %v2124 = vmax.f32 %v1591, %v2074
  %v2125 = vmax.f32 %v1592, %v2075
  %v2126 = vmax.f32 %v1593, %v2076
  %v2127 = vmax.f32 %v1061, %v2077
  %v2128 = vmax.f32 %v1062, %v2078
  %v2129 = vmax.f32 %v1063, %v2079
  %v2130 = vmax.f32 %v1064, %v2080
  %v2131 = vmax.f32 %v1065, %v2081
  %v2132 = vmax.f32 %v1066, %v2082
  %v2133 = vmax.f32 %v1067, %v2083
  %v2134 = vmax.f32 %v1068, %v2084
  %v2135 = vmax.f32 %v1069, %v2085
  %v2136 = vmax.f32 %v1070, %v2086
  %v2137 = vmax.f32 %v1071, %v2087
  %v2138 = vmax.f32 %v1072, %v2088
  %v2139 = vmax.f32 %v1073, %v2089
  %v2140 = vmax.f32 %v1074, %v2090
  %v2141 = vmax.f32 %v1075, %v2091
  %v2142 = vmax.f32 %v1076, %v2092
  %v2143 = vmax.f32 %v1077, %v2093
  %v2144 = vmax.f32 %v1078, %v2094
  %v2145 = vmax.f32 %v1079, %v2095
  %v2146 = vmax.f32 %v1080, %v2096
  %v2147 = vmax.f32 %v1081, %v2097
  %v2148 = vmax.f32 %v1082, %v2098
  %v2149 = vmax.f32 %v1083, %v2099
  %v2150 = vmax.f32 %v1084, %v2100
  %v2151 = vmax.f32 %v1085, %v2101
  %v2152 = vmax.f32 %v1086, %v2102
  %v2153 = vmax.f32 %v1087, %v2103
  %v2154 = vmax.f32 %v1088, %v2104
  %v2155 = vmax.f32 %v1089, %v2105
  %v2156 = vmax.f32 %v1090, %v2106
  %v2157 = vmax.f32 %v1091, %v2107
  %v2158 = vmax.f32 %v1092, %v2108
  %v2159 = vmax.f32 %v1093, %v2109
  %v2160 = vmax.f32 %v1094, %v2110
  %v2161 = vmax.f32 %v1095, %v2111
  %v2162 = vmax.f32 %v1096, %v2112
  %v2163 = vmax.f32 %v1097, %v2113
  %v2164 = vmax.f32 %v1098, %v2114
  %v2165 = vmax.f32 %v1099, %v2115
  %v2166 = vmax.f32 %v1100, %v2116
  %v2167 = vmax.f32 %v1101, %v2117
  %v2168 = vmax.f32 %v1102, %v2118
  %v2169 = vmax.f32 %v1103, %v2119
  %v2170 = vmax.f32 %v1104, %v2120
  %v2171 = vmax.f32 %v1105, %v2121
  %v2172 = vmax.f32 %v1106, %v2122
  %v2173 = vmax.f32 %v1107, %v2123
  %v2174 = vmax.f32 %v1108, %v2124
  %v2175 = vmax.f32 %v1109, %v2125
  %v2176 = vmax.f32 %v1110, %v2126
  %2177 = vst [vmem:[%s6] sm:$0xff] %v2127
  %2178 = vst [vmem:[%s6 + $0x8] sm:$0xff] %v2128
  %2179 = vst [vmem:[%s6 + $0x10] sm:$0xff] %v2129
  %2180 = vst [vmem:[%s6 + $0x18] sm:$0xff] %v2130
  %2181 = vst [vmem:[%s6 + $0x20] sm:$0xff] %v2131
  %2182 = vst [vmem:[%s6 + $0x28] sm:$0xff] %v2132
  %2183 = vst [vmem:[%s6 + $0x30] sm:$0xff] %v2133
  %2184 = vst [vmem:[%s6 + $0x38] sm:$0xff] %v2134
  %2185 = vst [vmem:[%s6 + $0x40] sm:$0xff] %v2135
  %2186 = vst [vmem:[%s6 + $0x48] sm:$0xff] %v2136
  %2187 = vst [vmem:[%s6 + $0x50] sm:$0xff] %v2137
  %2188 = vst [vmem:[%s6 + $0x58] sm:$0xff] %v2138
  %2189 = vst [vmem:[%s6 + $0x60] sm:$0xff] %v2139
  %2190 = vst [vmem:[%s6 + $0x68] sm:$0xff] %v2140
  %2191 = vst [vmem:[%s6 + $0x70] sm:$0xff] %v2141
  %2192 = vst [vmem:[%s6 + $0x78] sm:$0xff] %v2142
  %2193 = vst [vmem:[%s6 + $0x80] sm:$0xff] %v2143
  %2194 = vst [vmem:[%s6 + $0x88] sm:$0xff] %v2144
  %2195 = vst [vmem:[%s6 + $0x90] sm:$0xff] %v2145
  %2196 = vst [vmem:[%s6 + $0x98] sm:$0xff] %v2146
  %2197 = vst [vmem:[%s6 + $0xa0] sm:$0xff] %v2147
  %2198 = vst [vmem:[%s6 + $0xa8] sm:$0xff] %v2148
  %2199 = vst [vmem:[%s6 + $0xb0] sm:$0xff] %v2149
  %2200 = vst [vmem:[%s6 + $0xb8] sm:$0xff] %v2150
  %2201 = vst [vmem:[%s6 + $0xc0] sm:$0xff] %v2151
  %2202 = vst [vmem:[%s6 + $0xc8] sm:$0xff] %v2152
  %2203 = vst [vmem:[%s6 + $0xd0] sm:$0xff] %v2153
  %2204 = vst [vmem:[%s6 + $0xd8] sm:$0xff] %v2154
  %2205 = vst [vmem:[%s6 + $0xe0] sm:$0xff] %v2155
  %2206 = vst [vmem:[%s6 + $0xe8] sm:$0xff] %v2156
  %2207 = vst [vmem:[%s6 + $0xf0] sm:$0xff] %v2157
  %2208 = vst [vmem:[%s6 + $0xf8] sm:$0xff] %v2158
  %2209 = vst [vmem:[%s6 + $0x100] sm:$0xff] %v2159
  %2210 = vst [vmem:[%s6 + $0x108] sm:$0xff] %v2160
  %2211 = vst [vmem:[%s6 + $0x110] sm:$0xff] %v2161
  %2212 = vst [vmem:[%s6 + $0x118] sm:$0xff] %v2162
  %2213 = vst [vmem:[%s6 + $0x120] sm:$0xff] %v2163
  %2214 = vst [vmem:[%s6 + $0x128] sm:$0xff] %v2164
  %2215 = vst [vmem:[%s6 + $0x130] sm:$0xff] %v2165
  %2216 = vst [vmem:[%s6 + $0x138] sm:$0xff] %v2166
  %2217 = vst [vmem:[%s6 + $0x140] sm:$0xff] %v2167
  %2218 = vst [vmem:[%s6 + $0x148] sm:$0xff] %v2168
  %2219 = vst [vmem:[%s6 + $0x150] sm:$0xff] %v2169
  %2220 = vst [vmem:[%s6 + $0x158] sm:$0xff] %v2170
  %2221 = vst [vmem:[%s6 + $0x160] sm:$0xff] %v2171
  %2222 = vst [vmem:[%s6 + $0x168] sm:$0xff] %v2172
  %2223 = vst [vmem:[%s6 + $0x170] sm:$0xff] %v2173
  %2224 = vst [vmem:[%s6 + $0x178] sm:$0xff] %v2174
  %2225 = vst [vmem:[%s6 + $0x180] sm:$0xff] %v2175
  %2226 = vst [vmem:[%s6 + $0x188] sm:$0xff] %v2176
  // Predicated region
  $region26: #{net_forward.3} parent=0 // pred_check
    _
  $region27: #{net_forward.3} parent=0 // pred_check_branch
    %2228 = sbr.rel (0) target = $region29
  $region28: #{net_forward.3} parent=0 // pred_region
    _
  $region29: #{net_forward.3} parent=0 // pred_fallthru
    _
  // Predicated region
  $region30: #{net_forward.3} parent=0 // pred_check
    _
  $region31: #{net_forward.3} parent=0 // pred_check_branch
    %2230 = sbr.rel (0) target = $region33
  $region32: #{net_forward.3} parent=0 // pred_region
    _
  $region33: #{net_forward.3} parent=0 // pred_fallthru
    _

// kernel: net_forward.4
$region0: #{net_forward.4}
  #allocation0 [shape = 'u32[]', space=smem, size = 0x4, offset = 0x4, fixed_abs, tag = 'smem constant byte address 0x4 - core index']
  #allocation1 [shape = 'u32[144,128]{1,0:T(1,128)}', space=vmem, size = 0x12000, scoped, tag = 'internal scratch']
  %s0 = inlined_call_operand.vmem [shape: bf16[64,256], index: 0, kind: input, shape index: {}]
  %s1 = inlined_call_operand.vmem [shape: bf16[64,256], index: 1, kind: input, shape index: {}]
  %s2 = inlined_call_operand.vmem [shape: bf16[64,256], index: 2, kind: input, shape index: {}]
  %s3 = inlined_call_operand.vmem [shape: bf16[64,256], index: 3, kind: input, shape index: {}]
  %s4 = inlined_call_operand.vmem [shape: bf16[256,128], index: 4, kind: input, shape index: {}]
  %s5 = inlined_call_operand.vmem [shape: f32[1,128], index: 5, kind: input, shape index: {}]
  %s6 = inlined_call_operand.vmem [shape: f32[64,128], index: 6, kind: output, shape index: {}]
  %s7 = sld [smem:[#allocation0]]
  $region34: #{net_forward.4} parent=0
    _
  %s9 = ssub.s32 1, %s7
  %s10 = scalar_select 0, %s9, %s7
  // Predicated region
  $region2: #{net_forward.4} parent=0 // pred_check
    _
  $region3: #{net_forward.4} parent=0 // pred_check_branch
    %12 = sbr.rel (0) target = $region5
  $region4: #{net_forward.4} parent=0 // pred_region
    _
  $region5: #{net_forward.4} parent=0 // pred_fallthru
    _
  // Predicated region
  $region6: #{net_forward.4} parent=0 // pred_check
    _
  $region7: #{net_forward.4} parent=0 // pred_check_branch
    %14 = sbr.rel (0) target = $region9
  $region8: #{net_forward.4} parent=0 // pred_region
    _
  $region9: #{net_forward.4} parent=0 // pred_fallthru
    _
  // Predicated region
  $region10: #{net_forward.4} parent=0 // pred_check
    _
  $region11: #{net_forward.4} parent=0 // pred_check_branch
    %16 = sbr.rel (0) target = $region13
  $region12: #{net_forward.4} parent=0 // pred_region
    _
  $region13: #{net_forward.4} parent=0 // pred_fallthru
    _
  // Predicated region
  $region14: #{net_forward.4} parent=0 // pred_check
    _
  $region15: #{net_forward.4} parent=0 // pred_check_branch
    %18 = sbr.rel (0) target = $region17
  $region16: #{net_forward.4} parent=0 // pred_region
    _
  $region17: #{net_forward.4} parent=0 // pred_fallthru
    _
  // Predicated region
  $region18: #{net_forward.4} parent=0 // pred_check
    _
  $region19: #{net_forward.4} parent=0 // pred_check_branch
    %20 = sbr.rel (0) target = $region21
  $region20: #{net_forward.4} parent=0 // pred_region
    _
  $region21: #{net_forward.4} parent=0 // pred_fallthru
    _
  // Predicated region
  $region22: #{net_forward.4} parent=0 // pred_check
    _
  $region23: #{net_forward.4} parent=0 // pred_check_branch
    %22 = sbr.rel (0) target = $region25
  $region24: #{net_forward.4} parent=0 // pred_region
    _
  $region25: #{net_forward.4} parent=0 // pred_fallthru
    _
  %v24 = vld [vmem:[%s4] sm:$0xf]
  %v25 = vld [vmem:[%s4 + $0x4] sm:$0xf]
  %v26 = vld [vmem:[%s4 + $0x8] sm:$0xf]
  %v27 = vld [vmem:[%s4 + $0xc] sm:$0xf]
  %v28 = vld [vmem:[%s4 + $0x10] sm:$0xf]
  %v29 = vld [vmem:[%s4 + $0x14] sm:$0xf]
  %v30 = vld [vmem:[%s4 + $0x18] sm:$0xf]
  %v31 = vld [vmem:[%s4 + $0x1c] sm:$0xf]
  %v32 = vld [vmem:[%s4 + $0x20] sm:$0xf]
  %v33 = vld [vmem:[%s4 + $0x24] sm:$0xf]
  %v34 = vld [vmem:[%s4 + $0x28] sm:$0xf]
  %v35 = vld [vmem:[%s4 + $0x2c] sm:$0xf]
  %v36 = vld [vmem:[%s4 + $0x30] sm:$0xf]
  %v37 = vld [vmem:[%s4 + $0x34] sm:$0xf]
  %v38 = vld [vmem:[%s4 + $0x38] sm:$0xf]
  %v39 = vld [vmem:[%s4 + $0x3c] sm:$0xf]
  %v40 = vld [vmem:[%s4 + $0x40] sm:$0xf]
  %v41 = vld [vmem:[%s4 + $0x44] sm:$0xf]
  %v42 = vld [vmem:[%s4 + $0x48] sm:$0xf]
  %v43 = vld [vmem:[%s4 + $0x4c] sm:$0xf]
  %v44 = vld [vmem:[%s4 + $0x50] sm:$0xf]
  %v45 = vld [vmem:[%s4 + $0x54] sm:$0xf]
  %v46 = vld [vmem:[%s4 + $0x58] sm:$0xf]
  %v47 = vld [vmem:[%s4 + $0x5c] sm:$0xf]
  %v48 = vld [vmem:[%s4 + $0x60] sm:$0xf]
  %v49 = vld [vmem:[%s4 + $0x64] sm:$0xf]
  %v50 = vld [vmem:[%s4 + $0x68] sm:$0xf]
  %v51 = vld [vmem:[%s4 + $0x6c] sm:$0xf]
  %v52 = vld [vmem:[%s4 + $0x70] sm:$0xf]
  %v53 = vld [vmem:[%s4 + $0x74] sm:$0xf]
  %v54 = vld [vmem:[%s4 + $0x78] sm:$0xf]
  %v55 = vld [vmem:[%s4 + $0x7c] sm:$0xf]
  %v56 = vld [vmem:[%s5] sm:$0x1]
  %v57 = vld [vmem:[%s0] sm:$0xff]
  %v58 = vld [vmem:[%s0 + $0x8] sm:$0xff]
  %v59 = vld [vmem:[%s0 + $0x10] sm:$0xff]
  %v60 = vld [vmem:[%s0 + $0x18] sm:$0xff]
  %v61 = vld [vmem:[%s0 + $0x20] sm:$0xff]
  %v62 = vld [vmem:[%s0 + $0x28] sm:$0xff]
  %v63 = vld [vmem:[%s0 + $0x30] sm:$0xff]
  %v64 = vld [vmem:[%s0 + $0x38] sm:$0xff]
  %v66 = vlaneseq
  %v67 = vshrl.u32 %v66, 7
  %v68 = vsub.s32 0, %v67
  %v69 = vrot.slane %v56, %v68
  %v79 = vunpack.c.l.b16 %v57
  %v80 = vunpack.c.h.b16 %v57
  %v81 = vunpack.c.l.b16 %v58
  %v82 = vunpack.c.h.b16 %v58
  %v83 = vunpack.c.l.b16 %v59
  %v84 = vunpack.c.h.b16 %v59
  %v85 = vunpack.c.l.b16 %v60
  %v86 = vunpack.c.h.b16 %v60
  %v87 = vunpack.c.l.b16 %v61
  %v88 = vunpack.c.h.b16 %v61
  %v89 = vunpack.c.l.b16 %v62
  %v90 = vunpack.c.h.b16 %v62
  %v91 = vunpack.c.l.b16 %v63
  %v92 = vunpack.c.h.b16 %v63
  %v93 = vunpack.c.l.b16 %v64
  %v94 = vunpack.c.h.b16 %v64
  %v95 = vpack.c.b16 %v81, %v79
  %v96 = vpack.c.b16 %v82, %v80
  %v97 = vpack.c.b16 %v85, %v83
  %v98 = vpack.c.b16 %v86, %v84
  %v99 = vpack.c.b16 %v89, %v87
  %v100 = vpack.c.b16 %v90, %v88
  %v101 = vpack.c.b16 %v93, %v91
  %v102 = vpack.c.b16 %v94, %v92
  %v143 = vunpack.c.l.b16 %v24
  %v144 = vunpack.c.l.b16 %v25
  %v145 = vunpack.c.l.b16 %v26
  %v146 = vunpack.c.l.b16 %v27
  %v147 = vunpack.c.l.b16 %v28
  %v148 = vunpack.c.l.b16 %v29
  %v149 = vunpack.c.l.b16 %v30
  %v150 = vunpack.c.l.b16 %v31
  %v151 = vunpack.c.l.b16 %v32
  %v152 = vunpack.c.l.b16 %v33
  %v153 = vunpack.c.l.b16 %v34
  %v154 = vunpack.c.l.b16 %v35
  %v155 = vunpack.c.l.b16 %v36
  %v156 = vunpack.c.l.b16 %v37
  %v157 = vunpack.c.l.b16 %v38
  %v158 = vunpack.c.l.b16 %v39
  %v159 = vunpack.c.l.b16 %v40
  %v160 = vunpack.c.l.b16 %v41
  %v161 = vunpack.c.l.b16 %v42
  %v162 = vunpack.c.l.b16 %v43
  %v163 = vunpack.c.l.b16 %v44
  %v164 = vunpack.c.l.b16 %v45
  %v165 = vunpack.c.l.b16 %v46
  %v166 = vunpack.c.l.b16 %v47
  %v167 = vunpack.c.l.b16 %v48
  %v168 = vunpack.c.l.b16 %v49
  %v169 = vunpack.c.l.b16 %v50
  %v170 = vunpack.c.l.b16 %v51
  %v171 = vunpack.c.l.b16 %v52
  %v172 = vunpack.c.l.b16 %v53
  %v173 = vunpack.c.l.b16 %v54
  %v174 = vunpack.c.l.b16 %v55
  %v175 = vpack.c.b16 %v144, %v143
  %v176 = vpack.c.b16 %v146, %v145
  %v177 = vpack.c.b16 %v148, %v147
  %v178 = vpack.c.b16 %v150, %v149
  %v179 = vpack.c.b16 %v152, %v151
  %v180 = vpack.c.b16 %v154, %v153
  %v181 = vpack.c.b16 %v156, %v155
  %v182 = vpack.c.b16 %v158, %v157
  %v183 = vpack.c.b16 %v160, %v159
  %v184 = vpack.c.b16 %v162, %v161
  %v185 = vpack.c.b16 %v164, %v163
  %v186 = vpack.c.b16 %v166, %v165
  %v187 = vpack.c.b16 %v168, %v167
  %v188 = vpack.c.b16 %v170, %v169
  %v189 = vpack.c.b16 %v172, %v171
  %v190 = vpack.c.b16 %v174, %v173
  %207 = vmatprep.subr.bf16.mxu0 0
  %208 = vmatpush1.bf16.msra.mxu0 %v182
  %209 = vmatprep.subr.bf16.mxu0 0
  %210 = vmatpush1.bf16.msra.mxu0 %v181
  %211 = vmatprep.subr.bf16.mxu0 0
  %212 = vmatpush1.bf16.msra.mxu0 %v180
  %213 = vmatprep.subr.bf16.mxu0 0
  %214 = vmatpush1.bf16.msra.mxu0 %v179
  %215 = vmatprep.subr.bf16.mxu0 0
  %216 = vmatpush1.bf16.msra.mxu0 %v178
  %217 = vmatprep.subr.bf16.mxu0 0
  %218 = vmatpush1.bf16.msra.mxu0 %v177
  %219 = vmatprep.subr.bf16.mxu0 0
  %220 = vmatpush1.bf16.msra.mxu0 %v176
  %221 = vmatprep.subr.bf16.mxu0 0
  %222 = vmatpush1.bf16.msra.mxu0 %v175
  %223 = vmatprep.subr.bf16.mxu0 0
  %224 = vmatpush2.bf16.msra.mxu0 %v190
  %225 = vmatprep.subr.bf16.mxu0 0
  %226 = vmatpush2.bf16.msra.mxu0 %v189
  %227 = vmatprep.subr.bf16.mxu0 0
  %228 = vmatpush2.bf16.msra.mxu0 %v188
  %229 = vmatprep.subr.bf16.mxu0 0
  %230 = vmatpush2.bf16.msra.mxu0 %v187
  %231 = vmatprep.subr.bf16.mxu0 0
  %232 = vmatpush2.bf16.msra.mxu0 %v186
  %233 = vmatprep.subr.bf16.mxu0 0
  %234 = vmatpush2.bf16.msra.mxu0 %v185
  %235 = vmatprep.subr.bf16.mxu0 0
  %236 = vmatpush2.bf16.msra.mxu0 %v184
  %237 = vmatprep.subr.bf16.mxu0 0
  %238 = vmatpush2.bf16.msra.mxu0 %v183
  %239 = vmatprep.mubr.bf16.mxu0 %v96
  %240 = vmatmul.mubr.bf16.gmra.mxu0 %v95
  %v241 = vpop.f32.mrf.mxu0
  %v242 = vadd.f32 %v69, %v241
  %v243 = vpop.f32.mrf.mxu0
  %v244 = vpop.f32.mrf.mxu0
  %v245 = vadd.f32 %v69, %v244
  %v246 = vpop.f32.mrf.mxu0
  %247 = vmatprep.mubr.bf16.mxu0 %v98
  %248 = vmatmul.mubr.bf16.gmra.mxu0 %v97
  %v249 = vpop.f32.mrf.mxu0
  %v250 = vadd.f32 %v69, %v249
  %v251 = vpop.f32.mrf.mxu0
  %v252 = vpop.f32.mrf.mxu0
  %v253 = vadd.f32 %v69, %v252
  %v254 = vpop.f32.mrf.mxu0
  %255 = vmatprep.mubr.bf16.mxu0 %v100
  %256 = vmatmul.mubr.bf16.gmra.mxu0 %v99
  %v257 = vpop.f32.mrf.mxu0
  %v258 = vadd.f32 %v69, %v257
  %v259 = vpop.f32.mrf.mxu0
  %v260 = vpop.f32.mrf.mxu0
  %v261 = vadd.f32 %v69, %v260
  %v262 = vpop.f32.mrf.mxu0
  %263 = vmatprep.mubr.bf16.mxu0 %v102
  %264 = vmatmul.mubr.bf16.gmra.mxu0 %v101
  %v265 = vpop.f32.mrf.mxu0
  %v266 = vadd.f32 %v69, %v265
  %v267 = vpop.f32.mrf.mxu0
  %v268 = vpop.f32.mrf.mxu0
  %v269 = vadd.f32 %v69, %v268
  %v270 = vpop.f32.mrf.mxu0
  %271 = vdwg.mxu0
  %v272 = vmax.f32 %v242, 0.0
  %v273 = vmax.f32 %v245, 0.0
  %v274 = vmax.f32 %v250, 0.0
  %v275 = vmax.f32 %v253, 0.0
  %v276 = vmax.f32 %v258, 0.0
  %v277 = vmax.f32 %v261, 0.0
  %v278 = vmax.f32 %v266, 0.0
  %v279 = vmax.f32 %v269, 0.0
  %v280 = vld [vmem:[%s1] sm:$0xff]
  %v281 = vld [vmem:[%s1 + $0x8] sm:$0xff]
  %v282 = vld [vmem:[%s1 + $0x10] sm:$0xff]
  %v283 = vld [vmem:[%s1 + $0x18] sm:$0xff]
  %v284 = vld [vmem:[%s1 + $0x20] sm:$0xff]
  %v285 = vld [vmem:[%s1 + $0x28] sm:$0xff]
  %v286 = vld [vmem:[%s1 + $0x30] sm:$0xff]
  %v287 = vld [vmem:[%s1 + $0x38] sm:$0xff]
  %v296 = vunpack.c.l.b16 %v280
  %v297 = vunpack.c.h.b16 %v280
  %v298 = vunpack.c.l.b16 %v281
  %v299 = vunpack.c.h.b16 %v281
  %v300 = vunpack.c.l.b16 %v282
  %v301 = vunpack.c.h.b16 %v282
  %v302 = vunpack.c.l.b16 %v283
  %v303 = vunpack.c.h.b16 %v283
  %v304 = vunpack.c.l.b16 %v284
  %v305 = vunpack.c.h.b16 %v284
  %v306 = vunpack.c.l.b16 %v285
  %v307 = vunpack.c.h.b16 %v285
  %v308 = vunpack.c.l.b16 %v286
  %v309 = vunpack.c.h.b16 %v286
  %v310 = vunpack.c.l.b16 %v287
  %v311 = vunpack.c.h.b16 %v287
  %v312 = vpack.c.b16 %v298, %v296
  %v313 = vpack.c.b16 %v299, %v297
  %v314 = vpack.c.b16 %v302, %v300
  %v315 = vpack.c.b16 %v303, %v301
  %v316 = vpack.c.b16 %v306, %v304
  %v317 = vpack.c.b16 %v307, %v305
  %v318 = vpack.c.b16 %v310, %v308
  %v319 = vpack.c.b16 %v311, %v309
  %328 = vmatprep.subr.bf16.mxu0 0
  %329 = vmatpush1.bf16.msra.mxu0 %v182
  %330 = vmatprep.subr.bf16.mxu0 0
  %331 = vmatpush1.bf16.msra.mxu0 %v181
  %332 = vmatprep.subr.bf16.mxu0 0
  %333 = vmatpush1.bf16.msra.mxu0 %v180
  %334 = vmatprep.subr.bf16.mxu0 0
  %335 = vmatpush1.bf16.msra.mxu0 %v179
  %336 = vmatprep.subr.bf16.mxu0 0
  %337 = vmatpush1.bf16.msra.mxu0 %v178
  %338 = vmatprep.subr.bf16.mxu0 0
  %339 = vmatpush1.bf16.msra.mxu0 %v177
  %340 = vmatprep.subr.bf16.mxu0 0
  %341 = vmatpush1.bf16.msra.mxu0 %v176
  %342 = vmatprep.subr.bf16.mxu0 0
  %343 = vmatpush1.bf16.msra.mxu0 %v175
  %344 = vmatprep.subr.bf16.mxu0 0
  %345 = vmatpush2.bf16.msra.mxu0 %v190
  %346 = vmatprep.subr.bf16.mxu0 0
  %347 = vmatpush2.bf16.msra.mxu0 %v189
  %348 = vmatprep.subr.bf16.mxu0 0
  %349 = vmatpush2.bf16.msra.mxu0 %v188
  %350 = vmatprep.subr.bf16.mxu0 0
  %351 = vmatpush2.bf16.msra.mxu0 %v187
  %352 = vmatprep.subr.bf16.mxu0 0
  %353 = vmatpush2.bf16.msra.mxu0 %v186
  %354 = vmatprep.subr.bf16.mxu0 0
  %355 = vmatpush2.bf16.msra.mxu0 %v185
  %356 = vmatprep.subr.bf16.mxu0 0
  %357 = vmatpush2.bf16.msra.mxu0 %v184
  %358 = vmatprep.subr.bf16.mxu0 0
  %359 = vmatpush2.bf16.msra.mxu0 %v183
  %360 = vmatprep.mubr.bf16.mxu0 %v313
  %361 = vmatmul.mubr.bf16.gmra.mxu0 %v312
  %v362 = vpop.f32.mrf.mxu0
  %v363 = vadd.f32 %v69, %v362
  %v364 = vpop.f32.mrf.mxu0
  %v365 = vpop.f32.mrf.mxu0
  %v366 = vadd.f32 %v69, %v365
  %v367 = vpop.f32.mrf.mxu0
  %368 = vmatprep.mubr.bf16.mxu0 %v315
  %369 = vmatmul.mubr.bf16.gmra.mxu0 %v314
  %v370 = vpop.f32.mrf.mxu0
  %v371 = vadd.f32 %v69, %v370
  %v372 = vpop.f32.mrf.mxu0
  %v373 = vpop.f32.mrf.mxu0
  %v374 = vadd.f32 %v69, %v373
  %v375 = vpop.f32.mrf.mxu0
  %376 = vmatprep.mubr.bf16.mxu0 %v317
  %377 = vmatmul.mubr.bf16.gmra.mxu0 %v316
  %v378 = vpop.f32.mrf.mxu0
  %v379 = vadd.f32 %v69, %v378
  %v380 = vpop.f32.mrf.mxu0
  %v381 = vpop.f32.mrf.mxu0
  %v382 = vadd.f32 %v69, %v381
  %v383 = vpop.f32.mrf.mxu0
  %384 = vmatprep.mubr.bf16.mxu0 %v319
  %385 = vmatmul.mubr.bf16.gmra.mxu0 %v318
  %v386 = vpop.f32.mrf.mxu0
  %v387 = vadd.f32 %v69, %v386
  %v388 = vpop.f32.mrf.mxu0
  %v389 = vpop.f32.mrf.mxu0
  %v390 = vadd.f32 %v69, %v389
  %v391 = vpop.f32.mrf.mxu0
  %392 = vdwg.mxu0
  %v393 = vmax.f32 %v363, 0.0
  %v394 = vmax.f32 %v366, 0.0
  %v395 = vmax.f32 %v371, 0.0
  %v396 = vmax.f32 %v374, 0.0
  %v397 = vmax.f32 %v379, 0.0
  %v398 = vmax.f32 %v382, 0.0
  %v399 = vmax.f32 %v387, 0.0
  %v400 = vmax.f32 %v390, 0.0
  %v401 = vmax.f32 %v272, %v393
  %v402 = vmax.f32 %v273, %v394
  %v403 = vmax.f32 %v274, %v395
  %v404 = vmax.f32 %v275, %v396
  %v405 = vmax.f32 %v276, %v397
  %v406 = vmax.f32 %v277, %v398
  %v407 = vmax.f32 %v278, %v399
  %v408 = vmax.f32 %v279, %v400
  %v409 = vld [vmem:[%s2] sm:$0xff]
  %v410 = vld [vmem:[%s2 + $0x8] sm:$0xff]
  %v411 = vld [vmem:[%s2 + $0x10] sm:$0xff]
  %v412 = vld [vmem:[%s2 + $0x18] sm:$0xff]
  %v413 = vld [vmem:[%s2 + $0x20] sm:$0xff]
  %v414 = vld [vmem:[%s2 + $0x28] sm:$0xff]
  %v415 = vld [vmem:[%s2 + $0x30] sm:$0xff]
  %v416 = vld [vmem:[%s2 + $0x38] sm:$0xff]
  %v425 = vunpack.c.l.b16 %v409
  %v426 = vunpack.c.h.b16 %v409
  %v427 = vunpack.c.l.b16 %v410
  %v428 = vunpack.c.h.b16 %v410
  %v429 = vunpack.c.l.b16 %v411
  %v430 = vunpack.c.h.b16 %v411
  %v431 = vunpack.c.l.b16 %v412
  %v432 = vunpack.c.h.b16 %v412
  %v433 = vunpack.c.l.b16 %v413
  %v434 = vunpack.c.h.b16 %v413
  %v435 = vunpack.c.l.b16 %v414
  %v436 = vunpack.c.h.b16 %v414
  %v437 = vunpack.c.l.b16 %v415
  %v438 = vunpack.c.h.b16 %v415
  %v439 = vunpack.c.l.b16 %v416
  %v440 = vunpack.c.h.b16 %v416
  %v441 = vpack.c.b16 %v427, %v425
  %v442 = vpack.c.b16 %v428, %v426
  %v443 = vpack.c.b16 %v431, %v429
  %v444 = vpack.c.b16 %v432, %v430
  %v445 = vpack.c.b16 %v435, %v433
  %v446 = vpack.c.b16 %v436, %v434
  %v447 = vpack.c.b16 %v439, %v437
  %v448 = vpack.c.b16 %v440, %v438
  %457 = vmatprep.subr.bf16.mxu0 0
  %458 = vmatpush1.bf16.msra.mxu0 %v182
  %459 = vmatprep.subr.bf16.mxu0 0
  %460 = vmatpush1.bf16.msra.mxu0 %v181
  %461 = vmatprep.subr.bf16.mxu0 0
  %462 = vmatpush1.bf16.msra.mxu0 %v180
  %463 = vmatprep.subr.bf16.mxu0 0
  %464 = vmatpush1.bf16.msra.mxu0 %v179
  %465 = vmatprep.subr.bf16.mxu0 0
  %466 = vmatpush1.bf16.msra.mxu0 %v178
  %467 = vmatprep.subr.bf16.mxu0 0
  %468 = vmatpush1.bf16.msra.mxu0 %v177
  %469 = vmatprep.subr.bf16.mxu0 0
  %470 = vmatpush1.bf16.msra.mxu0 %v176
  %471 = vmatprep.subr.bf16.mxu0 0
  %472 = vmatpush1.bf16.msra.mxu0 %v175
  %473 = vmatprep.subr.bf16.mxu0 0
  %474 = vmatpush2.bf16.msra.mxu0 %v190
  %475 = vmatprep.subr.bf16.mxu0 0
  %476 = vmatpush2.bf16.msra.mxu0 %v189
  %477 = vmatprep.subr.bf16.mxu0 0
  %478 = vmatpush2.bf16.msra.mxu0 %v188
  %479 = vmatprep.subr.bf16.mxu0 0
  %480 = vmatpush2.bf16.msra.mxu0 %v187
  %481 = vmatprep.subr.bf16.mxu0 0
  %482 = vmatpush2.bf16.msra.mxu0 %v186
  %483 = vmatprep.subr.bf16.mxu0 0
  %484 = vmatpush2.bf16.msra.mxu0 %v185
  %485 = vmatprep.subr.bf16.mxu0 0
  %486 = vmatpush2.bf16.msra.mxu0 %v184
  %487 = vmatprep.subr.bf16.mxu0 0
  %488 = vmatpush2.bf16.msra.mxu0 %v183
  %489 = vmatprep.mubr.bf16.mxu0 %v442
  %490 = vmatmul.mubr.bf16.gmra.mxu0 %v441
  %v491 = vpop.f32.mrf.mxu0
  %v492 = vadd.f32 %v69, %v491
  %v493 = vpop.f32.mrf.mxu0
  %v494 = vpop.f32.mrf.mxu0
  %v495 = vadd.f32 %v69, %v494
  %v496 = vpop.f32.mrf.mxu0
  %497 = vmatprep.mubr.bf16.mxu0 %v444
  %498 = vmatmul.mubr.bf16.gmra.mxu0 %v443
  %v499 = vpop.f32.mrf.mxu0
  %v500 = vadd.f32 %v69, %v499
  %v501 = vpop.f32.mrf.mxu0
  %v502 = vpop.f32.mrf.mxu0
  %v503 = vadd.f32 %v69, %v502
  %v504 = vpop.f32.mrf.mxu0
  %505 = vmatprep.mubr.bf16.mxu0 %v446
  %506 = vmatmul.mubr.bf16.gmra.mxu0 %v445
  %v507 = vpop.f32.mrf.mxu0
  %v508 = vadd.f32 %v69, %v507
  %v509 = vpop.f32.mrf.mxu0
  %v510 = vpop.f32.mrf.mxu0
  %v511 = vadd.f32 %v69, %v510
  %v512 = vpop.f32.mrf.mxu0
  %513 = vmatprep.mubr.bf16.mxu0 %v448
  %514 = vmatmul.mubr.bf16.gmra.mxu0 %v447
  %v515 = vpop.f32.mrf.mxu0
  %v516 = vadd.f32 %v69, %v515
  %v517 = vpop.f32.mrf.mxu0
  %v518 = vpop.f32.mrf.mxu0
  %v519 = vadd.f32 %v69, %v518
  %v520 = vpop.f32.mrf.mxu0
  %521 = vdwg.mxu0
  %v522 = vmax.f32 %v492, 0.0
  %v523 = vmax.f32 %v495, 0.0
  %v524 = vmax.f32 %v500, 0.0
  %v525 = vmax.f32 %v503, 0.0
  %v526 = vmax.f32 %v508, 0.0
  %v527 = vmax.f32 %v511, 0.0
  %v528 = vmax.f32 %v516, 0.0
  %v529 = vmax.f32 %v519, 0.0
  %v530 = vld [vmem:[%s3] sm:$0xff]
  %v531 = vld [vmem:[%s3 + $0x8] sm:$0xff]
  %v532 = vld [vmem:[%s3 + $0x10] sm:$0xff]
  %v533 = vld [vmem:[%s3 + $0x18] sm:$0xff]
  %v534 = vld [vmem:[%s3 + $0x20] sm:$0xff]
  %v535 = vld [vmem:[%s3 + $0x28] sm:$0xff]
  %v536 = vld [vmem:[%s3 + $0x30] sm:$0xff]
  %v537 = vld [vmem:[%s3 + $0x38] sm:$0xff]
  %v546 = vunpack.c.l.b16 %v530
  %v547 = vunpack.c.h.b16 %v530
  %v548 = vunpack.c.l.b16 %v531
  %v549 = vunpack.c.h.b16 %v531
  %v550 = vunpack.c.l.b16 %v532
  %v551 = vunpack.c.h.b16 %v532
  %v552 = vunpack.c.l.b16 %v533
  %v553 = vunpack.c.h.b16 %v533
  %v554 = vunpack.c.l.b16 %v534
  %v555 = vunpack.c.h.b16 %v534
  %v556 = vunpack.c.l.b16 %v535
  %v557 = vunpack.c.h.b16 %v535
  %v558 = vunpack.c.l.b16 %v536
  %v559 = vunpack.c.h.b16 %v536
  %v560 = vunpack.c.l.b16 %v537
  %v561 = vunpack.c.h.b16 %v537
  %v562 = vpack.c.b16 %v548, %v546
  %v563 = vpack.c.b16 %v549, %v547
  %v564 = vpack.c.b16 %v552, %v550
  %v565 = vpack.c.b16 %v553, %v551
  %v566 = vpack.c.b16 %v556, %v554
  %v567 = vpack.c.b16 %v557, %v555
  %v568 = vpack.c.b16 %v560, %v558
  %v569 = vpack.c.b16 %v561, %v559
  %578 = vmatprep.subr.bf16.mxu0 0
  %579 = vmatpush1.bf16.msra.mxu0 %v182
  %580 = vmatprep.subr.bf16.mxu0 0
  %581 = vmatpush1.bf16.msra.mxu0 %v181
  %582 = vmatprep.subr.bf16.mxu0 0
  %583 = vmatpush1.bf16.msra.mxu0 %v180
  %584 = vmatprep.subr.bf16.mxu0 0
  %585 = vmatpush1.bf16.msra.mxu0 %v179
  %586 = vmatprep.subr.bf16.mxu0 0
  %587 = vmatpush1.bf16.msra.mxu0 %v178
  %588 = vmatprep.subr.bf16.mxu0 0
  %589 = vmatpush1.bf16.msra.mxu0 %v177
  %590 = vmatprep.subr.bf16.mxu0 0
  %591 = vmatpush1.bf16.msra.mxu0 %v176
  %592 = vmatprep.subr.bf16.mxu0 0
  %593 = vmatpush1.bf16.msra.mxu0 %v175
  %594 = vmatprep.subr.bf16.mxu0 0
  %595 = vmatpush2.bf16.msra.mxu0 %v190
  %596 = vmatprep.subr.bf16.mxu0 0
  %597 = vmatpush2.bf16.msra.mxu0 %v189
  %598 = vmatprep.subr.bf16.mxu0 0
  %599 = vmatpush2.bf16.msra.mxu0 %v188
  %600 = vmatprep.subr.bf16.mxu0 0
  %601 = vmatpush2.bf16.msra.mxu0 %v187
  %602 = vmatprep.subr.bf16.mxu0 0
  %603 = vmatpush2.bf16.msra.mxu0 %v186
  %604 = vmatprep.subr.bf16.mxu0 0
  %605 = vmatpush2.bf16.msra.mxu0 %v185
  %606 = vmatprep.subr.bf16.mxu0 0
  %607 = vmatpush2.bf16.msra.mxu0 %v184
  %608 = vmatprep.subr.bf16.mxu0 0
  %609 = vmatpush2.bf16.msra.mxu0 %v183
  %610 = vmatprep.mubr.bf16.mxu0 %v563
  %611 = vmatmul.mubr.bf16.gmra.mxu0 %v562
  %v612 = vpop.f32.mrf.mxu0
  %v613 = vadd.f32 %v69, %v612
  %v614 = vpop.f32.mrf.mxu0
  %v615 = vpop.f32.mrf.mxu0
  %v616 = vadd.f32 %v69, %v615
  %v617 = vpop.f32.mrf.mxu0
  %618 = vmatprep.mubr.bf16.mxu0 %v565
  %619 = vmatmul.mubr.bf16.gmra.mxu0 %v564
  %v620 = vpop.f32.mrf.mxu0
  %v621 = vadd.f32 %v69, %v620
  %v622 = vpop.f32.mrf.mxu0
  %v623 = vpop.f32.mrf.mxu0
  %v624 = vadd.f32 %v69, %v623
  %v625 = vpop.f32.mrf.mxu0
  %626 = vmatprep.mubr.bf16.mxu0 %v567
  %627 = vmatmul.mubr.bf16.gmra.mxu0 %v566
  %v628 = vpop.f32.mrf.mxu0
  %v629 = vadd.f32 %v69, %v628
  %v630 = vpop.f32.mrf.mxu0
  %v631 = vpop.f32.mrf.mxu0
  %v632 = vadd.f32 %v69, %v631
  %v633 = vpop.f32.mrf.mxu0
  %634 = vmatprep.mubr.bf16.mxu0 %v569
  %635 = vmatmul.mubr.bf16.gmra.mxu0 %v568
  %v636 = vpop.f32.mrf.mxu0
  %v637 = vadd.f32 %v69, %v636
  %v638 = vpop.f32.mrf.mxu0
  %v639 = vpop.f32.mrf.mxu0
  %v640 = vadd.f32 %v69, %v639
  %v641 = vpop.f32.mrf.mxu0
  %642 = vdwg.mxu0
  %v643 = vmax.f32 %v613, 0.0
  %v644 = vmax.f32 %v616, 0.0
  %v645 = vmax.f32 %v621, 0.0
  %v646 = vmax.f32 %v624, 0.0
  %v647 = vmax.f32 %v629, 0.0
  %v648 = vmax.f32 %v632, 0.0
  %v649 = vmax.f32 %v637, 0.0
  %v650 = vmax.f32 %v640, 0.0
  %v651 = vmax.f32 %v522, %v643
  %v652 = vmax.f32 %v523, %v644
  %v653 = vmax.f32 %v524, %v645
  %v654 = vmax.f32 %v525, %v646
  %v655 = vmax.f32 %v526, %v647
  %v656 = vmax.f32 %v527, %v648
  %v657 = vmax.f32 %v528, %v649
  %v658 = vmax.f32 %v529, %v650
  %v659 = vmax.f32 %v401, %v651
  %v660 = vmax.f32 %v402, %v652
  %v661 = vmax.f32 %v403, %v653
  %v662 = vmax.f32 %v404, %v654
  %v663 = vmax.f32 %v405, %v655
  %v664 = vmax.f32 %v406, %v656
  %v665 = vmax.f32 %v407, %v657
  %v666 = vmax.f32 %v408, %v658
  %667 = vst [vmem:[%s6] sm:$0xff] %v659
  %668 = vst [vmem:[%s6 + $0x8] sm:$0xff] %v660
  %669 = vst [vmem:[%s6 + $0x10] sm:$0xff] %v661
  %670 = vst [vmem:[%s6 + $0x18] sm:$0xff] %v662
  %671 = vst [vmem:[%s6 + $0x20] sm:$0xff] %v663
  %672 = vst [vmem:[%s6 + $0x28] sm:$0xff] %v664
  %673 = vst [vmem:[%s6 + $0x30] sm:$0xff] %v665
  %674 = vst [vmem:[%s6 + $0x38] sm:$0xff] %v666
  // Predicated region
  $region26: #{net_forward.4} parent=0 // pred_check
    _
  $region27: #{net_forward.4} parent=0 // pred_check_branch
    %676 = sbr.rel (0) target = $region29
  $region28: #{net_forward.4} parent=0 // pred_region
    _
  $region29: #{net_forward.4} parent=0 // pred_fallthru
    _
  // Predicated region
  $region30: #{net_forward.4} parent=0 // pred_check
    _
  $region31: #{net_forward.4} parent=0 // pred_check_branch
    %678 = sbr.rel (0) target = $region33
  $region32: #{net_forward.4} parent=0 // pred_region
    _
  $region33: #{net_forward.4} parent=0 // pred_fallthru
    _

// kernel: net_forward.5
$region0: #{net_forward.5}
  #allocation0 [shape = 'u32[]', space=smem, size = 0x4, offset = 0x4, fixed_abs, tag = 'smem constant byte address 0x4 - core index']
  #allocation1 [shape = 'u32[144,128]{1,0:T(1,128)}', space=vmem, size = 0x12000, scoped, tag = 'internal scratch']
  %s0 = inlined_call_operand.vmem [shape: bf16[16,512], index: 0, kind: input, shape index: {}]
  %s1 = inlined_call_operand.vmem [shape: bf16[512,128], index: 1, kind: input, shape index: {}]
  %s2 = inlined_call_operand.vmem [shape: f32[1,128], index: 2, kind: input, shape index: {}]
  %s3 = inlined_call_operand.vmem [shape: bf16[128,128], index: 3, kind: input, shape index: {}]
  %s4 = inlined_call_operand.vmem [shape: f32[1,128], index: 4, kind: input, shape index: {}]
  %s5 = inlined_call_operand.vmem [shape: bf16[128,128], index: 5, kind: input, shape index: {}]
  %s6 = inlined_call_operand.vmem [shape: f32[1,128], index: 6, kind: input, shape index: {}]
  %s7 = inlined_call_operand.vmem [shape: f32[16,128], index: 7, kind: output, shape index: {}]
  %s8 = sld [smem:[#allocation0]]
  $region38: #{net_forward.5} parent=0
    _
  %s10 = ssub.s32 1, %s8
  %s11 = scalar_select 0, %s10, %s8
  // Predicated region
  $region2: #{net_forward.5} parent=0 // pred_check
    _
  $region3: #{net_forward.5} parent=0 // pred_check_branch
    %13 = sbr.rel (0) target = $region5
  $region4: #{net_forward.5} parent=0 // pred_region
    _
  $region5: #{net_forward.5} parent=0 // pred_fallthru
    _
  // Predicated region
  $region6: #{net_forward.5} parent=0 // pred_check
    _
  $region7: #{net_forward.5} parent=0 // pred_check_branch
    %15 = sbr.rel (0) target = $region9
  $region8: #{net_forward.5} parent=0 // pred_region
    _
  $region9: #{net_forward.5} parent=0 // pred_fallthru
    _
  // Predicated region
  $region10: #{net_forward.5} parent=0 // pred_check
    _
  $region11: #{net_forward.5} parent=0 // pred_check_branch
    %17 = sbr.rel (0) target = $region13
  $region12: #{net_forward.5} parent=0 // pred_region
    _
  $region13: #{net_forward.5} parent=0 // pred_fallthru
    _
  // Predicated region
  $region14: #{net_forward.5} parent=0 // pred_check
    _
  $region15: #{net_forward.5} parent=0 // pred_check_branch
    %19 = sbr.rel (0) target = $region17
  $region16: #{net_forward.5} parent=0 // pred_region
    _
  $region17: #{net_forward.5} parent=0 // pred_fallthru
    _
  // Predicated region
  $region18: #{net_forward.5} parent=0 // pred_check
    _
  $region19: #{net_forward.5} parent=0 // pred_check_branch
    %21 = sbr.rel (0) target = $region21
  $region20: #{net_forward.5} parent=0 // pred_region
    _
  $region21: #{net_forward.5} parent=0 // pred_fallthru
    _
  // Predicated region
  $region22: #{net_forward.5} parent=0 // pred_check
    _
  $region23: #{net_forward.5} parent=0 // pred_check_branch
    %23 = sbr.rel (0) target = $region25
  $region24: #{net_forward.5} parent=0 // pred_region
    _
  $region25: #{net_forward.5} parent=0 // pred_fallthru
    _
  // Predicated region
  $region26: #{net_forward.5} parent=0 // pred_check
    _
  $region27: #{net_forward.5} parent=0 // pred_check_branch
    %25 = sbr.rel (0) target = $region29
  $region28: #{net_forward.5} parent=0 // pred_region
    _
  $region29: #{net_forward.5} parent=0 // pred_fallthru
    _
  %v27 = vld [vmem:[%s0] sm:$0xff]
  %v28 = vld [vmem:[%s0 + $0x8] sm:$0xff]
  %v29 = vld [vmem:[%s0 + $0x10] sm:$0xff]
  %v30 = vld [vmem:[%s0 + $0x18] sm:$0xff]
  %v31 = vld [vmem:[%s1] sm:$0xf]
  %v32 = vld [vmem:[%s1 + $0x4] sm:$0xf]
  %v33 = vld [vmem:[%s1 + $0x8] sm:$0xf]
  %v34 = vld [vmem:[%s1 + $0xc] sm:$0xf]
  %v35 = vld [vmem:[%s1 + $0x10] sm:$0xf]
  %v36 = vld [vmem:[%s1 + $0x14] sm:$0xf]
  %v37 = vld [vmem:[%s1 + $0x18] sm:$0xf]
  %v38 = vld [vmem:[%s1 + $0x1c] sm:$0xf]
  %v39 = vld [vmem:[%s1 + $0x20] sm:$0xf]
  %v40 = vld [vmem:[%s1 + $0x24] sm:$0xf]
  %v41 = vld [vmem:[%s1 + $0x28] sm:$0xf]
  %v42 = vld [vmem:[%s1 + $0x2c] sm:$0xf]
  %v43 = vld [vmem:[%s1 + $0x30] sm:$0xf]
  %v44 = vld [vmem:[%s1 + $0x34] sm:$0xf]
  %v45 = vld [vmem:[%s1 + $0x38] sm:$0xf]
  %v46 = vld [vmem:[%s1 + $0x3c] sm:$0xf]
  %v47 = vld [vmem:[%s1 + $0x40] sm:$0xf]
  %v48 = vld [vmem:[%s1 + $0x44] sm:$0xf]
  %v49 = vld [vmem:[%s1 + $0x48] sm:$0xf]
  %v50 = vld [vmem:[%s1 + $0x4c] sm:$0xf]
  %v51 = vld [vmem:[%s1 + $0x50] sm:$0xf]
  %v52 = vld [vmem:[%s1 + $0x54] sm:$0xf]
  %v53 = vld [vmem:[%s1 + $0x58] sm:$0xf]
  %v54 = vld [vmem:[%s1 + $0x5c] sm:$0xf]
  %v55 = vld [vmem:[%s1 + $0x60] sm:$0xf]
  %v56 = vld [vmem:[%s1 + $0x64] sm:$0xf]
  %v57 = vld [vmem:[%s1 + $0x68] sm:$0xf]
  %v58 = vld [vmem:[%s1 + $0x6c] sm:$0xf]
  %v59 = vld [vmem:[%s1 + $0x70] sm:$0xf]
  %v60 = vld [vmem:[%s1 + $0x74] sm:$0xf]
  %v61 = vld [vmem:[%s1 + $0x78] sm:$0xf]
  %v62 = vld [vmem:[%s1 + $0x7c] sm:$0xf]
  %v63 = vld [vmem:[%s1 + $0x80] sm:$0xf]
  %v64 = vld [vmem:[%s1 + $0x84] sm:$0xf]
  %v65 = vld [vmem:[%s1 + $0x88] sm:$0xf]
  %v66 = vld [vmem:[%s1 + $0x8c] sm:$0xf]
  %v67 = vld [vmem:[%s1 + $0x90] sm:$0xf]
  %v68 = vld [vmem:[%s1 + $0x94] sm:$0xf]
  %v69 = vld [vmem:[%s1 + $0x98] sm:$0xf]
  %v70 = vld [vmem:[%s1 + $0x9c] sm:$0xf]
  %v71 = vld [vmem:[%s1 + $0xa0] sm:$0xf]
  %v72 = vld [vmem:[%s1 + $0xa4] sm:$0xf]
  %v73 = vld [vmem:[%s1 + $0xa8] sm:$0xf]
  %v74 = vld [vmem:[%s1 + $0xac] sm:$0xf]
  %v75 = vld [vmem:[%s1 + $0xb0] sm:$0xf]
  %v76 = vld [vmem:[%s1 + $0xb4] sm:$0xf]
  %v77 = vld [vmem:[%s1 + $0xb8] sm:$0xf]
  %v78 = vld [vmem:[%s1 + $0xbc] sm:$0xf]
  %v79 = vld [vmem:[%s1 + $0xc0] sm:$0xf]
  %v80 = vld [vmem:[%s1 + $0xc4] sm:$0xf]
  %v81 = vld [vmem:[%s1 + $0xc8] sm:$0xf]
  %v82 = vld [vmem:[%s1 + $0xcc] sm:$0xf]
  %v83 = vld [vmem:[%s1 + $0xd0] sm:$0xf]
  %v84 = vld [vmem:[%s1 + $0xd4] sm:$0xf]
  %v85 = vld [vmem:[%s1 + $0xd8] sm:$0xf]
  %v86 = vld [vmem:[%s1 + $0xdc] sm:$0xf]
  %v87 = vld [vmem:[%s1 + $0xe0] sm:$0xf]
  %v88 = vld [vmem:[%s1 + $0xe4] sm:$0xf]
  %v89 = vld [vmem:[%s1 + $0xe8] sm:$0xf]
  %v90 = vld [vmem:[%s1 + $0xec] sm:$0xf]
  %v91 = vld [vmem:[%s1 + $0xf0] sm:$0xf]
  %v92 = vld [vmem:[%s1 + $0xf4] sm:$0xf]
  %v93 = vld [vmem:[%s1 + $0xf8] sm:$0xf]
  %v94 = vld [vmem:[%s1 + $0xfc] sm:$0xf]
  %v95 = vld [vmem:[%s2] sm:$0x1]
  %v97 = vlaneseq
  %v98 = vshrl.u32 %v97, 7
  %v99 = vsub.s32 0, %v98
  %v100 = vrot.slane %v95, %v99
  %v106 = vunpack.c.l.b16 %v27
  %v107 = vunpack.c.h.b16 %v27
  %v108 = vunpack.c.l.b16 %v28
  %v109 = vunpack.c.h.b16 %v28
  %v110 = vunpack.c.l.b16 %v29
  %v111 = vunpack.c.h.b16 %v29
  %v112 = vunpack.c.l.b16 %v30
  %v113 = vunpack.c.h.b16 %v30
  %v114 = vpack.c.b16 %v110, %v106
  %v115 = vpack.c.b16 %v111, %v107
  %v116 = vpack.c.b16 %v112, %v108
  %v117 = vpack.c.b16 %v113, %v109
  %v186 = vunpack.c.l.b16 %v31
  %v187 = vunpack.c.l.b16 %v32
  %v188 = vunpack.c.l.b16 %v33
  %v189 = vunpack.c.l.b16 %v34
  %v190 = vunpack.c.l.b16 %v35
  %v191 = vunpack.c.l.b16 %v36
  %v192 = vunpack.c.l.b16 %v37
  %v193 = vunpack.c.l.b16 %v38
  %v194 = vunpack.c.l.b16 %v39
  %v195 = vunpack.c.l.b16 %v40
  %v196 = vunpack.c.l.b16 %v41
  %v197 = vunpack.c.l.b16 %v42
  %v198 = vunpack.c.l.b16 %v43
  %v199 = vunpack.c.l.b16 %v44
  %v200 = vunpack.c.l.b16 %v45
  %v201 = vunpack.c.l.b16 %v46
  %v202 = vunpack.c.l.b16 %v47
  %v203 = vunpack.c.l.b16 %v48
  %v204 = vunpack.c.l.b16 %v49
  %v205 = vunpack.c.l.b16 %v50
  %v206 = vunpack.c.l.b16 %v51
  %v207 = vunpack.c.l.b16 %v52
  %v208 = vunpack.c.l.b16 %v53
  %v209 = vunpack.c.l.b16 %v54
  %v210 = vunpack.c.l.b16 %v55
  %v211 = vunpack.c.l.b16 %v56
  %v212 = vunpack.c.l.b16 %v57
  %v213 = vunpack.c.l.b16 %v58
  %v214 = vunpack.c.l.b16 %v59
  %v215 = vunpack.c.l.b16 %v60
  %v216 = vunpack.c.l.b16 %v61
  %v217 = vunpack.c.l.b16 %v62
  %v218 = vunpack.c.l.b16 %v63
  %v219 = vunpack.c.l.b16 %v64
  %v220 = vunpack.c.l.b16 %v65
  %v221 = vunpack.c.l.b16 %v66
  %v222 = vunpack.c.l.b16 %v67
  %v223 = vunpack.c.l.b16 %v68
  %v224 = vunpack.c.l.b16 %v69
  %v225 = vunpack.c.l.b16 %v70
  %v226 = vunpack.c.l.b16 %v71
  %v227 = vunpack.c.l.b16 %v72
  %v228 = vunpack.c.l.b16 %v73
  %v229 = vunpack.c.l.b16 %v74
  %v230 = vunpack.c.l.b16 %v75
  %v231 = vunpack.c.l.b16 %v76
  %v232 = vunpack.c.l.b16 %v77
  %v233 = vunpack.c.l.b16 %v78
  %v234 = vunpack.c.l.b16 %v79
  %v235 = vunpack.c.l.b16 %v80
  %v236 = vunpack.c.l.b16 %v81
  %v237 = vunpack.c.l.b16 %v82
  %v238 = vunpack.c.l.b16 %v83
  %v239 = vunpack.c.l.b16 %v84
  %v240 = vunpack.c.l.b16 %v85
  %v241 = vunpack.c.l.b16 %v86
  %v242 = vunpack.c.l.b16 %v87
  %v243 = vunpack.c.l.b16 %v88
  %v244 = vunpack.c.l.b16 %v89
  %v245 = vunpack.c.l.b16 %v90
  %v246 = vunpack.c.l.b16 %v91
  %v247 = vunpack.c.l.b16 %v92
  %v248 = vunpack.c.l.b16 %v93
  %v249 = vunpack.c.l.b16 %v94
  %v250 = vpack.c.b16 %v187, %v186
  %v251 = vpack.c.b16 %v189, %v188
  %v252 = vpack.c.b16 %v191, %v190
  %v253 = vpack.c.b16 %v193, %v192
  %v254 = vpack.c.b16 %v195, %v194
  %v255 = vpack.c.b16 %v197, %v196
  %v256 = vpack.c.b16 %v199, %v198
  %v257 = vpack.c.b16 %v201, %v200
  %v258 = vpack.c.b16 %v203, %v202
  %v259 = vpack.c.b16 %v205, %v204
  %v260 = vpack.c.b16 %v207, %v206
  %v261 = vpack.c.b16 %v209, %v208
  %v262 = vpack.c.b16 %v211, %v210
  %v263 = vpack.c.b16 %v213, %v212
  %v264 = vpack.c.b16 %v215, %v214
  %v265 = vpack.c.b16 %v217, %v216
  %v266 = vpack.c.b16 %v219, %v218
  %v267 = vpack.c.b16 %v221, %v220
  %v268 = vpack.c.b16 %v223, %v222
  %v269 = vpack.c.b16 %v225, %v224
  %v270 = vpack.c.b16 %v227, %v226
  %v271 = vpack.c.b16 %v229, %v228
  %v272 = vpack.c.b16 %v231, %v230
  %v273 = vpack.c.b16 %v233, %v232
  %v274 = vpack.c.b16 %v235, %v234
  %v275 = vpack.c.b16 %v237, %v236
  %v276 = vpack.c.b16 %v239, %v238
  %v277 = vpack.c.b16 %v241, %v240
  %v278 = vpack.c.b16 %v243, %v242
  %v279 = vpack.c.b16 %v245, %v244
  %v280 = vpack.c.b16 %v247, %v246
  %v281 = vpack.c.b16 %v249, %v248
  %314 = vmatprep.subr.bf16.mxu0 0
  %315 = vmatpush1.bf16.msra.mxu0 %v257
  %316 = vmatprep.subr.bf16.mxu0 0
  %317 = vmatpush1.bf16.msra.mxu0 %v256
  %318 = vmatprep.subr.bf16.mxu0 0
  %319 = vmatpush1.bf16.msra.mxu0 %v255
  %320 = vmatprep.subr.bf16.mxu0 0
  %321 = vmatpush1.bf16.msra.mxu0 %v254
  %322 = vmatprep.subr.bf16.mxu0 0
  %323 = vmatpush1.bf16.msra.mxu0 %v253
  %324 = vmatprep.subr.bf16.mxu0 0
  %325 = vmatpush1.bf16.msra.mxu0 %v252
  %326 = vmatprep.subr.bf16.mxu0 0
  %327 = vmatpush1.bf16.msra.mxu0 %v251
  %328 = vmatprep.subr.bf16.mxu0 0
  %329 = vmatpush1.bf16.msra.mxu0 %v250
  %330 = vmatprep.subr.bf16.mxu0 0
  %331 = vmatpush2.bf16.msra.mxu0 %v265
  %332 = vmatprep.subr.bf16.mxu0 0
  %333 = vmatpush2.bf16.msra.mxu0 %v264
  %334 = vmatprep.subr.bf16.mxu0 0
  %335 = vmatpush2.bf16.msra.mxu0 %v263
  %336 = vmatprep.subr.bf16.mxu0 0
  %337 = vmatpush2.bf16.msra.mxu0 %v262
  %338 = vmatprep.subr.bf16.mxu0 0
  %339 = vmatpush2.bf16.msra.mxu0 %v261
  %340 = vmatprep.subr.bf16.mxu0 0
  %341 = vmatpush2.bf16.msra.mxu0 %v260
  %342 = vmatprep.subr.bf16.mxu0 0
  %343 = vmatpush2.bf16.msra.mxu0 %v259
  %344 = vmatprep.subr.bf16.mxu0 0
  %345 = vmatpush2.bf16.msra.mxu0 %v258
  %346 = vmatprep.mubr.bf16.mxu0 %v115
  %347 = vmatmul.mubr.bf16.gmra.mxu0 %v114
  %v348 = vpop.f32.mrf.mxu0
  %v349 = vadd.f32 %v100, %v348
  %v350 = vpop.f32.mrf.mxu0
  %v351 = vpop.f32.mrf.mxu0
  %v352 = vadd.f32 %v100, %v351
  %v353 = vpop.f32.mrf.mxu0
  %354 = vdwg.mxu0
  %355 = vmatprep.subr.bf16.mxu0 0
  %356 = vmatpush1.bf16.msra.mxu0 %v273
  %357 = vmatprep.subr.bf16.mxu0 0
  %358 = vmatpush1.bf16.msra.mxu0 %v272
  %359 = vmatprep.subr.bf16.mxu0 0
  %360 = vmatpush1.bf16.msra.mxu0 %v271
  %361 = vmatprep.subr.bf16.mxu0 0
  %362 = vmatpush1.bf16.msra.mxu0 %v270
  %363 = vmatprep.subr.bf16.mxu0 0
  %364 = vmatpush1.bf16.msra.mxu0 %v269
  %365 = vmatprep.subr.bf16.mxu0 0
  %366 = vmatpush1.bf16.msra.mxu0 %v268
  %367 = vmatprep.subr.bf16.mxu0 0
  %368 = vmatpush1.bf16.msra.mxu0 %v267
  %369 = vmatprep.subr.bf16.mxu0 0
  %370 = vmatpush1.bf16.msra.mxu0 %v266
  %371 = vmatprep.subr.bf16.mxu0 0
  %372 = vmatpush2.bf16.msra.mxu0 %v281
  %373 = vmatprep.subr.bf16.mxu0 0
  %374 = vmatpush2.bf16.msra.mxu0 %v280
  %375 = vmatprep.subr.bf16.mxu0 0
  %376 = vmatpush2.bf16.msra.mxu0 %v279
  %377 = vmatprep.subr.bf16.mxu0 0
  %378 = vmatpush2.bf16.msra.mxu0 %v278
  %379 = vmatprep.subr.bf16.mxu0 0
  %380 = vmatpush2.bf16.msra.mxu0 %v277
  %381 = vmatprep.subr.bf16.mxu0 0
  %382 = vmatpush2.bf16.msra.mxu0 %v276
  %383 = vmatprep.subr.bf16.mxu0 0
  %384 = vmatpush2.bf16.msra.mxu0 %v275
  %385 = vmatprep.subr.bf16.mxu0 0
  %386 = vmatpush2.bf16.msra.mxu0 %v274
  %387 = vmatprep.mubr.bf16.mxu0 %v117
  %388 = vmatmul.mubr.bf16.gmra.mxu0 %v116
  %v389 = vpop.f32.mrf.mxu0
  %v390 = vadd.f32 %v349, %v389
  %v391 = vpop.f32.mrf.mxu0
  %v392 = vpop.f32.mrf.mxu0
  %v393 = vadd.f32 %v352, %v392
  %v394 = vpop.f32.mrf.mxu0
  %395 = vdwg.mxu0
  %v396 = vmax.f32 %v390, 0.0
  %v397 = vmax.f32 %v393, 0.0
  %v398 = vpack.c.bf16 %v397, %v396
  %v399 = vld [vmem:[%s3] sm:$0xf]
  %v400 = vld [vmem:[%s3 + $0x4] sm:$0xf]
  %v401 = vld [vmem:[%s3 + $0x8] sm:$0xf]
  %v402 = vld [vmem:[%s3 + $0xc] sm:$0xf]
  %v403 = vld [vmem:[%s3 + $0x10] sm:$0xf]
  %v404 = vld [vmem:[%s3 + $0x14] sm:$0xf]
  %v405 = vld [vmem:[%s3 + $0x18] sm:$0xf]
  %v406 = vld [vmem:[%s3 + $0x1c] sm:$0xf]
  %v407 = vld [vmem:[%s3 + $0x20] sm:$0xf]
  %v408 = vld [vmem:[%s3 + $0x24] sm:$0xf]
  %v409 = vld [vmem:[%s3 + $0x28] sm:$0xf]
  %v410 = vld [vmem:[%s3 + $0x2c] sm:$0xf]
  %v411 = vld [vmem:[%s3 + $0x30] sm:$0xf]
  %v412 = vld [vmem:[%s3 + $0x34] sm:$0xf]
  %v413 = vld [vmem:[%s3 + $0x38] sm:$0xf]
  %v414 = vld [vmem:[%s3 + $0x3c] sm:$0xf]
  %v415 = vld [vmem:[%s4] sm:$0x1]
  %v417 = vlaneseq
  %v418 = vshrl.u32 %v417, 7
  %v419 = vsub.s32 0, %v418
  %v420 = vrot.slane %v415, %v419
  %v438 = vunpack.c.l.b16 %v399
  %v439 = vunpack.c.l.b16 %v400
  %v440 = vunpack.c.l.b16 %v401
  %v441 = vunpack.c.l.b16 %v402
  %v442 = vunpack.c.l.b16 %v403
  %v443 = vunpack.c.l.b16 %v404
  %v444 = vunpack.c.l.b16 %v405
  %v445 = vunpack.c.l.b16 %v406
  %v446 = vunpack.c.l.b16 %v407
  %v447 = vunpack.c.l.b16 %v408
  %v448 = vunpack.c.l.b16 %v409
  %v449 = vunpack.c.l.b16 %v410
  %v450 = vunpack.c.l.b16 %v411
  %v451 = vunpack.c.l.b16 %v412
  %v452 = vunpack.c.l.b16 %v413
  %v453 = vunpack.c.l.b16 %v414
  %v454 = vpack.c.b16 %v439, %v438
  %v455 = vpack.c.b16 %v441, %v440
  %v456 = vpack.c.b16 %v443, %v442
  %v457 = vpack.c.b16 %v445, %v444
  %v458 = vpack.c.b16 %v447, %v446
  %v459 = vpack.c.b16 %v449, %v448
  %v460 = vpack.c.b16 %v451, %v450
  %v461 = vpack.c.b16 %v453, %v452
  %470 = vmatprep.subr.bf16.mxu0 0
  %471 = vmatpush1.bf16.msra.mxu0 %v461
  %472 = vmatprep.subr.bf16.mxu0 0
  %473 = vmatpush1.bf16.msra.mxu0 %v460
  %474 = vmatprep.subr.bf16.mxu0 0
  %475 = vmatpush1.bf16.msra.mxu0 %v459
  %476 = vmatprep.subr.bf16.mxu0 0
  %477 = vmatpush1.bf16.msra.mxu0 %v458
  %478 = vmatprep.subr.bf16.mxu0 0
  %479 = vmatpush1.bf16.msra.mxu0 %v457
  %480 = vmatprep.subr.bf16.mxu0 0
  %481 = vmatpush1.bf16.msra.mxu0 %v456
  %482 = vmatprep.subr.bf16.mxu0 0
  %483 = vmatpush1.bf16.msra.mxu0 %v455
  %484 = vmatprep.subr.bf16.mxu0 0
  %485 = vmatpush1.bf16.msra.mxu0 %v454
  %486 = vmatprep.subr.bf16.mxu0 0
  %487 = vmatpush2.bf16.msra.mxu0 0
  %488 = vmatprep.subr.bf16.mxu0 0
  %489 = vmatpush2.bf16.msra.mxu0 0
  %490 = vmatprep.subr.bf16.mxu0 0
  %491 = vmatpush2.bf16.msra.mxu0 0
  %492 = vmatprep.subr.bf16.mxu0 0
  %493 = vmatpush2.bf16.msra.mxu0 0
  %494 = vmatprep.subr.bf16.mxu0 0
  %495 = vmatpush2.bf16.msra.mxu0 0
  %496 = vmatprep.subr.bf16.mxu0 0
  %497 = vmatpush2.bf16.msra.mxu0 0
  %498 = vmatprep.subr.bf16.mxu0 0
  %499 = vmatpush2.bf16.msra.mxu0 0
  %500 = vmatprep.subr.bf16.mxu0 0
  %501 = vmatpush2.bf16.msra.mxu0 0
  %502 = vmatprep.mubr.bf16.mxu0 0
  %503 = vmatmul.mubr.bf16.gmra.mxu0 %v398
  %v504 = vpop.f32.mrf.mxu0
  %v505 = vadd.f32 %v420, %v504
  %v506 = vpop.f32.mrf.mxu0
  %v507 = vpop.f32.mrf.mxu0
  %v508 = vadd.f32 %v420, %v507
  %v509 = vpop.f32.mrf.mxu0
  %510 = vdwg.mxu0
  %v511 = vmax.f32 %v505, 0.0
  %v512 = vmax.f32 %v508, 0.0
  %v513 = vpack.c.bf16 %v512, %v511
  %v514 = vld [vmem:[%s5] sm:$0xf]
  %v515 = vld [vmem:[%s5 + $0x4] sm:$0xf]
  %v516 = vld [vmem:[%s5 + $0x8] sm:$0xf]
  %v517 = vld [vmem:[%s5 + $0xc] sm:$0xf]
  %v518 = vld [vmem:[%s5 + $0x10] sm:$0xf]
  %v519 = vld [vmem:[%s5 + $0x14] sm:$0xf]
  %v520 = vld [vmem:[%s5 + $0x18] sm:$0xf]
  %v521 = vld [vmem:[%s5 + $0x1c] sm:$0xf]
  %v522 = vld [vmem:[%s5 + $0x20] sm:$0xf]
  %v523 = vld [vmem:[%s5 + $0x24] sm:$0xf]
  %v524 = vld [vmem:[%s5 + $0x28] sm:$0xf]
  %v525 = vld [vmem:[%s5 + $0x2c] sm:$0xf]
  %v526 = vld [vmem:[%s5 + $0x30] sm:$0xf]
  %v527 = vld [vmem:[%s5 + $0x34] sm:$0xf]
  %v528 = vld [vmem:[%s5 + $0x38] sm:$0xf]
  %v529 = vld [vmem:[%s5 + $0x3c] sm:$0xf]
  %v530 = vld [vmem:[%s6] sm:$0x1]
  %v532 = vlaneseq
  %v533 = vshrl.u32 %v532, 7
  %v534 = vsub.s32 0, %v533
  %v535 = vrot.slane %v530, %v534
  %v553 = vunpack.c.l.b16 %v514
  %v554 = vunpack.c.l.b16 %v515
  %v555 = vunpack.c.l.b16 %v516
  %v556 = vunpack.c.l.b16 %v517
  %v557 = vunpack.c.l.b16 %v518
  %v558 = vunpack.c.l.b16 %v519
  %v559 = vunpack.c.l.b16 %v520
  %v560 = vunpack.c.l.b16 %v521
  %v561 = vunpack.c.l.b16 %v522
  %v562 = vunpack.c.l.b16 %v523
  %v563 = vunpack.c.l.b16 %v524
  %v564 = vunpack.c.l.b16 %v525
  %v565 = vunpack.c.l.b16 %v526
  %v566 = vunpack.c.l.b16 %v527
  %v567 = vunpack.c.l.b16 %v528
  %v568 = vunpack.c.l.b16 %v529
  %v569 = vpack.c.b16 %v554, %v553
  %v570 = vpack.c.b16 %v556, %v555
  %v571 = vpack.c.b16 %v558, %v557
  %v572 = vpack.c.b16 %v560, %v559
  %v573 = vpack.c.b16 %v562, %v561
  %v574 = vpack.c.b16 %v564, %v563
  %v575 = vpack.c.b16 %v566, %v565
  %v576 = vpack.c.b16 %v568, %v567
  %585 = vmatprep.subr.bf16.mxu0 0
  %586 = vmatpush1.bf16.msra.mxu0 %v576
  %587 = vmatprep.subr.bf16.mxu0 0
  %588 = vmatpush1.bf16.msra.mxu0 %v575
  %589 = vmatprep.subr.bf16.mxu0 0
  %590 = vmatpush1.bf16.msra.mxu0 %v574
  %591 = vmatprep.subr.bf16.mxu0 0
  %592 = vmatpush1.bf16.msra.mxu0 %v573
  %593 = vmatprep.subr.bf16.mxu0 0
  %594 = vmatpush1.bf16.msra.mxu0 %v572
  %595 = vmatprep.subr.bf16.mxu0 0
  %596 = vmatpush1.bf16.msra.mxu0 %v571
  %597 = vmatprep.subr.bf16.mxu0 0
  %598 = vmatpush1.bf16.msra.mxu0 %v570
  %599 = vmatprep.subr.bf16.mxu0 0
  %600 = vmatpush1.bf16.msra.mxu0 %v569
  %601 = vmatprep.subr.bf16.mxu0 0
  %602 = vmatpush2.bf16.msra.mxu0 0
  %603 = vmatprep.subr.bf16.mxu0 0
  %604 = vmatpush2.bf16.msra.mxu0 0
  %605 = vmatprep.subr.bf16.mxu0 0
  %606 = vmatpush2.bf16.msra.mxu0 0
  %607 = vmatprep.subr.bf16.mxu0 0
  %608 = vmatpush2.bf16.msra.mxu0 0
  %609 = vmatprep.subr.bf16.mxu0 0
  %610 = vmatpush2.bf16.msra.mxu0 0
  %611 = vmatprep.subr.bf16.mxu0 0
  %612 = vmatpush2.bf16.msra.mxu0 0
  %613 = vmatprep.subr.bf16.mxu0 0
  %614 = vmatpush2.bf16.msra.mxu0 0
  %615 = vmatprep.subr.bf16.mxu0 0
  %616 = vmatpush2.bf16.msra.mxu0 0
  %617 = vmatprep.mubr.bf16.mxu0 0
  %618 = vmatmul.mubr.bf16.gmra.mxu0 %v513
  %v619 = vpop.f32.mrf.mxu0
  %v620 = vadd.f32 %v535, %v619
  %v621 = vpop.f32.mrf.mxu0
  %v622 = vpop.f32.mrf.mxu0
  %v623 = vadd.f32 %v535, %v622
  %v624 = vpop.f32.mrf.mxu0
  %625 = vdwg.mxu0
  %v626 = vlaneseq
  %v627 = vand.u32 %v626, 127
  %vm628 = vcmp.lt.s32.totalorder %v627, 10
  %v629 = vsel %vm628, %v620, -inf
  %v630 = vsel %vm628, %v623, -inf
  %631 = vmax.xlane.f32.xlu0 %v629
  %v632 = vpop.xlane.xlu0 %631
  %633 = vmax.xlane.f32.xlu0 %v630
  %v634 = vpop.xlane.xlu0 %633
  %v635 = vsub.f32 %v629, %v632
  %v636 = vsub.f32 %v630, %v634
  %v637 = vmul.f32 %v635, 1.442695
  %v638 = vpow.pop %v637
  %v639 = vmul.f32 %v636, 1.442695
  %v640 = vpow.pop %v639
  %641 = vadd.xlane.f32.xlu0 %v638
  %v642 = vpop.xlane.xlu0 %641
  %643 = vadd.xlane.f32.xlu0 %v640
  %v644 = vpop.xlane.xlu0 %643
  %v645 = vlog2.pop %v642
  %v646 = vmul.f32 %v645, 0.6931472
  %v647 = vlog2.pop %v644
  %v648 = vmul.f32 %v647, 0.6931472
  %v649 = vsub.f32 %v635, %v646
  %v650 = vsub.f32 %v636, %v648
  %651 = vst [vmem:[%s7] sm:$0xff] %v649
  %652 = vst [vmem:[%s7 + $0x8] sm:$0xff] %v650
  // Predicated region
  $region30: #{net_forward.5} parent=0 // pred_check
    _
  $region31: #{net_forward.5} parent=0 // pred_check_branch
    %654 = sbr.rel (0) target = $region33
  $region32: #{net_forward.5} parent=0 // pred_region
    _
  $region33: #{net_forward.5} parent=0 // pred_fallthru
    _
  // Predicated region
  $region34: #{net_forward.5} parent=0 // pred_check
    _
  $region35: #{net_forward.5} parent=0 // pred_check_branch
    %656 = sbr.rel (0) target = $region37
  $region36: #{net_forward.5} parent=0 // pred_region
    _
  $region37: #{net_forward.5} parent=0 // pred_fallthru
    _

</llo_original>
